<compile_context>
chip_gen: v5e
topology: v5e:2x2
jax: 0.10.0
libtpu: 0.0.40
codegen_flags: <defaults>
</compile_context>

<pallas_src>
import numpy as np

import jax
import jax.numpy as jnp
from jax.experimental import pallas as pl
from jax.experimental.pallas import tpu as pltpu

# ----------------------------- config (small) -------------------------------
B = 2                 # batch
IMG = 16              # clip image H = W
PATCH = 8             # clip patch size -> 2x2 = 4 grids
CLIP_WIDTH = 48       # image_backbone.transformer.width
CLIP_HEADS = 4
CLIP_LAYERS = 3       # resblocks; forward uses resblocks[:-1]
CLIP_FF = 4 * CLIP_WIDTH
ENC_D = 32            # cfg['enc_embed_dim']
ENC_HEADS = 4         # cfg['enc_num_heads']
ENC_FF = 64           # cfg['enc_ff_dim']
ENC_LAYERS = 2        # cfg['enc_num_layers']
NOUN_CLASSES = 16     # cfg['noun_classes']
VERB_CLASSES = 10     # cfg['verb_classes']
YOLO_MAX_DET = 8      # cfg['yolo_max_det']
TOP_K_VERB = 1        # cfg['top_k_verb']
LN_EPS = 1e-5

N_GRIDS = (IMG // PATCH) ** 2
PATCH_DIM = 3 * PATCH * PATCH
OUT_W = 8             # packed head outputs: [obj, verb_score, verb_id, ttc, det, pad*3]

_TRANS_B = (((1,), (1,)), ((), ()))   # contract last dims of both operands (A @ B^T)

# ---- "misc" slab layout: (M_ROWS, ENC_D) f32, all row offsets static --------
M_PROJ_W = 0          # (CLIP_WIDTH, ENC_D)        rows   0:48
M_BB_W1 = 48          # (4, ENC_D)                 rows  48:52   (52:56 pad)
M_BB_W2 = 56          # (ENC_D, ENC_D)             rows  56:88
M_PROJ_B = 88         # (1, ENC_D)
M_BB_B1 = 89
M_BB_B2 = 90
M_ELN_G = 91
M_ELN_B = 92
M_HEAD_B = 93         # first 1+VERB_CLASSES lanes valid
M_TT_B1 = 94
M_TT_B2 = 95          # first lane valid
M_HEAD_W = 96         # (ENC_D, 1+VERB_CLASSES) in first lanes   rows  96:128
M_TT_W1 = 128         # (ENC_D, ENC_D)                           rows 128:160
M_TT_W2 = 160         # (ENC_D, 1) in first lane                 rows 160:192
M_ROWS = 192


def _rep(shape):
  """BlockSpec for a weight replicated across the batch grid (fetched once)."""
  return pl.BlockSpec(shape, lambda i, _n=len(shape): (0,) * _n)


# ---------------------- in-kernel math (on loaded values) -------------------
def _ln(x, g, b):
  mu = jnp.mean(x, axis=-1, keepdims=True)
  var = jnp.mean(jnp.square(x - mu), axis=-1, keepdims=True)
  return (x - mu) * jax.lax.rsqrt(var + LN_EPS) * g + b


def _mha(x, wqkv, bqkv, wo, bo, num_heads):
  """Multi-head self-attention. Weights already (Din, Dout); bias broadcast."""
  S, D = x.shape
  dh = D // num_heads
  scale = 1.0 / float(np.sqrt(dh))
  qkv = jnp.dot(x, wqkv, preferred_element_type=jnp.float32) + bqkv    # (S, 3D)
  q, k, v = qkv[:, :D], qkv[:, D:2 * D], qkv[:, 2 * D:3 * D]
  outs = []
  for h in range(num_heads):
    sl = slice(h * dh, (h + 1) * dh)
    s = jax.lax.dot_general(q[:, sl], k[:, sl], _TRANS_B,
                            preferred_element_type=jnp.float32) * scale
    s = s - jnp.max(s, axis=-1, keepdims=True)
    p = jnp.exp(s)
    p = p * pl.reciprocal(jnp.sum(p, axis=-1, keepdims=True), approx=True)
    outs.append(jnp.dot(p, v[:, sl], preferred_element_type=jnp.float32))  # (S, dh)
  attn = jnp.concatenate(outs, axis=-1)                                # (S, D)
  return jnp.dot(attn, wo, preferred_element_type=jnp.float32) + bo


def _block(x, vec, win, wout, d, ff, num_heads, activation):
  """Pre-LN transformer block on packed per-layer weights.

  vec : (8, max(3d, ff)) rows = [ln1_g, ln1_b, ln2_g, ln2_b, bqkv, bo, b1, b2]
  win : (d, 3d + d + ff) lanes = [wqkv | wo | w1]
  wout: (ff, d)          = w2
  """
  ln1_g, ln1_b = vec[0:1, :d], vec[1:2, :d]
  ln2_g, ln2_b = vec[2:3, :d], vec[3:4, :d]
  bqkv = vec[4:5, :3 * d]
  bo = vec[5:6, :d]
  b1 = vec[6:7, :ff]
  b2 = vec[7:8, :d]
  wqkv = win[:, :3 * d]
  wo = win[:, 3 * d:4 * d]
  w1 = win[:, 4 * d:4 * d + ff]

  x = x + _mha(_ln(x, ln1_g, ln1_b), wqkv, bqkv, wo, bo, num_heads)
  h = jnp.dot(_ln(x, ln2_g, ln2_b), w1, preferred_element_type=jnp.float32) + b1
  if activation == "relu":
    h = jnp.maximum(h, 0.0)
  else:
    # QuickGELU used by CLIP resblocks: x * sigmoid(1.702 * x)
    h = h * (1.0 / (1.0 + jnp.exp(-1.702 * h)))
  h = jnp.dot(h, wout, preferred_element_type=jnp.float32) + b2
  return x + h


# ------------------------------ fused kernel --------------------------------
def _fused_kernel(patch_ref, box_ref, clsf_ref, yolo_ref,
                  conv_ref, front_ref, cvec_ref, cwin_ref, cwout_ref,
                  evec_ref, ewin_ref, ewout_ref, misc_ref, out_ref):
  # ---- unpack the misc (D=32 lane) slab once ---------------------------------
  misc = misc_ref[...]                                                 # (192, 32)
  proj_w = misc[M_PROJ_W:M_PROJ_W + CLIP_WIDTH]                        # (48, 32)
  bb_w1 = misc[M_BB_W1:M_BB_W1 + 4]                                    # (4, 32)
  bb_w2 = misc[M_BB_W2:M_BB_W2 + ENC_D]                                # (32, 32)
  proj_b = misc[M_PROJ_B:M_PROJ_B + 1]
  bb_b1 = misc[M_BB_B1:M_BB_B1 + 1]
  bb_b2 = misc[M_BB_B2:M_BB_B2 + 1]
  eln_g = misc[M_ELN_G:M_ELN_G + 1]
  eln_b = misc[M_ELN_B:M_ELN_B + 1]
  head_b = misc[M_HEAD_B:M_HEAD_B + 1, :1 + VERB_CLASSES]
  tt_b1 = misc[M_TT_B1:M_TT_B1 + 1]
  tt_b2 = misc[M_TT_B2:M_TT_B2 + 1, :1]
  head_w = misc[M_HEAD_W:M_HEAD_W + ENC_D, :1 + VERB_CLASSES]          # (32, 11)
  tt_w1 = misc[M_TT_W1:M_TT_W1 + ENC_D]                                # (32, 32)
  tt_w2 = misc[M_TT_W2:M_TT_W2 + ENC_D, :1]                            # (32, 1)

  # ---- obj features: bbox MLP (Linear->ReLU->Linear) + class-emb feature ----
  bx = box_ref[0]                                                      # (N, 4)
  hb = jnp.maximum(
      jnp.dot(bx, bb_w1, preferred_element_type=jnp.float32) + bb_b1, 0.0)
  obj_feat = (jnp.dot(hb, bb_w2, preferred_element_type=jnp.float32)
              + bb_b2 + clsf_ref[0])                                   # (N, De)

  # ---- CLIP backbone: conv1-as-matmul + [CLS] + positional + ln_pre + blocks
  front = front_ref[...]                                               # (8, W)
  cls_pos = front[0:N_GRIDS + 1]                                       # row0 = cls_emb + pos0
  lnp_g = front[N_GRIDS + 1:N_GRIDS + 2]
  lnp_b = front[N_GRIDS + 2:N_GRIDS + 3]
  xg = (jnp.dot(patch_ref[0], conv_ref[...], preferred_element_type=jnp.float32)
        + cls_pos[1:])                                                 # (G, W)
  x = jnp.concatenate([cls_pos[0:1], xg], axis=0)                      # (G+1, W)
  x = _ln(x, lnp_g, lnp_b)
  for l in range(CLIP_LAYERS - 1):                                     # resblocks[:-1]
    x = _block(x, cvec_ref[l], cwin_ref[l], cwout_ref[l],
               d=CLIP_WIDTH, ff=CLIP_FF, num_heads=CLIP_HEADS,
               activation="quick_gelu")
  img_feat = (jnp.dot(x[1:], proj_w, preferred_element_type=jnp.float32)
              + proj_b)                                                # (G, De)

  # ---- joint encoder (TransformerEncoderLayer x L, norm_first, relu) + LN ---
  x = jnp.concatenate([img_feat, obj_feat], axis=0)                    # (G+N, De)
  for l in range(ENC_LAYERS):
    x = _block(x, evec_ref[l], ewin_ref[l], ewout_ref[l],
               d=ENC_D, ff=ENC_FF, num_heads=ENC_HEADS, activation="relu")
  x = _ln(x, eln_g, eln_b)
  x_det = x[N_GRIDS:N_GRIDS + YOLO_MAX_DET]                            # (N, De)

  # ---- heads: [obj_scorer | verb_predictor] as one matmul -------------------
  hv = (jnp.dot(x_det, head_w, preferred_element_type=jnp.float32)
        + head_b)                                                      # (N, 1+V)
  obj = hv[:, 0:1]
  logits = hv[:, 1:1 + VERB_CLASSES]
  m = jnp.max(logits, axis=-1, keepdims=True)
  denom = jnp.sum(jnp.exp(logits - m), axis=-1, keepdims=True)
  vmax = 1.0 / denom                                  # == max softmax probability
  ids = jax.lax.broadcasted_iota(jnp.int32, logits.shape, 1)
  vid = jnp.min(jnp.where(logits >= m, ids, VERB_CLASSES),
                axis=-1, keepdims=True)               # argmax on raw logits

  # ttc_predictor: MLP(D, D, 1) -> Softplus (output reduction via MXU matmul)
  ht = jnp.maximum(
      jnp.dot(x_det, tt_w1, preferred_element_type=jnp.float32) + tt_b1, 0.0)
  t = jnp.dot(ht, tt_w2, preferred_element_type=jnp.float32) + tt_b2
  ttc = jnp.maximum(t, 0.0) + jnp.log(1.0 + jnp.exp(-jnp.abs(t)))

  det = vmax * yolo_ref[0]                            # detection_score

  out_ref[0] = jnp.concatenate(
      [obj, vmax, vid.astype(jnp.float32), ttc, det,
       jnp.zeros((YOLO_MAX_DET, OUT_W - 5), jnp.float32)], axis=-1)


# ------------------------------ glue / forward ------------------------------
def soia_dod_forward(params, weights, images_clip, box, cls, yolo_score):
  Bn = images_clip.shape[0]
  p = PATCH
  gh = gw = IMG // p
  # patchify the CLIP image (stride == kernel conv) -> (B, grids, C*p*p)
  xp = images_clip.reshape(Bn, 3, gh, p, gw, p)
  patches = xp.transpose(0, 2, 4, 1, 3, 5).reshape(Bn, gh * gw, 3 * p * p)
  # embedding lookup stays in glue (gather)
  cls_feat = jnp.take(params['cls_emb'], cls, axis=0)        # (B, N, De)
  yolo3 = yolo_score.reshape(Bn, YOLO_MAX_DET, 1)

  in_specs = [
      pl.BlockSpec((1, N_GRIDS, PATCH_DIM), lambda i: (i, 0, 0)),
      pl.BlockSpec((1, YOLO_MAX_DET, 4), lambda i: (i, 0, 0)),
      pl.BlockSpec((1, YOLO_MAX_DET, ENC_D), lambda i: (i, 0, 0)),
      pl.BlockSpec((1, YOLO_MAX_DET, 1), lambda i: (i, 0, 0)),
  ] + [_rep(w.shape) for w in weights]

  out = pl.pallas_call(
      _fused_kernel,
      out_shape=jax.ShapeDtypeStruct((Bn, YOLO_MAX_DET, OUT_W), jnp.float32),
      grid=(Bn,),
      in_specs=in_specs,
      out_specs=pl.BlockSpec((1, YOLO_MAX_DET, OUT_W), lambda i: (i, 0, 0)),
      compiler_params=pltpu.CompilerParams(
          dimension_semantics=("parallel",)),   # v7x: one image per TensorCore
  )(patches, box, cls_feat, yolo3, *weights)

  obj_score = out[..., 0:1]
  verb_scores = out[..., 1:2]
  verb_ids = out[..., 2:3].astype(jnp.int32)
  ttc_preds = out[..., 3:4]
  det_score = out[..., 4:5]
  return obj_score, verb_scores, verb_ids, ttc_preds, det_score


# ------------------------------ parameter init ------------------------------
def init_params(key):
  keys = list(jax.random.split(key, 128))
  it = iter(keys)

  def nrm(shape, scale=0.02):
    return (scale * jax.random.normal(next(it), shape)).astype(jnp.float32)

  def block(d, ff):
    return dict(
        ln1_g=jnp.ones((1, d), jnp.float32), ln1_b=jnp.zeros((1, d), jnp.float32),
        wqkv=nrm((3 * d, d)), bqkv=nrm((1, 3 * d)),
        wo=nrm((d, d)), bo=nrm((1, d)),
        ln2_g=jnp.ones((1, d), jnp.float32), ln2_b=jnp.zeros((1, d), jnp.float32),
        w1=nrm((ff, d)), b1=nrm((1, ff)),
        w2=nrm((d, ff)), b2=nrm((1, d)),
    )

  params = dict(
      conv1_w=nrm((CLIP_WIDTH, 3, PATCH, PATCH)),
      class_embedding=nrm((CLIP_WIDTH,)),
      positional_embedding=nrm((N_GRIDS + 1, CLIP_WIDTH)),
      ln_pre_g=jnp.ones((CLIP_WIDTH,), jnp.float32),
      ln_pre_b=jnp.zeros((CLIP_WIDTH,), jnp.float32),
      clip_blocks=[block(CLIP_WIDTH, CLIP_FF) for _ in range(CLIP_LAYERS)],
      proj_w=nrm((ENC_D, CLIP_WIDTH)), proj_b=nrm((ENC_D,)),
      cls_emb=nrm((NOUN_CLASSES, ENC_D)),
      bbox_enc=dict(w1=nrm((ENC_D, 4)), b1=nrm((1, ENC_D)),
                    w2=nrm((ENC_D, ENC_D)), b2=nrm((1, ENC_D))),
      enc_blocks=[block(ENC_D, ENC_FF) for _ in range(ENC_LAYERS)],
      enc_ln_g=jnp.ones((ENC_D,), jnp.float32),
      enc_ln_b=jnp.zeros((ENC_D,), jnp.float32),
      heads=dict(ws=nrm((1, ENC_D)), bs=nrm((1, 1)),
                 wv=nrm((VERB_CLASSES, ENC_D)), bv=nrm((1, VERB_CLASSES)),
                 wt1=nrm((ENC_D, ENC_D)), bt1=nrm((1, ENC_D)),
                 wt2=nrm((1, ENC_D)), bt2=nrm((1, 1))),
  )
  return params


def _pad_lanes(a, width):
  return jnp.pad(a, ((0, 0), (0, width - a.shape[-1])))


def _pad_rows(a, rows):
  return jnp.pad(a, ((0, rows - a.shape[0]), (0, 0)))


def pack_weights(p):
  """Host-side repack into 9 slabs: pre-transpose to (Din, Dout), stack per
  layer, fold class_embedding into positional_embedding, lane/sublane-pad and
  concatenate so the kernel sees few, large, replicated operands."""
  clip = p['clip_blocks'][:-1]        # resblocks[:-1]
  enc = p['enc_blocks']
  hd = p['heads']

  def pack_family(blocks, d, ff):
    width = max(3 * d, ff)
    vecs, wins, wouts = [], [], []
    for b in blocks:
      rows = [b['ln1_g'], b['ln1_b'], b['ln2_g'], b['ln2_b'],
              b['bqkv'], b['bo'], b['b1'], b['b2']]
      vecs.append(jnp.concatenate([_pad_lanes(r, width) for r in rows], axis=0))
      wins.append(jnp.concatenate([b['wqkv'].T, b['wo'].T, b['w1'].T], axis=1))
      wouts.append(b['w2'].T)
    return jnp.stack(vecs), jnp.stack(wins), jnp.stack(wouts)

  clip_vec, clip_win, clip_wout = pack_family(clip, CLIP_WIDTH, CLIP_FF)
  enc_vec, enc_win, enc_wout = pack_family(enc, ENC_D, ENC_FF)

  cls_pos = p['positional_embedding'].at[0].add(p['class_embedding'])  # (G+1, W)
  front = jnp.concatenate([
      cls_pos,
      p['ln_pre_g'].reshape(1, CLIP_WIDTH),
      p['ln_pre_b'].reshape(1, CLIP_WIDTH),
  ], axis=0)
  front = _pad_rows(front, ((front.shape[0] + 7) // 8) * 8)            # (8, W)

  head_w = jnp.concatenate([hd['ws'], hd['wv']], axis=0).T             # (De, 1+V)
  head_b = jnp.concatenate([hd['bs'], hd['bv']], axis=-1)              # (1, 1+V)
  vec8 = jnp.concatenate([
      p['proj_b'].reshape(1, ENC_D),
      p['bbox_enc']['b1'], p['bbox_enc']['b2'],
      p['enc_ln_g'].reshape(1, ENC_D), p['enc_ln_b'].reshape(1, ENC_D),
      _pad_lanes(head_b, ENC_D),
      hd['bt1'],
      _pad_lanes(hd['bt2'], ENC_D),
  ], axis=0)                                                           # (8, De)
  misc = jnp.concatenate([
      p['proj_w'].T,                          # rows   0:48
      _pad_rows(p['bbox_enc']['w1'].T, 8),    # rows  48:56
      p['bbox_enc']['w2'].T,                  # rows  56:88
      vec8,                                   # rows  88:96
      _pad_lanes(head_w, ENC_D),              # rows  96:128
      hd['wt1'].T,                            # rows 128:160
      _pad_lanes(hd['wt2'].T, ENC_D),         # rows 160:192
  ], axis=0)
  assert misc.shape == (M_ROWS, ENC_D)

  weights = [
      p['conv1_w'].reshape(CLIP_WIDTH, -1).T,   # (C*p*p, W)
      front,                                    # (8, W)
      clip_vec, clip_win, clip_wout,            # (L,8,192) (L,48,384) (L,192,48)
      enc_vec, enc_win, enc_wout,               # (L,8,96)  (L,32,192) (L,64,32)
      misc,                                     # (192, 32)
  ]
  return [w.astype(jnp.float32) for w in weights]


# ----------------------------------- main ------------------------------------
if __name__ == "__main__":
  root = jax.random.PRNGKey(0)
  kp, kd = jax.random.split(root)
  params = init_params(kp)
  weights = pack_weights(params)

  k1, k2, k3, k4 = jax.random.split(kd, 4)
  images_clip = jax.random.normal(k1, (B, 3, IMG, IMG), jnp.float32)
  # synthetic, already NMS'd + padded YOLO detections (see TODO(synk) above)
  box = jax.random.uniform(k2, (B, YOLO_MAX_DET, 4), jnp.float32)      # xyxy / (w,h)
  orig_h, orig_w = 108.0, 144.0
  box_orig = box * jnp.array([orig_w, orig_h, orig_w, orig_h], jnp.float32)
  cls = jax.random.randint(k3, (B, YOLO_MAX_DET), 0, NOUN_CLASSES, jnp.int32)
  yolo_score = jax.random.uniform(k4, (B, YOLO_MAX_DET), jnp.float32)

  fwd = jax.jit(soia_dod_forward)
  outs = fwd(params, weights, images_clip, box, cls, yolo_score)
  outs = jax.block_until_ready(outs)
  obj_score, verb_scores, verb_ids, ttc_preds, det_score = outs

  # eval branch of forward(): losses empty, detections sorted by score (host glue)
  losses = dict()
  detections = []
  det_np = np.asarray(det_score)[..., 0]
  vid_np = np.asarray(verb_ids)[..., 0]
  ttc_np = np.asarray(ttc_preds)[..., 0]
  cls_np = np.asarray(cls)
  box_np = np.asarray(box_orig)
  for i in range(B):
    order = np.argsort(-det_np[i], kind="stable")
    detections.append(dict(
        scores=[float(det_np[i, j]) for j in order],
        nouns=[int(cls_np[i, j]) for j in order],
        boxes=[box_np[i, j] for j in order],
        verbs=[int(vid_np[i, j]) for j in order],
        ttcs=[float(ttc_np[i, j]) for j in order],
    ))

  assert obj_score.shape == (B, YOLO_MAX_DET, 1)
  assert verb_ids.dtype == jnp.int32
  assert len(detections) == B and len(detections[0]['scores']) == YOLO_MAX_DET
  print("KERNEL_OK")
</pallas_src>

<mosaic_0001>
module attributes {stable_mosaic.version = 11 : i64} {
  func.func @_fused_kernel(%arg0: i32, %arg1: memref<1x4x192xf32, #tpu.memory_space<vmem>>, %arg2: memref<1x8x4xf32, #tpu.memory_space<vmem>>, %arg3: memref<1x8x32xf32, #tpu.memory_space<vmem>>, %arg4: memref<1x8x1xf32, #tpu.memory_space<vmem>>, %arg5: memref<192x48xf32, #tpu.memory_space<vmem>>, %arg6: memref<8x48xf32, #tpu.memory_space<vmem>>, %arg7: memref<2x8x192xf32, #tpu.memory_space<vmem>>, %arg8: memref<2x48x384xf32, #tpu.memory_space<vmem>>, %arg9: memref<2x192x48xf32, #tpu.memory_space<vmem>>, %arg10: memref<2x8x96xf32, #tpu.memory_space<vmem>>, %arg11: memref<2x32x192xf32, #tpu.memory_space<vmem>>, %arg12: memref<2x64x32xf32, #tpu.memory_space<vmem>>, %arg13: memref<192x32xf32, #tpu.memory_space<vmem>>, %arg14: memref<1x8x8xf32, #tpu.memory_space<vmem>>) attributes {dimension_semantics = [#tpu.dimension_semantics<parallel>], iteration_bounds = array<i64: 2>, scalar_prefetch = 0 : i64, scratch_operands = 0 : i64, tpu.core_type = #tpu.core_type<tc>, window_params = [{transform_indices = @transform_0, window_bounds = array<i64: 1, 4, 192>}, {transform_indices = @transform_1, window_bounds = array<i64: 1, 8, 4>}, {transform_indices = @transform_2, window_bounds = array<i64: 1, 8, 32>}, {transform_indices = @transform_3, window_bounds = array<i64: 1, 8, 1>}, {pipeline_mode = #tpu.pipeline_mode<synchronous>, transform_indices = @transform_4, window_bounds = array<i64: 192, 48>}, {pipeline_mode = #tpu.pipeline_mode<synchronous>, transform_indices = @transform_5, window_bounds = array<i64: 8, 48>}, {pipeline_mode = #tpu.pipeline_mode<synchronous>, transform_indices = @transform_6, window_bounds = array<i64: 2, 8, 192>}, {pipeline_mode = #tpu.pipeline_mode<synchronous>, transform_indices = @transform_7, window_bounds = array<i64: 2, 48, 384>}, {pipeline_mode = #tpu.pipeline_mode<synchronous>, transform_indices = @transform_8, window_bounds = array<i64: 2, 192, 48>}, {pipeline_mode = #tpu.pipeline_mode<synchronous>, transform_indices = @transform_9, window_bounds = array<i64: 2, 8, 96>}, {pipeline_mode = #tpu.pipeline_mode<synchronous>, transform_indices = @transform_10, window_bounds = array<i64: 2, 32, 192>}, {pipeline_mode = #tpu.pipeline_mode<synchronous>, transform_indices = @transform_11, window_bounds = array<i64: 2, 64, 32>}, {pipeline_mode = #tpu.pipeline_mode<synchronous>, transform_indices = @transform_12, window_bounds = array<i64: 192, 32>}, {transform_indices = @transform_13, window_bounds = array<i64: 1, 8, 8>}]} {
    %c0 = arith.constant 0 : index
    %c0_0 = arith.constant 0 : index
    %0 = vector.load %arg13[%c0, %c0_0] : memref<192x32xf32, #tpu.memory_space<vmem>>, vector<192x32xf32>
    %1 = vector.extract_strided_slice %0 {offsets = [0, 0], sizes = [48, 32], strides = [1, 1]} : vector<192x32xf32> to vector<48x32xf32>
    %2 = vector.extract_strided_slice %0 {offsets = [48, 0], sizes = [4, 32], strides = [1, 1]} : vector<192x32xf32> to vector<4x32xf32>
    %3 = vector.extract_strided_slice %0 {offsets = [56, 0], sizes = [32, 32], strides = [1, 1]} : vector<192x32xf32> to vector<32x32xf32>
    %4 = vector.extract_strided_slice %0 {offsets = [88, 0], sizes = [1, 32], strides = [1, 1]} : vector<192x32xf32> to vector<1x32xf32>
    %5 = vector.extract_strided_slice %0 {offsets = [89, 0], sizes = [1, 32], strides = [1, 1]} : vector<192x32xf32> to vector<1x32xf32>
    %6 = vector.extract_strided_slice %0 {offsets = [90, 0], sizes = [1, 32], strides = [1, 1]} : vector<192x32xf32> to vector<1x32xf32>
    %7 = vector.extract_strided_slice %0 {offsets = [91, 0], sizes = [1, 32], strides = [1, 1]} : vector<192x32xf32> to vector<1x32xf32>
    %8 = vector.extract_strided_slice %0 {offsets = [92, 0], sizes = [1, 32], strides = [1, 1]} : vector<192x32xf32> to vector<1x32xf32>
    %9 = vector.extract_strided_slice %0 {offsets = [93, 0], sizes = [1, 11], strides = [1, 1]} : vector<192x32xf32> to vector<1x11xf32>
    %10 = vector.extract_strided_slice %0 {offsets = [94, 0], sizes = [1, 32], strides = [1, 1]} : vector<192x32xf32> to vector<1x32xf32>
    %11 = vector.extract_strided_slice %0 {offsets = [95, 0], sizes = [1, 1], strides = [1, 1]} : vector<192x32xf32> to vector<1x1xf32>
    %12 = vector.extract_strided_slice %0 {offsets = [96, 0], sizes = [32, 11], strides = [1, 1]} : vector<192x32xf32> to vector<32x11xf32>
    %13 = vector.extract_strided_slice %0 {offsets = [128, 0], sizes = [32, 32], strides = [1, 1]} : vector<192x32xf32> to vector<32x32xf32>
    %14 = vector.extract_strided_slice %0 {offsets = [160, 0], sizes = [32, 1], strides = [1, 1]} : vector<192x32xf32> to vector<32x1xf32>
    %c0_1 = arith.constant 0 : index
    %c0_2 = arith.constant 0 : index
    %c0_3 = arith.constant 0 : index
    %15 = vector.load %arg2[%c0_1, %c0_2, %c0_3] : memref<1x8x4xf32, #tpu.memory_space<vmem>>, vector<1x8x4xf32>
    %16 = vector.shape_cast %15 : vector<1x8x4xf32> to vector<8x4xf32>
    %cst = arith.constant dense<0.000000e+00> : vector<8x32xf32>
    %17 = tpu.matmul %16, %2, %cst {dimension_numbers = #tpu.dot_dimension_numbers<[1], [0], [0], [1], [0, 0, 1, 1], [], []>} : vector<8x4xf32>, vector<4x32xf32>, vector<8x32xf32> -> vector<8x32xf32>
    %18 = vector.broadcast %5 : vector<1x32xf32> to vector<8x32xf32>
    %19 = arith.addf %17, %18 : vector<8x32xf32>
    %cst_4 = arith.constant 0.000000e+00 : f32
    %20 = vector.broadcast %cst_4 : f32 to vector<8x32xf32>
    %21 = arith.maximumf %19, %20 : vector<8x32xf32>
    %cst_5 = arith.constant dense<0.000000e+00> : vector<8x32xf32>
    %22 = tpu.matmul %21, %3, %cst_5 {dimension_numbers = #tpu.dot_dimension_numbers<[1], [0], [0], [1], [0, 0, 1, 1], [], []>} : vector<8x32xf32>, vector<32x32xf32>, vector<8x32xf32> -> vector<8x32xf32>
    %23 = vector.broadcast %6 : vector<1x32xf32> to vector<8x32xf32>
    %24 = arith.addf %22, %23 : vector<8x32xf32>
    %c0_6 = arith.constant 0 : index
    %c0_7 = arith.constant 0 : index
    %c0_8 = arith.constant 0 : index
    %25 = vector.load %arg3[%c0_6, %c0_7, %c0_8] : memref<1x8x32xf32, #tpu.memory_space<vmem>>, vector<1x8x32xf32>
    %26 = vector.shape_cast %25 : vector<1x8x32xf32> to vector<8x32xf32>
    %27 = arith.addf %24, %26 : vector<8x32xf32>
    %c0_9 = arith.constant 0 : index
    %c0_10 = arith.constant 0 : index
    %28 = vector.load %arg6[%c0_9, %c0_10] : memref<8x48xf32, #tpu.memory_space<vmem>>, vector<8x48xf32>
    %29 = vector.extract_strided_slice %28 {offsets = [0, 0], sizes = [5, 48], strides = [1, 1]} : vector<8x48xf32> to vector<5x48xf32>
    %30 = vector.extract_strided_slice %28 {offsets = [5, 0], sizes = [1, 48], strides = [1, 1]} : vector<8x48xf32> to vector<1x48xf32>
    %31 = vector.extract_strided_slice %28 {offsets = [6, 0], sizes = [1, 48], strides = [1, 1]} : vector<8x48xf32> to vector<1x48xf32>
    %c0_11 = arith.constant 0 : index
    %c0_12 = arith.constant 0 : index
    %c0_13 = arith.constant 0 : index
    %32 = vector.load %arg1[%c0_11, %c0_12, %c0_13] : memref<1x4x192xf32, #tpu.memory_space<vmem>>, vector<1x4x192xf32>
    %33 = vector.shape_cast %32 : vector<1x4x192xf32> to vector<4x192xf32>
    %c0_14 = arith.constant 0 : index
    %c0_15 = arith.constant 0 : index
    %34 = vector.load %arg5[%c0_14, %c0_15] : memref<192x48xf32, #tpu.memory_space<vmem>>, vector<192x48xf32>
    %cst_16 = arith.constant dense<0.000000e+00> : vector<4x48xf32>
    %35 = tpu.matmul %33, %34, %cst_16 {dimension_numbers = #tpu.dot_dimension_numbers<[1], [0], [0], [1], [0, 0, 1, 1], [], []>} : vector<4x192xf32>, vector<192x48xf32>, vector<4x48xf32> -> vector<4x48xf32>
    %36 = vector.extract_strided_slice %29 {offsets = [1, 0], sizes = [4, 48], strides = [1, 1]} : vector<5x48xf32> to vector<4x48xf32>
    %37 = arith.addf %35, %36 : vector<4x48xf32>
    %38 = vector.extract_strided_slice %29 {offsets = [0, 0], sizes = [1, 48], strides = [1, 1]} : vector<5x48xf32> to vector<1x48xf32>
    %39 = tpu.concatenate %38, %37 in 0 : vector<1x48xf32>, vector<4x48xf32> -> vector<5x48xf32>
    %cst_17 = arith.constant dense<0.000000e+00> : vector<5xf32>
    %40 = vector.multi_reduction <add>, %39, %cst_17 [1] : vector<5x48xf32> to vector<5xf32>
    %41 = vector.shape_cast %40 : vector<5xf32> to vector<5x1xf32>
    %cst_18 = arith.constant 4.800000e+01 : f32
    %42 = vector.broadcast %cst_18 : f32 to vector<5x1xf32>
    %43 = arith.divf %41, %42 : vector<5x1xf32>
    %44 = vector.broadcast %43 : vector<5x1xf32> to vector<5x48xf32>
    %45 = arith.subf %39, %44 : vector<5x48xf32>
    %46 = arith.mulf %45, %45 : vector<5x48xf32>
    %cst_19 = arith.constant dense<0.000000e+00> : vector<5xf32>
    %47 = vector.multi_reduction <add>, %46, %cst_19 [1] : vector<5x48xf32> to vector<5xf32>
    %48 = vector.shape_cast %47 : vector<5xf32> to vector<5x1xf32>
    %cst_20 = arith.constant 4.800000e+01 : f32
    %49 = vector.broadcast %cst_20 : f32 to vector<5x1xf32>
    %50 = arith.divf %48, %49 : vector<5x1xf32>
    %51 = vector.broadcast %43 : vector<5x1xf32> to vector<5x48xf32>
    %52 = arith.subf %39, %51 : vector<5x48xf32>
    %cst_21 = arith.constant 9.99999974E-6 : f32
    %53 = vector.broadcast %cst_21 : f32 to vector<5x1xf32>
    %54 = arith.addf %50, %53 : vector<5x1xf32>
    %55 = math.rsqrt %54 : vector<5x1xf32>
    %56 = vector.broadcast %55 : vector<5x1xf32> to vector<5x48xf32>
    %57 = arith.mulf %52, %56 : vector<5x48xf32>
    %58 = vector.broadcast %30 : vector<1x48xf32> to vector<5x48xf32>
    %59 = arith.mulf %57, %58 : vector<5x48xf32>
    %60 = vector.broadcast %31 : vector<1x48xf32> to vector<5x48xf32>
    %61 = arith.addf %59, %60 : vector<5x48xf32>
    %c0_22 = arith.constant 0 : index
    %c0_23 = arith.constant 0 : index
    %c0_24 = arith.constant 0 : index
    %62 = vector.load %arg7[%c0_22, %c0_23, %c0_24] : memref<2x8x192xf32, #tpu.memory_space<vmem>>, vector<1x8x192xf32>
    %63 = vector.shape_cast %62 : vector<1x8x192xf32> to vector<8x192xf32>
    %c0_25 = arith.constant 0 : index
    %c0_26 = arith.constant 0 : index
    %c0_27 = arith.constant 0 : index
    %64 = vector.load %arg8[%c0_25, %c0_26, %c0_27] : memref<2x48x384xf32, #tpu.memory_space<vmem>>, vector<1x48x384xf32>
    %65 = vector.shape_cast %64 : vector<1x48x384xf32> to vector<48x384xf32>
    %c0_28 = arith.constant 0 : index
    %c0_29 = arith.constant 0 : index
    %c0_30 = arith.constant 0 : index
    %66 = vector.load %arg9[%c0_28, %c0_29, %c0_30] : memref<2x192x48xf32, #tpu.memory_space<vmem>>, vector<1x192x48xf32>
    %67 = vector.shape_cast %66 : vector<1x192x48xf32> to vector<192x48xf32>
    %68 = vector.extract_strided_slice %63 {offsets = [0, 0], sizes = [1, 48], strides = [1, 1]} : vector<8x192xf32> to vector<1x48xf32>
    %69 = vector.extract_strided_slice %63 {offsets = [1, 0], sizes = [1, 48], strides = [1, 1]} : vector<8x192xf32> to vector<1x48xf32>
    %70 = vector.extract_strided_slice %63 {offsets = [2, 0], sizes = [1, 48], strides = [1, 1]} : vector<8x192xf32> to vector<1x48xf32>
    %71 = vector.extract_strided_slice %63 {offsets = [3, 0], sizes = [1, 48], strides = [1, 1]} : vector<8x192xf32> to vector<1x48xf32>
    %72 = vector.extract_strided_slice %63 {offsets = [4, 0], sizes = [1, 144], strides = [1, 1]} : vector<8x192xf32> to vector<1x144xf32>
    %73 = vector.extract_strided_slice %63 {offsets = [5, 0], sizes = [1, 48], strides = [1, 1]} : vector<8x192xf32> to vector<1x48xf32>
    %74 = vector.extract_strided_slice %63 {offsets = [6, 0], sizes = [1, 192], strides = [1, 1]} : vector<8x192xf32> to vector<1x192xf32>
    %75 = vector.extract_strided_slice %63 {offsets = [7, 0], sizes = [1, 48], strides = [1, 1]} : vector<8x192xf32> to vector<1x48xf32>
    %76 = vector.extract_strided_slice %65 {offsets = [0, 0], sizes = [48, 144], strides = [1, 1]} : vector<48x384xf32> to vector<48x144xf32>
    %77 = vector.extract_strided_slice %65 {offsets = [0, 144], sizes = [48, 48], strides = [1, 1]} : vector<48x384xf32> to vector<48x48xf32>
    %78 = vector.extract_strided_slice %65 {offsets = [0, 192], sizes = [48, 192], strides = [1, 1]} : vector<48x384xf32> to vector<48x192xf32>
    %cst_31 = arith.constant dense<0.000000e+00> : vector<5xf32>
    %79 = vector.multi_reduction <add>, %61, %cst_31 [1] : vector<5x48xf32> to vector<5xf32>
    %80 = vector.shape_cast %79 : vector<5xf32> to vector<5x1xf32>
    %cst_32 = arith.constant 4.800000e+01 : f32
    %81 = vector.broadcast %cst_32 : f32 to vector<5x1xf32>
    %82 = arith.divf %80, %81 : vector<5x1xf32>
    %83 = vector.broadcast %82 : vector<5x1xf32> to vector<5x48xf32>
    %84 = arith.subf %61, %83 : vector<5x48xf32>
    %85 = arith.mulf %84, %84 : vector<5x48xf32>
    %cst_33 = arith.constant dense<0.000000e+00> : vector<5xf32>
    %86 = vector.multi_reduction <add>, %85, %cst_33 [1] : vector<5x48xf32> to vector<5xf32>
    %87 = vector.shape_cast %86 : vector<5xf32> to vector<5x1xf32>
    %cst_34 = arith.constant 4.800000e+01 : f32
    %88 = vector.broadcast %cst_34 : f32 to vector<5x1xf32>
    %89 = arith.divf %87, %88 : vector<5x1xf32>
    %90 = vector.broadcast %82 : vector<5x1xf32> to vector<5x48xf32>
    %91 = arith.subf %61, %90 : vector<5x48xf32>
    %cst_35 = arith.constant 9.99999974E-6 : f32
    %92 = vector.broadcast %cst_35 : f32 to vector<5x1xf32>
    %93 = arith.addf %89, %92 : vector<5x1xf32>
    %94 = math.rsqrt %93 : vector<5x1xf32>
    %95 = vector.broadcast %94 : vector<5x1xf32> to vector<5x48xf32>
    %96 = arith.mulf %91, %95 : vector<5x48xf32>
    %97 = vector.broadcast %68 : vector<1x48xf32> to vector<5x48xf32>
    %98 = arith.mulf %96, %97 : vector<5x48xf32>
    %99 = vector.broadcast %69 : vector<1x48xf32> to vector<5x48xf32>
    %100 = arith.addf %98, %99 : vector<5x48xf32>
    %cst_36 = arith.constant dense<0.000000e+00> : vector<5x144xf32>
    %101 = tpu.matmul %100, %76, %cst_36 {dimension_numbers = #tpu.dot_dimension_numbers<[1], [0], [0], [1], [0, 0, 1, 1], [], []>} : vector<5x48xf32>, vector<48x144xf32>, vector<5x144xf32> -> vector<5x144xf32>
    %102 = vector.broadcast %72 : vector<1x144xf32> to vector<5x144xf32>
    %103 = arith.addf %101, %102 : vector<5x144xf32>
    %104 = vector.extract_strided_slice %103 {offsets = [0, 0], sizes = [5, 48], strides = [1, 1]} : vector<5x144xf32> to vector<5x48xf32>
    %105 = vector.extract_strided_slice %103 {offsets = [0, 48], sizes = [5, 48], strides = [1, 1]} : vector<5x144xf32> to vector<5x48xf32>
    %106 = vector.extract_strided_slice %103 {offsets = [0, 96], sizes = [5, 48], strides = [1, 1]} : vector<5x144xf32> to vector<5x48xf32>
    %107 = vector.extract_strided_slice %104 {offsets = [0, 0], sizes = [5, 12], strides = [1, 1]} : vector<5x48xf32> to vector<5x12xf32>
    %108 = vector.extract_strided_slice %105 {offsets = [0, 0], sizes = [5, 12], strides = [1, 1]} : vector<5x48xf32> to vector<5x12xf32>
    %cst_37 = arith.constant dense<0.000000e+00> : vector<5x5xf32>
    %109 = tpu.matmul %107, %108, %cst_37 {dimension_numbers = #tpu.dot_dimension_numbers<[1], [1], [0], [0], [0, 0, 1, 0], [], []>} : vector<5x12xf32>, vector<5x12xf32>, vector<5x5xf32> -> vector<5x5xf32>
    %cst_38 = arith.constant 0.288675129 : f32
    %110 = vector.broadcast %cst_38 : f32 to vector<5x5xf32>
    %111 = arith.mulf %109, %110 : vector<5x5xf32>
    %cst_39 = arith.constant dense<0xFF800000> : vector<5xf32>
    %112 = vector.multi_reduction <maximumf>, %111, %cst_39 [1] : vector<5x5xf32> to vector<5xf32>
    %113 = vector.shape_cast %112 : vector<5xf32> to vector<5x1xf32>
    %114 = vector.broadcast %113 : vector<5x1xf32> to vector<5x5xf32>
    %115 = arith.subf %111, %114 : vector<5x5xf32>
    %116 = math.exp %115 : vector<5x5xf32>
    %cst_40 = arith.constant dense<0.000000e+00> : vector<5xf32>
    %117 = vector.multi_reduction <add>, %116, %cst_40 [1] : vector<5x5xf32> to vector<5xf32>
    %118 = vector.shape_cast %117 : vector<5xf32> to vector<5x1xf32>
    %119 = tpu.reciprocal %118 {approx = true} : vector<5x1xf32> -> vector<5x1xf32>
    %120 = vector.broadcast %119 : vector<5x1xf32> to vector<5x5xf32>
    %121 = arith.mulf %116, %120 : vector<5x5xf32>
    %122 = vector.extract_strided_slice %106 {offsets = [0, 0], sizes = [5, 12], strides = [1, 1]} : vector<5x48xf32> to vector<5x12xf32>
    %cst_41 = arith.constant dense<0.000000e+00> : vector<5x12xf32>
    %123 = tpu.matmul %121, %122, %cst_41 {dimension_numbers = #tpu.dot_dimension_numbers<[1], [0], [0], [1], [0, 0, 1, 1], [], []>} : vector<5x5xf32>, vector<5x12xf32>, vector<5x12xf32> -> vector<5x12xf32>
    %124 = vector.extract_strided_slice %104 {offsets = [0, 12], sizes = [5, 12], strides = [1, 1]} : vector<5x48xf32> to vector<5x12xf32>
    %125 = vector.extract_strided_slice %105 {offsets = [0, 12], sizes = [5, 12], strides = [1, 1]} : vector<5x48xf32> to vector<5x12xf32>
    %cst_42 = arith.constant dense<0.000000e+00> : vector<5x5xf32>
    %126 = tpu.matmul %124, %125, %cst_42 {dimension_numbers = #tpu.dot_dimension_numbers<[1], [1], [0], [0], [0, 0, 1, 0], [], []>} : vector<5x12xf32>, vector<5x12xf32>, vector<5x5xf32> -> vector<5x5xf32>
    %cst_43 = arith.constant 0.288675129 : f32
    %127 = vector.broadcast %cst_43 : f32 to vector<5x5xf32>
    %128 = arith.mulf %126, %127 : vector<5x5xf32>
    %cst_44 = arith.constant dense<0xFF800000> : vector<5xf32>
    %129 = vector.multi_reduction <maximumf>, %128, %cst_44 [1] : vector<5x5xf32> to vector<5xf32>
    %130 = vector.shape_cast %129 : vector<5xf32> to vector<5x1xf32>
    %131 = vector.broadcast %130 : vector<5x1xf32> to vector<5x5xf32>
    %132 = arith.subf %128, %131 : vector<5x5xf32>
    %133 = math.exp %132 : vector<5x5xf32>
    %cst_45 = arith.constant dense<0.000000e+00> : vector<5xf32>
    %134 = vector.multi_reduction <add>, %133, %cst_45 [1] : vector<5x5xf32> to vector<5xf32>
    %135 = vector.shape_cast %134 : vector<5xf32> to vector<5x1xf32>
    %136 = tpu.reciprocal %135 {approx = true} : vector<5x1xf32> -> vector<5x1xf32>
    %137 = vector.broadcast %136 : vector<5x1xf32> to vector<5x5xf32>
    %138 = arith.mulf %133, %137 : vector<5x5xf32>
    %139 = vector.extract_strided_slice %106 {offsets = [0, 12], sizes = [5, 12], strides = [1, 1]} : vector<5x48xf32> to vector<5x12xf32>
    %cst_46 = arith.constant dense<0.000000e+00> : vector<5x12xf32>
    %140 = tpu.matmul %138, %139, %cst_46 {dimension_numbers = #tpu.dot_dimension_numbers<[1], [0], [0], [1], [0, 0, 1, 1], [], []>} : vector<5x5xf32>, vector<5x12xf32>, vector<5x12xf32> -> vector<5x12xf32>
    %141 = vector.extract_strided_slice %104 {offsets = [0, 24], sizes = [5, 12], strides = [1, 1]} : vector<5x48xf32> to vector<5x12xf32>
    %142 = vector.extract_strided_slice %105 {offsets = [0, 24], sizes = [5, 12], strides = [1, 1]} : vector<5x48xf32> to vector<5x12xf32>
    %cst_47 = arith.constant dense<0.000000e+00> : vector<5x5xf32>
    %143 = tpu.matmul %141, %142, %cst_47 {dimension_numbers = #tpu.dot_dimension_numbers<[1], [1], [0], [0], [0, 0, 1, 0], [], []>} : vector<5x12xf32>, vector<5x12xf32>, vector<5x5xf32> -> vector<5x5xf32>
    %cst_48 = arith.constant 0.288675129 : f32
    %144 = vector.broadcast %cst_48 : f32 to vector<5x5xf32>
    %145 = arith.mulf %143, %144 : vector<5x5xf32>
    %cst_49 = arith.constant dense<0xFF800000> : vector<5xf32>
    %146 = vector.multi_reduction <maximumf>, %145, %cst_49 [1] : vector<5x5xf32> to vector<5xf32>
    %147 = vector.shape_cast %146 : vector<5xf32> to vector<5x1xf32>
    %148 = vector.broadcast %147 : vector<5x1xf32> to vector<5x5xf32>
    %149 = arith.subf %145, %148 : vector<5x5xf32>
    %150 = math.exp %149 : vector<5x5xf32>
    %cst_50 = arith.constant dense<0.000000e+00> : vector<5xf32>
    %151 = vector.multi_reduction <add>, %150, %cst_50 [1] : vector<5x5xf32> to vector<5xf32>
    %152 = vector.shape_cast %151 : vector<5xf32> to vector<5x1xf32>
    %153 = tpu.reciprocal %152 {approx = true} : vector<5x1xf32> -> vector<5x1xf32>
    %154 = vector.broadcast %153 : vector<5x1xf32> to vector<5x5xf32>
    %155 = arith.mulf %150, %154 : vector<5x5xf32>
    %156 = vector.extract_strided_slice %106 {offsets = [0, 24], sizes = [5, 12], strides = [1, 1]} : vector<5x48xf32> to vector<5x12xf32>
    %cst_51 = arith.constant dense<0.000000e+00> : vector<5x12xf32>
    %157 = tpu.matmul %155, %156, %cst_51 {dimension_numbers = #tpu.dot_dimension_numbers<[1], [0], [0], [1], [0, 0, 1, 1], [], []>} : vector<5x5xf32>, vector<5x12xf32>, vector<5x12xf32> -> vector<5x12xf32>
    %158 = vector.extract_strided_slice %104 {offsets = [0, 36], sizes = [5, 12], strides = [1, 1]} : vector<5x48xf32> to vector<5x12xf32>
    %159 = vector.extract_strided_slice %105 {offsets = [0, 36], sizes = [5, 12], strides = [1, 1]} : vector<5x48xf32> to vector<5x12xf32>
    %cst_52 = arith.constant dense<0.000000e+00> : vector<5x5xf32>
    %160 = tpu.matmul %158, %159, %cst_52 {dimension_numbers = #tpu.dot_dimension_numbers<[1], [1], [0], [0], [0, 0, 1, 0], [], []>} : vector<5x12xf32>, vector<5x12xf32>, vector<5x5xf32> -> vector<5x5xf32>
    %cst_53 = arith.constant 0.288675129 : f32
    %161 = vector.broadcast %cst_53 : f32 to vector<5x5xf32>
    %162 = arith.mulf %160, %161 : vector<5x5xf32>
    %cst_54 = arith.constant dense<0xFF800000> : vector<5xf32>
    %163 = vector.multi_reduction <maximumf>, %162, %cst_54 [1] : vector<5x5xf32> to vector<5xf32>
    %164 = vector.shape_cast %163 : vector<5xf32> to vector<5x1xf32>
    %165 = vector.broadcast %164 : vector<5x1xf32> to vector<5x5xf32>
    %166 = arith.subf %162, %165 : vector<5x5xf32>
    %167 = math.exp %166 : vector<5x5xf32>
    %cst_55 = arith.constant dense<0.000000e+00> : vector<5xf32>
    %168 = vector.multi_reduction <add>, %167, %cst_55 [1] : vector<5x5xf32> to vector<5xf32>
    %169 = vector.shape_cast %168 : vector<5xf32> to vector<5x1xf32>
    %170 = tpu.reciprocal %169 {approx = true} : vector<5x1xf32> -> vector<5x1xf32>
    %171 = vector.broadcast %170 : vector<5x1xf32> to vector<5x5xf32>
    %172 = arith.mulf %167, %171 : vector<5x5xf32>
    %173 = vector.extract_strided_slice %106 {offsets = [0, 36], sizes = [5, 12], strides = [1, 1]} : vector<5x48xf32> to vector<5x12xf32>
    %cst_56 = arith.constant dense<0.000000e+00> : vector<5x12xf32>
    %174 = tpu.matmul %172, %173, %cst_56 {dimension_numbers = #tpu.dot_dimension_numbers<[1], [0], [0], [1], [0, 0, 1, 1], [], []>} : vector<5x5xf32>, vector<5x12xf32>, vector<5x12xf32> -> vector<5x12xf32>
    %175 = tpu.concatenate %123, %140, %157, %174 in 1 : vector<5x12xf32>, vector<5x12xf32>, vector<5x12xf32>, vector<5x12xf32> -> vector<5x48xf32>
    %cst_57 = arith.constant dense<0.000000e+00> : vector<5x48xf32>
    %176 = tpu.matmul %175, %77, %cst_57 {dimension_numbers = #tpu.dot_dimension_numbers<[1], [0], [0], [1], [0, 0, 1, 1], [], []>} : vector<5x48xf32>, vector<48x48xf32>, vector<5x48xf32> -> vector<5x48xf32>
    %177 = vector.broadcast %73 : vector<1x48xf32> to vector<5x48xf32>
    %178 = arith.addf %176, %177 : vector<5x48xf32>
    %179 = arith.addf %61, %178 : vector<5x48xf32>
    %cst_58 = arith.constant dense<0.000000e+00> : vector<5xf32>
    %180 = vector.multi_reduction <add>, %179, %cst_58 [1] : vector<5x48xf32> to vector<5xf32>
    %181 = vector.shape_cast %180 : vector<5xf32> to vector<5x1xf32>
    %cst_59 = arith.constant 4.800000e+01 : f32
    %182 = vector.broadcast %cst_59 : f32 to vector<5x1xf32>
    %183 = arith.divf %181, %182 : vector<5x1xf32>
    %184 = vector.broadcast %183 : vector<5x1xf32> to vector<5x48xf32>
    %185 = arith.subf %179, %184 : vector<5x48xf32>
    %186 = arith.mulf %185, %185 : vector<5x48xf32>
    %cst_60 = arith.constant dense<0.000000e+00> : vector<5xf32>
    %187 = vector.multi_reduction <add>, %186, %cst_60 [1] : vector<5x48xf32> to vector<5xf32>
    %188 = vector.shape_cast %187 : vector<5xf32> to vector<5x1xf32>
    %cst_61 = arith.constant 4.800000e+01 : f32
    %189 = vector.broadcast %cst_61 : f32 to vector<5x1xf32>
    %190 = arith.divf %188, %189 : vector<5x1xf32>
    %191 = vector.broadcast %183 : vector<5x1xf32> to vector<5x48xf32>
    %192 = arith.subf %179, %191 : vector<5x48xf32>
    %cst_62 = arith.constant 9.99999974E-6 : f32
    %193 = vector.broadcast %cst_62 : f32 to vector<5x1xf32>
    %194 = arith.addf %190, %193 : vector<5x1xf32>
    %195 = math.rsqrt %194 : vector<5x1xf32>
    %196 = vector.broadcast %195 : vector<5x1xf32> to vector<5x48xf32>
    %197 = arith.mulf %192, %196 : vector<5x48xf32>
    %198 = vector.broadcast %70 : vector<1x48xf32> to vector<5x48xf32>
    %199 = arith.mulf %197, %198 : vector<5x48xf32>
    %200 = vector.broadcast %71 : vector<1x48xf32> to vector<5x48xf32>
    %201 = arith.addf %199, %200 : vector<5x48xf32>
    %cst_63 = arith.constant dense<0.000000e+00> : vector<5x192xf32>
    %202 = tpu.matmul %201, %78, %cst_63 {dimension_numbers = #tpu.dot_dimension_numbers<[1], [0], [0], [1], [0, 0, 1, 1], [], []>} : vector<5x48xf32>, vector<48x192xf32>, vector<5x192xf32> -> vector<5x192xf32>
    %203 = vector.broadcast %74 : vector<1x192xf32> to vector<5x192xf32>
    %204 = arith.addf %202, %203 : vector<5x192xf32>
    %cst_64 = arith.constant -1.702000e+00 : f32
    %205 = vector.broadcast %cst_64 : f32 to vector<5x192xf32>
    %206 = arith.mulf %205, %204 : vector<5x192xf32>
    %207 = math.exp %206 : vector<5x192xf32>
    %cst_65 = arith.constant 1.000000e+00 : f32
    %208 = vector.broadcast %cst_65 : f32 to vector<5x192xf32>
    %209 = arith.addf %208, %207 : vector<5x192xf32>
    %cst_66 = arith.constant 1.000000e+00 : f32
    %210 = vector.broadcast %cst_66 : f32 to vector<5x192xf32>
    %211 = arith.divf %210, %209 : vector<5x192xf32>
    %212 = arith.mulf %204, %211 : vector<5x192xf32>
    %cst_67 = arith.constant dense<0.000000e+00> : vector<5x48xf32>
    %213 = tpu.matmul %212, %67, %cst_67 {dimension_numbers = #tpu.dot_dimension_numbers<[1], [0], [0], [1], [0, 0, 1, 1], [], []>} : vector<5x192xf32>, vector<192x48xf32>, vector<5x48xf32> -> vector<5x48xf32>
    %214 = vector.broadcast %75 : vector<1x48xf32> to vector<5x48xf32>
    %215 = arith.addf %213, %214 : vector<5x48xf32>
    %216 = arith.addf %179, %215 : vector<5x48xf32>
    %c1 = arith.constant 1 : index
    %c0_68 = arith.constant 0 : index
    %c0_69 = arith.constant 0 : index
    %217 = vector.load %arg7[%c1, %c0_68, %c0_69] : memref<2x8x192xf32, #tpu.memory_space<vmem>>, vector<1x8x192xf32>
    %218 = vector.shape_cast %217 : vector<1x8x192xf32> to vector<8x192xf32>
    %c1_70 = arith.constant 1 : index
    %c0_71 = arith.constant 0 : index
    %c0_72 = arith.constant 0 : index
    %219 = vector.load %arg8[%c1_70, %c0_71, %c0_72] : memref<2x48x384xf32, #tpu.memory_space<vmem>>, vector<1x48x384xf32>
    %220 = vector.shape_cast %219 : vector<1x48x384xf32> to vector<48x384xf32>
    %c1_73 = arith.constant 1 : index
    %c0_74 = arith.constant 0 : index
    %c0_75 = arith.constant 0 : index
    %221 = vector.load %arg9[%c1_73, %c0_74, %c0_75] : memref<2x192x48xf32, #tpu.memory_space<vmem>>, vector<1x192x48xf32>
    %222 = vector.shape_cast %221 : vector<1x192x48xf32> to vector<192x48xf32>
    %223 = vector.extract_strided_slice %218 {offsets = [0, 0], sizes = [1, 48], strides = [1, 1]} : vector<8x192xf32> to vector<1x48xf32>
    %224 = vector.extract_strided_slice %218 {offsets = [1, 0], sizes = [1, 48], strides = [1, 1]} : vector<8x192xf32> to vector<1x48xf32>
    %225 = vector.extract_strided_slice %218 {offsets = [2, 0], sizes = [1, 48], strides = [1, 1]} : vector<8x192xf32> to vector<1x48xf32>
    %226 = vector.extract_strided_slice %218 {offsets = [3, 0], sizes = [1, 48], strides = [1, 1]} : vector<8x192xf32> to vector<1x48xf32>
    %227 = vector.extract_strided_slice %218 {offsets = [4, 0], sizes = [1, 144], strides = [1, 1]} : vector<8x192xf32> to vector<1x144xf32>
    %228 = vector.extract_strided_slice %218 {offsets = [5, 0], sizes = [1, 48], strides = [1, 1]} : vector<8x192xf32> to vector<1x48xf32>
    %229 = vector.extract_strided_slice %218 {offsets = [6, 0], sizes = [1, 192], strides = [1, 1]} : vector<8x192xf32> to vector<1x192xf32>
    %230 = vector.extract_strided_slice %218 {offsets = [7, 0], sizes = [1, 48], strides = [1, 1]} : vector<8x192xf32> to vector<1x48xf32>
    %231 = vector.extract_strided_slice %220 {offsets = [0, 0], sizes = [48, 144], strides = [1, 1]} : vector<48x384xf32> to vector<48x144xf32>
    %232 = vector.extract_strided_slice %220 {offsets = [0, 144], sizes = [48, 48], strides = [1, 1]} : vector<48x384xf32> to vector<48x48xf32>
    %233 = vector.extract_strided_slice %220 {offsets = [0, 192], sizes = [48, 192], strides = [1, 1]} : vector<48x384xf32> to vector<48x192xf32>
    %cst_76 = arith.constant dense<0.000000e+00> : vector<5xf32>
    %234 = vector.multi_reduction <add>, %216, %cst_76 [1] : vector<5x48xf32> to vector<5xf32>
    %235 = vector.shape_cast %234 : vector<5xf32> to vector<5x1xf32>
    %cst_77 = arith.constant 4.800000e+01 : f32
    %236 = vector.broadcast %cst_77 : f32 to vector<5x1xf32>
    %237 = arith.divf %235, %236 : vector<5x1xf32>
    %238 = vector.broadcast %237 : vector<5x1xf32> to vector<5x48xf32>
    %239 = arith.subf %216, %238 : vector<5x48xf32>
    %240 = arith.mulf %239, %239 : vector<5x48xf32>
    %cst_78 = arith.constant dense<0.000000e+00> : vector<5xf32>
    %241 = vector.multi_reduction <add>, %240, %cst_78 [1] : vector<5x48xf32> to vector<5xf32>
    %242 = vector.shape_cast %241 : vector<5xf32> to vector<5x1xf32>
    %cst_79 = arith.constant 4.800000e+01 : f32
    %243 = vector.broadcast %cst_79 : f32 to vector<5x1xf32>
    %244 = arith.divf %242, %243 : vector<5x1xf32>
    %245 = vector.broadcast %237 : vector<5x1xf32> to vector<5x48xf32>
    %246 = arith.subf %216, %245 : vector<5x48xf32>
    %cst_80 = arith.constant 9.99999974E-6 : f32
    %247 = vector.broadcast %cst_80 : f32 to vector<5x1xf32>
    %248 = arith.addf %244, %247 : vector<5x1xf32>
    %249 = math.rsqrt %248 : vector<5x1xf32>
    %250 = vector.broadcast %249 : vector<5x1xf32> to vector<5x48xf32>
    %251 = arith.mulf %246, %250 : vector<5x48xf32>
    %252 = vector.broadcast %223 : vector<1x48xf32> to vector<5x48xf32>
    %253 = arith.mulf %251, %252 : vector<5x48xf32>
    %254 = vector.broadcast %224 : vector<1x48xf32> to vector<5x48xf32>
    %255 = arith.addf %253, %254 : vector<5x48xf32>
    %cst_81 = arith.constant dense<0.000000e+00> : vector<5x144xf32>
    %256 = tpu.matmul %255, %231, %cst_81 {dimension_numbers = #tpu.dot_dimension_numbers<[1], [0], [0], [1], [0, 0, 1, 1], [], []>} : vector<5x48xf32>, vector<48x144xf32>, vector<5x144xf32> -> vector<5x144xf32>
    %257 = vector.broadcast %227 : vector<1x144xf32> to vector<5x144xf32>
    %258 = arith.addf %256, %257 : vector<5x144xf32>
    %259 = vector.extract_strided_slice %258 {offsets = [0, 0], sizes = [5, 48], strides = [1, 1]} : vector<5x144xf32> to vector<5x48xf32>
    %260 = vector.extract_strided_slice %258 {offsets = [0, 48], sizes = [5, 48], strides = [1, 1]} : vector<5x144xf32> to vector<5x48xf32>
    %261 = vector.extract_strided_slice %258 {offsets = [0, 96], sizes = [5, 48], strides = [1, 1]} : vector<5x144xf32> to vector<5x48xf32>
    %262 = vector.extract_strided_slice %259 {offsets = [0, 0], sizes = [5, 12], strides = [1, 1]} : vector<5x48xf32> to vector<5x12xf32>
    %263 = vector.extract_strided_slice %260 {offsets = [0, 0], sizes = [5, 12], strides = [1, 1]} : vector<5x48xf32> to vector<5x12xf32>
    %cst_82 = arith.constant dense<0.000000e+00> : vector<5x5xf32>
    %264 = tpu.matmul %262, %263, %cst_82 {dimension_numbers = #tpu.dot_dimension_numbers<[1], [1], [0], [0], [0, 0, 1, 0], [], []>} : vector<5x12xf32>, vector<5x12xf32>, vector<5x5xf32> -> vector<5x5xf32>
    %cst_83 = arith.constant 0.288675129 : f32
    %265 = vector.broadcast %cst_83 : f32 to vector<5x5xf32>
    %266 = arith.mulf %264, %265 : vector<5x5xf32>
    %cst_84 = arith.constant dense<0xFF800000> : vector<5xf32>
    %267 = vector.multi_reduction <maximumf>, %266, %cst_84 [1] : vector<5x5xf32> to vector<5xf32>
    %268 = vector.shape_cast %267 : vector<5xf32> to vector<5x1xf32>
    %269 = vector.broadcast %268 : vector<5x1xf32> to vector<5x5xf32>
    %270 = arith.subf %266, %269 : vector<5x5xf32>
    %271 = math.exp %270 : vector<5x5xf32>
    %cst_85 = arith.constant dense<0.000000e+00> : vector<5xf32>
    %272 = vector.multi_reduction <add>, %271, %cst_85 [1] : vector<5x5xf32> to vector<5xf32>
    %273 = vector.shape_cast %272 : vector<5xf32> to vector<5x1xf32>
    %274 = tpu.reciprocal %273 {approx = true} : vector<5x1xf32> -> vector<5x1xf32>
    %275 = vector.broadcast %274 : vector<5x1xf32> to vector<5x5xf32>
    %276 = arith.mulf %271, %275 : vector<5x5xf32>
    %277 = vector.extract_strided_slice %261 {offsets = [0, 0], sizes = [5, 12], strides = [1, 1]} : vector<5x48xf32> to vector<5x12xf32>
    %cst_86 = arith.constant dense<0.000000e+00> : vector<5x12xf32>
    %278 = tpu.matmul %276, %277, %cst_86 {dimension_numbers = #tpu.dot_dimension_numbers<[1], [0], [0], [1], [0, 0, 1, 1], [], []>} : vector<5x5xf32>, vector<5x12xf32>, vector<5x12xf32> -> vector<5x12xf32>
    %279 = vector.extract_strided_slice %259 {offsets = [0, 12], sizes = [5, 12], strides = [1, 1]} : vector<5x48xf32> to vector<5x12xf32>
    %280 = vector.extract_strided_slice %260 {offsets = [0, 12], sizes = [5, 12], strides = [1, 1]} : vector<5x48xf32> to vector<5x12xf32>
    %cst_87 = arith.constant dense<0.000000e+00> : vector<5x5xf32>
    %281 = tpu.matmul %279, %280, %cst_87 {dimension_numbers = #tpu.dot_dimension_numbers<[1], [1], [0], [0], [0, 0, 1, 0], [], []>} : vector<5x12xf32>, vector<5x12xf32>, vector<5x5xf32> -> vector<5x5xf32>
    %cst_88 = arith.constant 0.288675129 : f32
    %282 = vector.broadcast %cst_88 : f32 to vector<5x5xf32>
    %283 = arith.mulf %281, %282 : vector<5x5xf32>
    %cst_89 = arith.constant dense<0xFF800000> : vector<5xf32>
    %284 = vector.multi_reduction <maximumf>, %283, %cst_89 [1] : vector<5x5xf32> to vector<5xf32>
    %285 = vector.shape_cast %284 : vector<5xf32> to vector<5x1xf32>
    %286 = vector.broadcast %285 : vector<5x1xf32> to vector<5x5xf32>
    %287 = arith.subf %283, %286 : vector<5x5xf32>
    %288 = math.exp %287 : vector<5x5xf32>
    %cst_90 = arith.constant dense<0.000000e+00> : vector<5xf32>
    %289 = vector.multi_reduction <add>, %288, %cst_90 [1] : vector<5x5xf32> to vector<5xf32>
    %290 = vector.shape_cast %289 : vector<5xf32> to vector<5x1xf32>
    %291 = tpu.reciprocal %290 {approx = true} : vector<5x1xf32> -> vector<5x1xf32>
    %292 = vector.broadcast %291 : vector<5x1xf32> to vector<5x5xf32>
    %293 = arith.mulf %288, %292 : vector<5x5xf32>
    %294 = vector.extract_strided_slice %261 {offsets = [0, 12], sizes = [5, 12], strides = [1, 1]} : vector<5x48xf32> to vector<5x12xf32>
    %cst_91 = arith.constant dense<0.000000e+00> : vector<5x12xf32>
    %295 = tpu.matmul %293, %294, %cst_91 {dimension_numbers = #tpu.dot_dimension_numbers<[1], [0], [0], [1], [0, 0, 1, 1], [], []>} : vector<5x5xf32>, vector<5x12xf32>, vector<5x12xf32> -> vector<5x12xf32>
    %296 = vector.extract_strided_slice %259 {offsets = [0, 24], sizes = [5, 12], strides = [1, 1]} : vector<5x48xf32> to vector<5x12xf32>
    %297 = vector.extract_strided_slice %260 {offsets = [0, 24], sizes = [5, 12], strides = [1, 1]} : vector<5x48xf32> to vector<5x12xf32>
    %cst_92 = arith.constant dense<0.000000e+00> : vector<5x5xf32>
    %298 = tpu.matmul %296, %297, %cst_92 {dimension_numbers = #tpu.dot_dimension_numbers<[1], [1], [0], [0], [0, 0, 1, 0], [], []>} : vector<5x12xf32>, vector<5x12xf32>, vector<5x5xf32> -> vector<5x5xf32>
    %cst_93 = arith.constant 0.288675129 : f32
    %299 = vector.broadcast %cst_93 : f32 to vector<5x5xf32>
    %300 = arith.mulf %298, %299 : vector<5x5xf32>
    %cst_94 = arith.constant dense<0xFF800000> : vector<5xf32>
    %301 = vector.multi_reduction <maximumf>, %300, %cst_94 [1] : vector<5x5xf32> to vector<5xf32>
    %302 = vector.shape_cast %301 : vector<5xf32> to vector<5x1xf32>
    %303 = vector.broadcast %302 : vector<5x1xf32> to vector<5x5xf32>
    %304 = arith.subf %300, %303 : vector<5x5xf32>
    %305 = math.exp %304 : vector<5x5xf32>
    %cst_95 = arith.constant dense<0.000000e+00> : vector<5xf32>
    %306 = vector.multi_reduction <add>, %305, %cst_95 [1] : vector<5x5xf32> to vector<5xf32>
    %307 = vector.shape_cast %306 : vector<5xf32> to vector<5x1xf32>
    %308 = tpu.reciprocal %307 {approx = true} : vector<5x1xf32> -> vector<5x1xf32>
    %309 = vector.broadcast %308 : vector<5x1xf32> to vector<5x5xf32>
    %310 = arith.mulf %305, %309 : vector<5x5xf32>
    %311 = vector.extract_strided_slice %261 {offsets = [0, 24], sizes = [5, 12], strides = [1, 1]} : vector<5x48xf32> to vector<5x12xf32>
    %cst_96 = arith.constant dense<0.000000e+00> : vector<5x12xf32>
    %312 = tpu.matmul %310, %311, %cst_96 {dimension_numbers = #tpu.dot_dimension_numbers<[1], [0], [0], [1], [0, 0, 1, 1], [], []>} : vector<5x5xf32>, vector<5x12xf32>, vector<5x12xf32> -> vector<5x12xf32>
    %313 = vector.extract_strided_slice %259 {offsets = [0, 36], sizes = [5, 12], strides = [1, 1]} : vector<5x48xf32> to vector<5x12xf32>
    %314 = vector.extract_strided_slice %260 {offsets = [0, 36], sizes = [5, 12], strides = [1, 1]} : vector<5x48xf32> to vector<5x12xf32>
    %cst_97 = arith.constant dense<0.000000e+00> : vector<5x5xf32>
    %315 = tpu.matmul %313, %314, %cst_97 {dimension_numbers = #tpu.dot_dimension_numbers<[1], [1], [0], [0], [0, 0, 1, 0], [], []>} : vector<5x12xf32>, vector<5x12xf32>, vector<5x5xf32> -> vector<5x5xf32>
    %cst_98 = arith.constant 0.288675129 : f32
    %316 = vector.broadcast %cst_98 : f32 to vector<5x5xf32>
    %317 = arith.mulf %315, %316 : vector<5x5xf32>
    %cst_99 = arith.constant dense<0xFF800000> : vector<5xf32>
    %318 = vector.multi_reduction <maximumf>, %317, %cst_99 [1] : vector<5x5xf32> to vector<5xf32>
    %319 = vector.shape_cast %318 : vector<5xf32> to vector<5x1xf32>
    %320 = vector.broadcast %319 : vector<5x1xf32> to vector<5x5xf32>
    %321 = arith.subf %317, %320 : vector<5x5xf32>
    %322 = math.exp %321 : vector<5x5xf32>
    %cst_100 = arith.constant dense<0.000000e+00> : vector<5xf32>
    %323 = vector.multi_reduction <add>, %322, %cst_100 [1] : vector<5x5xf32> to vector<5xf32>
    %324 = vector.shape_cast %323 : vector<5xf32> to vector<5x1xf32>
    %325 = tpu.reciprocal %324 {approx = true} : vector<5x1xf32> -> vector<5x1xf32>
    %326 = vector.broadcast %325 : vector<5x1xf32> to vector<5x5xf32>
    %327 = arith.mulf %322, %326 : vector<5x5xf32>
    %328 = vector.extract_strided_slice %261 {offsets = [0, 36], sizes = [5, 12], strides = [1, 1]} : vector<5x48xf32> to vector<5x12xf32>
    %cst_101 = arith.constant dense<0.000000e+00> : vector<5x12xf32>
    %329 = tpu.matmul %327, %328, %cst_101 {dimension_numbers = #tpu.dot_dimension_numbers<[1], [0], [0], [1], [0, 0, 1, 1], [], []>} : vector<5x5xf32>, vector<5x12xf32>, vector<5x12xf32> -> vector<5x12xf32>
    %330 = tpu.concatenate %278, %295, %312, %329 in 1 : vector<5x12xf32>, vector<5x12xf32>, vector<5x12xf32>, vector<5x12xf32> -> vector<5x48xf32>
    %cst_102 = arith.constant dense<0.000000e+00> : vector<5x48xf32>
    %331 = tpu.matmul %330, %232, %cst_102 {dimension_numbers = #tpu.dot_dimension_numbers<[1], [0], [0], [1], [0, 0, 1, 1], [], []>} : vector<5x48xf32>, vector<48x48xf32>, vector<5x48xf32> -> vector<5x48xf32>
    %332 = vector.broadcast %228 : vector<1x48xf32> to vector<5x48xf32>
    %333 = arith.addf %331, %332 : vector<5x48xf32>
    %334 = arith.addf %216, %333 : vector<5x48xf32>
    %cst_103 = arith.constant dense<0.000000e+00> : vector<5xf32>
    %335 = vector.multi_reduction <add>, %334, %cst_103 [1] : vector<5x48xf32> to vector<5xf32>
    %336 = vector.shape_cast %335 : vector<5xf32> to vector<5x1xf32>
    %cst_104 = arith.constant 4.800000e+01 : f32
    %337 = vector.broadcast %cst_104 : f32 to vector<5x1xf32>
    %338 = arith.divf %336, %337 : vector<5x1xf32>
    %339 = vector.broadcast %338 : vector<5x1xf32> to vector<5x48xf32>
    %340 = arith.subf %334, %339 : vector<5x48xf32>
    %341 = arith.mulf %340, %340 : vector<5x48xf32>
    %cst_105 = arith.constant dense<0.000000e+00> : vector<5xf32>
    %342 = vector.multi_reduction <add>, %341, %cst_105 [1] : vector<5x48xf32> to vector<5xf32>
    %343 = vector.shape_cast %342 : vector<5xf32> to vector<5x1xf32>
    %cst_106 = arith.constant 4.800000e+01 : f32
    %344 = vector.broadcast %cst_106 : f32 to vector<5x1xf32>
    %345 = arith.divf %343, %344 : vector<5x1xf32>
    %346 = vector.broadcast %338 : vector<5x1xf32> to vector<5x48xf32>
    %347 = arith.subf %334, %346 : vector<5x48xf32>
    %cst_107 = arith.constant 9.99999974E-6 : f32
    %348 = vector.broadcast %cst_107 : f32 to vector<5x1xf32>
    %349 = arith.addf %345, %348 : vector<5x1xf32>
    %350 = math.rsqrt %349 : vector<5x1xf32>
    %351 = vector.broadcast %350 : vector<5x1xf32> to vector<5x48xf32>
    %352 = arith.mulf %347, %351 : vector<5x48xf32>
    %353 = vector.broadcast %225 : vector<1x48xf32> to vector<5x48xf32>
    %354 = arith.mulf %352, %353 : vector<5x48xf32>
    %355 = vector.broadcast %226 : vector<1x48xf32> to vector<5x48xf32>
    %356 = arith.addf %354, %355 : vector<5x48xf32>
    %cst_108 = arith.constant dense<0.000000e+00> : vector<5x192xf32>
    %357 = tpu.matmul %356, %233, %cst_108 {dimension_numbers = #tpu.dot_dimension_numbers<[1], [0], [0], [1], [0, 0, 1, 1], [], []>} : vector<5x48xf32>, vector<48x192xf32>, vector<5x192xf32> -> vector<5x192xf32>
    %358 = vector.broadcast %229 : vector<1x192xf32> to vector<5x192xf32>
    %359 = arith.addf %357, %358 : vector<5x192xf32>
    %cst_109 = arith.constant -1.702000e+00 : f32
    %360 = vector.broadcast %cst_109 : f32 to vector<5x192xf32>
    %361 = arith.mulf %360, %359 : vector<5x192xf32>
    %362 = math.exp %361 : vector<5x192xf32>
    %cst_110 = arith.constant 1.000000e+00 : f32
    %363 = vector.broadcast %cst_110 : f32 to vector<5x192xf32>
    %364 = arith.addf %363, %362 : vector<5x192xf32>
    %cst_111 = arith.constant 1.000000e+00 : f32
    %365 = vector.broadcast %cst_111 : f32 to vector<5x192xf32>
    %366 = arith.divf %365, %364 : vector<5x192xf32>
    %367 = arith.mulf %359, %366 : vector<5x192xf32>
    %cst_112 = arith.constant dense<0.000000e+00> : vector<5x48xf32>
    %368 = tpu.matmul %367, %222, %cst_112 {dimension_numbers = #tpu.dot_dimension_numbers<[1], [0], [0], [1], [0, 0, 1, 1], [], []>} : vector<5x192xf32>, vector<192x48xf32>, vector<5x48xf32> -> vector<5x48xf32>
    %369 = vector.broadcast %230 : vector<1x48xf32> to vector<5x48xf32>
    %370 = arith.addf %368, %369 : vector<5x48xf32>
    %371 = arith.addf %334, %370 : vector<5x48xf32>
    %372 = vector.extract_strided_slice %371 {offsets = [1, 0], sizes = [4, 48], strides = [1, 1]} : vector<5x48xf32> to vector<4x48xf32>
    %cst_113 = arith.constant dense<0.000000e+00> : vector<4x32xf32>
    %373 = tpu.matmul %372, %1, %cst_113 {dimension_numbers = #tpu.dot_dimension_numbers<[1], [0], [0], [1], [0, 0, 1, 1], [], []>} : vector<4x48xf32>, vector<48x32xf32>, vector<4x32xf32> -> vector<4x32xf32>
    %374 = vector.broadcast %4 : vector<1x32xf32> to vector<4x32xf32>
    %375 = arith.addf %373, %374 : vector<4x32xf32>
    %376 = tpu.concatenate %375, %27 in 0 : vector<4x32xf32>, vector<8x32xf32> -> vector<12x32xf32>
    %c0_114 = arith.constant 0 : index
    %c0_115 = arith.constant 0 : index
    %c0_116 = arith.constant 0 : index
    %377 = vector.load %arg10[%c0_114, %c0_115, %c0_116] : memref<2x8x96xf32, #tpu.memory_space<vmem>>, vector<1x8x96xf32>
    %378 = vector.shape_cast %377 : vector<1x8x96xf32> to vector<8x96xf32>
    %c0_117 = arith.constant 0 : index
    %c0_118 = arith.constant 0 : index
    %c0_119 = arith.constant 0 : index
    %379 = vector.load %arg11[%c0_117, %c0_118, %c0_119] : memref<2x32x192xf32, #tpu.memory_space<vmem>>, vector<1x32x192xf32>
    %380 = vector.shape_cast %379 : vector<1x32x192xf32> to vector<32x192xf32>
    %c0_120 = arith.constant 0 : index
    %c0_121 = arith.constant 0 : index
    %c0_122 = arith.constant 0 : index
    %381 = vector.load %arg12[%c0_120, %c0_121, %c0_122] : memref<2x64x32xf32, #tpu.memory_space<vmem>>, vector<1x64x32xf32>
    %382 = vector.shape_cast %381 : vector<1x64x32xf32> to vector<64x32xf32>
    %383 = vector.extract_strided_slice %378 {offsets = [0, 0], sizes = [1, 32], strides = [1, 1]} : vector<8x96xf32> to vector<1x32xf32>
    %384 = vector.extract_strided_slice %378 {offsets = [1, 0], sizes = [1, 32], strides = [1, 1]} : vector<8x96xf32> to vector<1x32xf32>
    %385 = vector.extract_strided_slice %378 {offsets = [2, 0], sizes = [1, 32], strides = [1, 1]} : vector<8x96xf32> to vector<1x32xf32>
    %386 = vector.extract_strided_slice %378 {offsets = [3, 0], sizes = [1, 32], strides = [1, 1]} : vector<8x96xf32> to vector<1x32xf32>
    %387 = vector.extract_strided_slice %378 {offsets = [4, 0], sizes = [1, 96], strides = [1, 1]} : vector<8x96xf32> to vector<1x96xf32>
    %388 = vector.extract_strided_slice %378 {offsets = [5, 0], sizes = [1, 32], strides = [1, 1]} : vector<8x96xf32> to vector<1x32xf32>
    %389 = vector.extract_strided_slice %378 {offsets = [6, 0], sizes = [1, 64], strides = [1, 1]} : vector<8x96xf32> to vector<1x64xf32>
    %390 = vector.extract_strided_slice %378 {offsets = [7, 0], sizes = [1, 32], strides = [1, 1]} : vector<8x96xf32> to vector<1x32xf32>
    %391 = vector.extract_strided_slice %380 {offsets = [0, 0], sizes = [32, 96], strides = [1, 1]} : vector<32x192xf32> to vector<32x96xf32>
    %392 = vector.extract_strided_slice %380 {offsets = [0, 96], sizes = [32, 32], strides = [1, 1]} : vector<32x192xf32> to vector<32x32xf32>
    %393 = vector.extract_strided_slice %380 {offsets = [0, 128], sizes = [32, 64], strides = [1, 1]} : vector<32x192xf32> to vector<32x64xf32>
    %cst_123 = arith.constant dense<0.000000e+00> : vector<12xf32>
    %394 = vector.multi_reduction <add>, %376, %cst_123 [1] : vector<12x32xf32> to vector<12xf32>
    %395 = vector.shape_cast %394 : vector<12xf32> to vector<12x1xf32>
    %cst_124 = arith.constant 3.200000e+01 : f32
    %396 = vector.broadcast %cst_124 : f32 to vector<12x1xf32>
    %397 = arith.divf %395, %396 : vector<12x1xf32>
    %398 = vector.broadcast %397 : vector<12x1xf32> to vector<12x32xf32>
    %399 = arith.subf %376, %398 : vector<12x32xf32>
    %400 = arith.mulf %399, %399 : vector<12x32xf32>
    %cst_125 = arith.constant dense<0.000000e+00> : vector<12xf32>
    %401 = vector.multi_reduction <add>, %400, %cst_125 [1] : vector<12x32xf32> to vector<12xf32>
    %402 = vector.shape_cast %401 : vector<12xf32> to vector<12x1xf32>
    %cst_126 = arith.constant 3.200000e+01 : f32
    %403 = vector.broadcast %cst_126 : f32 to vector<12x1xf32>
    %404 = arith.divf %402, %403 : vector<12x1xf32>
    %405 = vector.broadcast %397 : vector<12x1xf32> to vector<12x32xf32>
    %406 = arith.subf %376, %405 : vector<12x32xf32>
    %cst_127 = arith.constant 9.99999974E-6 : f32
    %407 = vector.broadcast %cst_127 : f32 to vector<12x1xf32>
    %408 = arith.addf %404, %407 : vector<12x1xf32>
    %409 = math.rsqrt %408 : vector<12x1xf32>
    %410 = vector.broadcast %409 : vector<12x1xf32> to vector<12x32xf32>
    %411 = arith.mulf %406, %410 : vector<12x32xf32>
    %412 = vector.broadcast %383 : vector<1x32xf32> to vector<12x32xf32>
    %413 = arith.mulf %411, %412 : vector<12x32xf32>
    %414 = vector.broadcast %384 : vector<1x32xf32> to vector<12x32xf32>
    %415 = arith.addf %413, %414 : vector<12x32xf32>
    %cst_128 = arith.constant dense<0.000000e+00> : vector<12x96xf32>
    %416 = tpu.matmul %415, %391, %cst_128 {dimension_numbers = #tpu.dot_dimension_numbers<[1], [0], [0], [1], [0, 0, 1, 1], [], []>} : vector<12x32xf32>, vector<32x96xf32>, vector<12x96xf32> -> vector<12x96xf32>
    %417 = vector.broadcast %387 : vector<1x96xf32> to vector<12x96xf32>
    %418 = arith.addf %416, %417 : vector<12x96xf32>
    %419 = vector.extract_strided_slice %418 {offsets = [0, 0], sizes = [12, 32], strides = [1, 1]} : vector<12x96xf32> to vector<12x32xf32>
    %420 = vector.extract_strided_slice %418 {offsets = [0, 32], sizes = [12, 32], strides = [1, 1]} : vector<12x96xf32> to vector<12x32xf32>
    %421 = vector.extract_strided_slice %418 {offsets = [0, 64], sizes = [12, 32], strides = [1, 1]} : vector<12x96xf32> to vector<12x32xf32>
    %422 = vector.extract_strided_slice %419 {offsets = [0, 0], sizes = [12, 8], strides = [1, 1]} : vector<12x32xf32> to vector<12x8xf32>
    %423 = vector.extract_strided_slice %420 {offsets = [0, 0], sizes = [12, 8], strides = [1, 1]} : vector<12x32xf32> to vector<12x8xf32>
    %cst_129 = arith.constant dense<0.000000e+00> : vector<12x12xf32>
    %424 = tpu.matmul %422, %423, %cst_129 {dimension_numbers = #tpu.dot_dimension_numbers<[1], [1], [0], [0], [0, 0, 1, 0], [], []>} : vector<12x8xf32>, vector<12x8xf32>, vector<12x12xf32> -> vector<12x12xf32>
    %cst_130 = arith.constant 0.353553385 : f32
    %425 = vector.broadcast %cst_130 : f32 to vector<12x12xf32>
    %426 = arith.mulf %424, %425 : vector<12x12xf32>
    %cst_131 = arith.constant dense<0xFF800000> : vector<12xf32>
    %427 = vector.multi_reduction <maximumf>, %426, %cst_131 [1] : vector<12x12xf32> to vector<12xf32>
    %428 = vector.shape_cast %427 : vector<12xf32> to vector<12x1xf32>
    %429 = vector.broadcast %428 : vector<12x1xf32> to vector<12x12xf32>
    %430 = arith.subf %426, %429 : vector<12x12xf32>
    %431 = math.exp %430 : vector<12x12xf32>
    %cst_132 = arith.constant dense<0.000000e+00> : vector<12xf32>
    %432 = vector.multi_reduction <add>, %431, %cst_132 [1] : vector<12x12xf32> to vector<12xf32>
    %433 = vector.shape_cast %432 : vector<12xf32> to vector<12x1xf32>
    %434 = tpu.reciprocal %433 {approx = true} : vector<12x1xf32> -> vector<12x1xf32>
    %435 = vector.broadcast %434 : vector<12x1xf32> to vector<12x12xf32>
    %436 = arith.mulf %431, %435 : vector<12x12xf32>
    %437 = vector.extract_strided_slice %421 {offsets = [0, 0], sizes = [12, 8], strides = [1, 1]} : vector<12x32xf32> to vector<12x8xf32>
    %cst_133 = arith.constant dense<0.000000e+00> : vector<12x8xf32>
    %438 = tpu.matmul %436, %437, %cst_133 {dimension_numbers = #tpu.dot_dimension_numbers<[1], [0], [0], [1], [0, 0, 1, 1], [], []>} : vector<12x12xf32>, vector<12x8xf32>, vector<12x8xf32> -> vector<12x8xf32>
    %439 = vector.extract_strided_slice %419 {offsets = [0, 8], sizes = [12, 8], strides = [1, 1]} : vector<12x32xf32> to vector<12x8xf32>
    %440 = vector.extract_strided_slice %420 {offsets = [0, 8], sizes = [12, 8], strides = [1, 1]} : vector<12x32xf32> to vector<12x8xf32>
    %cst_134 = arith.constant dense<0.000000e+00> : vector<12x12xf32>
    %441 = tpu.matmul %439, %440, %cst_134 {dimension_numbers = #tpu.dot_dimension_numbers<[1], [1], [0], [0], [0, 0, 1, 0], [], []>} : vector<12x8xf32>, vector<12x8xf32>, vector<12x12xf32> -> vector<12x12xf32>
    %cst_135 = arith.constant 0.353553385 : f32
    %442 = vector.broadcast %cst_135 : f32 to vector<12x12xf32>
    %443 = arith.mulf %441, %442 : vector<12x12xf32>
    %cst_136 = arith.constant dense<0xFF800000> : vector<12xf32>
    %444 = vector.multi_reduction <maximumf>, %443, %cst_136 [1] : vector<12x12xf32> to vector<12xf32>
    %445 = vector.shape_cast %444 : vector<12xf32> to vector<12x1xf32>
    %446 = vector.broadcast %445 : vector<12x1xf32> to vector<12x12xf32>
    %447 = arith.subf %443, %446 : vector<12x12xf32>
    %448 = math.exp %447 : vector<12x12xf32>
    %cst_137 = arith.constant dense<0.000000e+00> : vector<12xf32>
    %449 = vector.multi_reduction <add>, %448, %cst_137 [1] : vector<12x12xf32> to vector<12xf32>
    %450 = vector.shape_cast %449 : vector<12xf32> to vector<12x1xf32>
    %451 = tpu.reciprocal %450 {approx = true} : vector<12x1xf32> -> vector<12x1xf32>
    %452 = vector.broadcast %451 : vector<12x1xf32> to vector<12x12xf32>
    %453 = arith.mulf %448, %452 : vector<12x12xf32>
    %454 = vector.extract_strided_slice %421 {offsets = [0, 8], sizes = [12, 8], strides = [1, 1]} : vector<12x32xf32> to vector<12x8xf32>
    %cst_138 = arith.constant dense<0.000000e+00> : vector<12x8xf32>
    %455 = tpu.matmul %453, %454, %cst_138 {dimension_numbers = #tpu.dot_dimension_numbers<[1], [0], [0], [1], [0, 0, 1, 1], [], []>} : vector<12x12xf32>, vector<12x8xf32>, vector<12x8xf32> -> vector<12x8xf32>
    %456 = vector.extract_strided_slice %419 {offsets = [0, 16], sizes = [12, 8], strides = [1, 1]} : vector<12x32xf32> to vector<12x8xf32>
    %457 = vector.extract_strided_slice %420 {offsets = [0, 16], sizes = [12, 8], strides = [1, 1]} : vector<12x32xf32> to vector<12x8xf32>
    %cst_139 = arith.constant dense<0.000000e+00> : vector<12x12xf32>
    %458 = tpu.matmul %456, %457, %cst_139 {dimension_numbers = #tpu.dot_dimension_numbers<[1], [1], [0], [0], [0, 0, 1, 0], [], []>} : vector<12x8xf32>, vector<12x8xf32>, vector<12x12xf32> -> vector<12x12xf32>
    %cst_140 = arith.constant 0.353553385 : f32
    %459 = vector.broadcast %cst_140 : f32 to vector<12x12xf32>
    %460 = arith.mulf %458, %459 : vector<12x12xf32>
    %cst_141 = arith.constant dense<0xFF800000> : vector<12xf32>
    %461 = vector.multi_reduction <maximumf>, %460, %cst_141 [1] : vector<12x12xf32> to vector<12xf32>
    %462 = vector.shape_cast %461 : vector<12xf32> to vector<12x1xf32>
    %463 = vector.broadcast %462 : vector<12x1xf32> to vector<12x12xf32>
    %464 = arith.subf %460, %463 : vector<12x12xf32>
    %465 = math.exp %464 : vector<12x12xf32>
    %cst_142 = arith.constant dense<0.000000e+00> : vector<12xf32>
    %466 = vector.multi_reduction <add>, %465, %cst_142 [1] : vector<12x12xf32> to vector<12xf32>
    %467 = vector.shape_cast %466 : vector<12xf32> to vector<12x1xf32>
    %468 = tpu.reciprocal %467 {approx = true} : vector<12x1xf32> -> vector<12x1xf32>
    %469 = vector.broadcast %468 : vector<12x1xf32> to vector<12x12xf32>
    %470 = arith.mulf %465, %469 : vector<12x12xf32>
    %471 = vector.extract_strided_slice %421 {offsets = [0, 16], sizes = [12, 8], strides = [1, 1]} : vector<12x32xf32> to vector<12x8xf32>
    %cst_143 = arith.constant dense<0.000000e+00> : vector<12x8xf32>
    %472 = tpu.matmul %470, %471, %cst_143 {dimension_numbers = #tpu.dot_dimension_numbers<[1], [0], [0], [1], [0, 0, 1, 1], [], []>} : vector<12x12xf32>, vector<12x8xf32>, vector<12x8xf32> -> vector<12x8xf32>
    %473 = vector.extract_strided_slice %419 {offsets = [0, 24], sizes = [12, 8], strides = [1, 1]} : vector<12x32xf32> to vector<12x8xf32>
    %474 = vector.extract_strided_slice %420 {offsets = [0, 24], sizes = [12, 8], strides = [1, 1]} : vector<12x32xf32> to vector<12x8xf32>
    %cst_144 = arith.constant dense<0.000000e+00> : vector<12x12xf32>
    %475 = tpu.matmul %473, %474, %cst_144 {dimension_numbers = #tpu.dot_dimension_numbers<[1], [1], [0], [0], [0, 0, 1, 0], [], []>} : vector<12x8xf32>, vector<12x8xf32>, vector<12x12xf32> -> vector<12x12xf32>
    %cst_145 = arith.constant 0.353553385 : f32
    %476 = vector.broadcast %cst_145 : f32 to vector<12x12xf32>
    %477 = arith.mulf %475, %476 : vector<12x12xf32>
    %cst_146 = arith.constant dense<0xFF800000> : vector<12xf32>
    %478 = vector.multi_reduction <maximumf>, %477, %cst_146 [1] : vector<12x12xf32> to vector<12xf32>
    %479 = vector.shape_cast %478 : vector<12xf32> to vector<12x1xf32>
    %480 = vector.broadcast %479 : vector<12x1xf32> to vector<12x12xf32>
    %481 = arith.subf %477, %480 : vector<12x12xf32>
    %482 = math.exp %481 : vector<12x12xf32>
    %cst_147 = arith.constant dense<0.000000e+00> : vector<12xf32>
    %483 = vector.multi_reduction <add>, %482, %cst_147 [1] : vector<12x12xf32> to vector<12xf32>
    %484 = vector.shape_cast %483 : vector<12xf32> to vector<12x1xf32>
    %485 = tpu.reciprocal %484 {approx = true} : vector<12x1xf32> -> vector<12x1xf32>
    %486 = vector.broadcast %485 : vector<12x1xf32> to vector<12x12xf32>
    %487 = arith.mulf %482, %486 : vector<12x12xf32>
    %488 = vector.extract_strided_slice %421 {offsets = [0, 24], sizes = [12, 8], strides = [1, 1]} : vector<12x32xf32> to vector<12x8xf32>
    %cst_148 = arith.constant dense<0.000000e+00> : vector<12x8xf32>
    %489 = tpu.matmul %487, %488, %cst_148 {dimension_numbers = #tpu.dot_dimension_numbers<[1], [0], [0], [1], [0, 0, 1, 1], [], []>} : vector<12x12xf32>, vector<12x8xf32>, vector<12x8xf32> -> vector<12x8xf32>
    %490 = tpu.concatenate %438, %455, %472, %489 in 1 : vector<12x8xf32>, vector<12x8xf32>, vector<12x8xf32>, vector<12x8xf32> -> vector<12x32xf32>
    %cst_149 = arith.constant dense<0.000000e+00> : vector<12x32xf32>
    %491 = tpu.matmul %490, %392, %cst_149 {dimension_numbers = #tpu.dot_dimension_numbers<[1], [0], [0], [1], [0, 0, 1, 1], [], []>} : vector<12x32xf32>, vector<32x32xf32>, vector<12x32xf32> -> vector<12x32xf32>
    %492 = vector.broadcast %388 : vector<1x32xf32> to vector<12x32xf32>
    %493 = arith.addf %491, %492 : vector<12x32xf32>
    %494 = arith.addf %376, %493 : vector<12x32xf32>
    %cst_150 = arith.constant dense<0.000000e+00> : vector<12xf32>
    %495 = vector.multi_reduction <add>, %494, %cst_150 [1] : vector<12x32xf32> to vector<12xf32>
    %496 = vector.shape_cast %495 : vector<12xf32> to vector<12x1xf32>
    %cst_151 = arith.constant 3.200000e+01 : f32
    %497 = vector.broadcast %cst_151 : f32 to vector<12x1xf32>
    %498 = arith.divf %496, %497 : vector<12x1xf32>
    %499 = vector.broadcast %498 : vector<12x1xf32> to vector<12x32xf32>
    %500 = arith.subf %494, %499 : vector<12x32xf32>
    %501 = arith.mulf %500, %500 : vector<12x32xf32>
    %cst_152 = arith.constant dense<0.000000e+00> : vector<12xf32>
    %502 = vector.multi_reduction <add>, %501, %cst_152 [1] : vector<12x32xf32> to vector<12xf32>
    %503 = vector.shape_cast %502 : vector<12xf32> to vector<12x1xf32>
    %cst_153 = arith.constant 3.200000e+01 : f32
    %504 = vector.broadcast %cst_153 : f32 to vector<12x1xf32>
    %505 = arith.divf %503, %504 : vector<12x1xf32>
    %506 = vector.broadcast %498 : vector<12x1xf32> to vector<12x32xf32>
    %507 = arith.subf %494, %506 : vector<12x32xf32>
    %cst_154 = arith.constant 9.99999974E-6 : f32
    %508 = vector.broadcast %cst_154 : f32 to vector<12x1xf32>
    %509 = arith.addf %505, %508 : vector<12x1xf32>
    %510 = math.rsqrt %509 : vector<12x1xf32>
    %511 = vector.broadcast %510 : vector<12x1xf32> to vector<12x32xf32>
    %512 = arith.mulf %507, %511 : vector<12x32xf32>
    %513 = vector.broadcast %385 : vector<1x32xf32> to vector<12x32xf32>
    %514 = arith.mulf %512, %513 : vector<12x32xf32>
    %515 = vector.broadcast %386 : vector<1x32xf32> to vector<12x32xf32>
    %516 = arith.addf %514, %515 : vector<12x32xf32>
    %cst_155 = arith.constant dense<0.000000e+00> : vector<12x64xf32>
    %517 = tpu.matmul %516, %393, %cst_155 {dimension_numbers = #tpu.dot_dimension_numbers<[1], [0], [0], [1], [0, 0, 1, 1], [], []>} : vector<12x32xf32>, vector<32x64xf32>, vector<12x64xf32> -> vector<12x64xf32>
    %518 = vector.broadcast %389 : vector<1x64xf32> to vector<12x64xf32>
    %519 = arith.addf %517, %518 : vector<12x64xf32>
    %cst_156 = arith.constant 0.000000e+00 : f32
    %520 = vector.broadcast %cst_156 : f32 to vector<12x64xf32>
    %521 = arith.maximumf %519, %520 : vector<12x64xf32>
    %cst_157 = arith.constant dense<0.000000e+00> : vector<12x32xf32>
    %522 = tpu.matmul %521, %382, %cst_157 {dimension_numbers = #tpu.dot_dimension_numbers<[1], [0], [0], [1], [0, 0, 1, 1], [], []>} : vector<12x64xf32>, vector<64x32xf32>, vector<12x32xf32> -> vector<12x32xf32>
    %523 = vector.broadcast %390 : vector<1x32xf32> to vector<12x32xf32>
    %524 = arith.addf %522, %523 : vector<12x32xf32>
    %525 = arith.addf %494, %524 : vector<12x32xf32>
    %c1_158 = arith.constant 1 : index
    %c0_159 = arith.constant 0 : index
    %c0_160 = arith.constant 0 : index
    %526 = vector.load %arg10[%c1_158, %c0_159, %c0_160] : memref<2x8x96xf32, #tpu.memory_space<vmem>>, vector<1x8x96xf32>
    %527 = vector.shape_cast %526 : vector<1x8x96xf32> to vector<8x96xf32>
    %c1_161 = arith.constant 1 : index
    %c0_162 = arith.constant 0 : index
    %c0_163 = arith.constant 0 : index
    %528 = vector.load %arg11[%c1_161, %c0_162, %c0_163] : memref<2x32x192xf32, #tpu.memory_space<vmem>>, vector<1x32x192xf32>
    %529 = vector.shape_cast %528 : vector<1x32x192xf32> to vector<32x192xf32>
    %c1_164 = arith.constant 1 : index
    %c0_165 = arith.constant 0 : index
    %c0_166 = arith.constant 0 : index
    %530 = vector.load %arg12[%c1_164, %c0_165, %c0_166] : memref<2x64x32xf32, #tpu.memory_space<vmem>>, vector<1x64x32xf32>
    %531 = vector.shape_cast %530 : vector<1x64x32xf32> to vector<64x32xf32>
    %532 = vector.extract_strided_slice %527 {offsets = [0, 0], sizes = [1, 32], strides = [1, 1]} : vector<8x96xf32> to vector<1x32xf32>
    %533 = vector.extract_strided_slice %527 {offsets = [1, 0], sizes = [1, 32], strides = [1, 1]} : vector<8x96xf32> to vector<1x32xf32>
    %534 = vector.extract_strided_slice %527 {offsets = [2, 0], sizes = [1, 32], strides = [1, 1]} : vector<8x96xf32> to vector<1x32xf32>
    %535 = vector.extract_strided_slice %527 {offsets = [3, 0], sizes = [1, 32], strides = [1, 1]} : vector<8x96xf32> to vector<1x32xf32>
    %536 = vector.extract_strided_slice %527 {offsets = [4, 0], sizes = [1, 96], strides = [1, 1]} : vector<8x96xf32> to vector<1x96xf32>
    %537 = vector.extract_strided_slice %527 {offsets = [5, 0], sizes = [1, 32], strides = [1, 1]} : vector<8x96xf32> to vector<1x32xf32>
    %538 = vector.extract_strided_slice %527 {offsets = [6, 0], sizes = [1, 64], strides = [1, 1]} : vector<8x96xf32> to vector<1x64xf32>
    %539 = vector.extract_strided_slice %527 {offsets = [7, 0], sizes = [1, 32], strides = [1, 1]} : vector<8x96xf32> to vector<1x32xf32>
    %540 = vector.extract_strided_slice %529 {offsets = [0, 0], sizes = [32, 96], strides = [1, 1]} : vector<32x192xf32> to vector<32x96xf32>
    %541 = vector.extract_strided_slice %529 {offsets = [0, 96], sizes = [32, 32], strides = [1, 1]} : vector<32x192xf32> to vector<32x32xf32>
    %542 = vector.extract_strided_slice %529 {offsets = [0, 128], sizes = [32, 64], strides = [1, 1]} : vector<32x192xf32> to vector<32x64xf32>
    %cst_167 = arith.constant dense<0.000000e+00> : vector<12xf32>
    %543 = vector.multi_reduction <add>, %525, %cst_167 [1] : vector<12x32xf32> to vector<12xf32>
    %544 = vector.shape_cast %543 : vector<12xf32> to vector<12x1xf32>
    %cst_168 = arith.constant 3.200000e+01 : f32
    %545 = vector.broadcast %cst_168 : f32 to vector<12x1xf32>
    %546 = arith.divf %544, %545 : vector<12x1xf32>
    %547 = vector.broadcast %546 : vector<12x1xf32> to vector<12x32xf32>
    %548 = arith.subf %525, %547 : vector<12x32xf32>
    %549 = arith.mulf %548, %548 : vector<12x32xf32>
    %cst_169 = arith.constant dense<0.000000e+00> : vector<12xf32>
    %550 = vector.multi_reduction <add>, %549, %cst_169 [1] : vector<12x32xf32> to vector<12xf32>
    %551 = vector.shape_cast %550 : vector<12xf32> to vector<12x1xf32>
    %cst_170 = arith.constant 3.200000e+01 : f32
    %552 = vector.broadcast %cst_170 : f32 to vector<12x1xf32>
    %553 = arith.divf %551, %552 : vector<12x1xf32>
    %554 = vector.broadcast %546 : vector<12x1xf32> to vector<12x32xf32>
    %555 = arith.subf %525, %554 : vector<12x32xf32>
    %cst_171 = arith.constant 9.99999974E-6 : f32
    %556 = vector.broadcast %cst_171 : f32 to vector<12x1xf32>
    %557 = arith.addf %553, %556 : vector<12x1xf32>
    %558 = math.rsqrt %557 : vector<12x1xf32>
    %559 = vector.broadcast %558 : vector<12x1xf32> to vector<12x32xf32>
    %560 = arith.mulf %555, %559 : vector<12x32xf32>
    %561 = vector.broadcast %532 : vector<1x32xf32> to vector<12x32xf32>
    %562 = arith.mulf %560, %561 : vector<12x32xf32>
    %563 = vector.broadcast %533 : vector<1x32xf32> to vector<12x32xf32>
    %564 = arith.addf %562, %563 : vector<12x32xf32>
    %cst_172 = arith.constant dense<0.000000e+00> : vector<12x96xf32>
    %565 = tpu.matmul %564, %540, %cst_172 {dimension_numbers = #tpu.dot_dimension_numbers<[1], [0], [0], [1], [0, 0, 1, 1], [], []>} : vector<12x32xf32>, vector<32x96xf32>, vector<12x96xf32> -> vector<12x96xf32>
    %566 = vector.broadcast %536 : vector<1x96xf32> to vector<12x96xf32>
    %567 = arith.addf %565, %566 : vector<12x96xf32>
    %568 = vector.extract_strided_slice %567 {offsets = [0, 0], sizes = [12, 32], strides = [1, 1]} : vector<12x96xf32> to vector<12x32xf32>
    %569 = vector.extract_strided_slice %567 {offsets = [0, 32], sizes = [12, 32], strides = [1, 1]} : vector<12x96xf32> to vector<12x32xf32>
    %570 = vector.extract_strided_slice %567 {offsets = [0, 64], sizes = [12, 32], strides = [1, 1]} : vector<12x96xf32> to vector<12x32xf32>
    %571 = vector.extract_strided_slice %568 {offsets = [0, 0], sizes = [12, 8], strides = [1, 1]} : vector<12x32xf32> to vector<12x8xf32>
    %572 = vector.extract_strided_slice %569 {offsets = [0, 0], sizes = [12, 8], strides = [1, 1]} : vector<12x32xf32> to vector<12x8xf32>
    %cst_173 = arith.constant dense<0.000000e+00> : vector<12x12xf32>
    %573 = tpu.matmul %571, %572, %cst_173 {dimension_numbers = #tpu.dot_dimension_numbers<[1], [1], [0], [0], [0, 0, 1, 0], [], []>} : vector<12x8xf32>, vector<12x8xf32>, vector<12x12xf32> -> vector<12x12xf32>
    %cst_174 = arith.constant 0.353553385 : f32
    %574 = vector.broadcast %cst_174 : f32 to vector<12x12xf32>
    %575 = arith.mulf %573, %574 : vector<12x12xf32>
    %cst_175 = arith.constant dense<0xFF800000> : vector<12xf32>
    %576 = vector.multi_reduction <maximumf>, %575, %cst_175 [1] : vector<12x12xf32> to vector<12xf32>
    %577 = vector.shape_cast %576 : vector<12xf32> to vector<12x1xf32>
    %578 = vector.broadcast %577 : vector<12x1xf32> to vector<12x12xf32>
    %579 = arith.subf %575, %578 : vector<12x12xf32>
    %580 = math.exp %579 : vector<12x12xf32>
    %cst_176 = arith.constant dense<0.000000e+00> : vector<12xf32>
    %581 = vector.multi_reduction <add>, %580, %cst_176 [1] : vector<12x12xf32> to vector<12xf32>
    %582 = vector.shape_cast %581 : vector<12xf32> to vector<12x1xf32>
    %583 = tpu.reciprocal %582 {approx = true} : vector<12x1xf32> -> vector<12x1xf32>
    %584 = vector.broadcast %583 : vector<12x1xf32> to vector<12x12xf32>
    %585 = arith.mulf %580, %584 : vector<12x12xf32>
    %586 = vector.extract_strided_slice %570 {offsets = [0, 0], sizes = [12, 8], strides = [1, 1]} : vector<12x32xf32> to vector<12x8xf32>
    %cst_177 = arith.constant dense<0.000000e+00> : vector<12x8xf32>
    %587 = tpu.matmul %585, %586, %cst_177 {dimension_numbers = #tpu.dot_dimension_numbers<[1], [0], [0], [1], [0, 0, 1, 1], [], []>} : vector<12x12xf32>, vector<12x8xf32>, vector<12x8xf32> -> vector<12x8xf32>
    %588 = vector.extract_strided_slice %568 {offsets = [0, 8], sizes = [12, 8], strides = [1, 1]} : vector<12x32xf32> to vector<12x8xf32>
    %589 = vector.extract_strided_slice %569 {offsets = [0, 8], sizes = [12, 8], strides = [1, 1]} : vector<12x32xf32> to vector<12x8xf32>
    %cst_178 = arith.constant dense<0.000000e+00> : vector<12x12xf32>
    %590 = tpu.matmul %588, %589, %cst_178 {dimension_numbers = #tpu.dot_dimension_numbers<[1], [1], [0], [0], [0, 0, 1, 0], [], []>} : vector<12x8xf32>, vector<12x8xf32>, vector<12x12xf32> -> vector<12x12xf32>
    %cst_179 = arith.constant 0.353553385 : f32
    %591 = vector.broadcast %cst_179 : f32 to vector<12x12xf32>
    %592 = arith.mulf %590, %591 : vector<12x12xf32>
    %cst_180 = arith.constant dense<0xFF800000> : vector<12xf32>
    %593 = vector.multi_reduction <maximumf>, %592, %cst_180 [1] : vector<12x12xf32> to vector<12xf32>
    %594 = vector.shape_cast %593 : vector<12xf32> to vector<12x1xf32>
    %595 = vector.broadcast %594 : vector<12x1xf32> to vector<12x12xf32>
    %596 = arith.subf %592, %595 : vector<12x12xf32>
    %597 = math.exp %596 : vector<12x12xf32>
    %cst_181 = arith.constant dense<0.000000e+00> : vector<12xf32>
    %598 = vector.multi_reduction <add>, %597, %cst_181 [1] : vector<12x12xf32> to vector<12xf32>
    %599 = vector.shape_cast %598 : vector<12xf32> to vector<12x1xf32>
    %600 = tpu.reciprocal %599 {approx = true} : vector<12x1xf32> -> vector<12x1xf32>
    %601 = vector.broadcast %600 : vector<12x1xf32> to vector<12x12xf32>
    %602 = arith.mulf %597, %601 : vector<12x12xf32>
    %603 = vector.extract_strided_slice %570 {offsets = [0, 8], sizes = [12, 8], strides = [1, 1]} : vector<12x32xf32> to vector<12x8xf32>
    %cst_182 = arith.constant dense<0.000000e+00> : vector<12x8xf32>
    %604 = tpu.matmul %602, %603, %cst_182 {dimension_numbers = #tpu.dot_dimension_numbers<[1], [0], [0], [1], [0, 0, 1, 1], [], []>} : vector<12x12xf32>, vector<12x8xf32>, vector<12x8xf32> -> vector<12x8xf32>
    %605 = vector.extract_strided_slice %568 {offsets = [0, 16], sizes = [12, 8], strides = [1, 1]} : vector<12x32xf32> to vector<12x8xf32>
    %606 = vector.extract_strided_slice %569 {offsets = [0, 16], sizes = [12, 8], strides = [1, 1]} : vector<12x32xf32> to vector<12x8xf32>
    %cst_183 = arith.constant dense<0.000000e+00> : vector<12x12xf32>
    %607 = tpu.matmul %605, %606, %cst_183 {dimension_numbers = #tpu.dot_dimension_numbers<[1], [1], [0], [0], [0, 0, 1, 0], [], []>} : vector<12x8xf32>, vector<12x8xf32>, vector<12x12xf32> -> vector<12x12xf32>
    %cst_184 = arith.constant 0.353553385 : f32
    %608 = vector.broadcast %cst_184 : f32 to vector<12x12xf32>
    %609 = arith.mulf %607, %608 : vector<12x12xf32>
    %cst_185 = arith.constant dense<0xFF800000> : vector<12xf32>
    %610 = vector.multi_reduction <maximumf>, %609, %cst_185 [1] : vector<12x12xf32> to vector<12xf32>
    %611 = vector.shape_cast %610 : vector<12xf32> to vector<12x1xf32>
    %612 = vector.broadcast %611 : vector<12x1xf32> to vector<12x12xf32>
    %613 = arith.subf %609, %612 : vector<12x12xf32>
    %614 = math.exp %613 : vector<12x12xf32>
    %cst_186 = arith.constant dense<0.000000e+00> : vector<12xf32>
    %615 = vector.multi_reduction <add>, %614, %cst_186 [1] : vector<12x12xf32> to vector<12xf32>
    %616 = vector.shape_cast %615 : vector<12xf32> to vector<12x1xf32>
    %617 = tpu.reciprocal %616 {approx = true} : vector<12x1xf32> -> vector<12x1xf32>
    %618 = vector.broadcast %617 : vector<12x1xf32> to vector<12x12xf32>
    %619 = arith.mulf %614, %618 : vector<12x12xf32>
    %620 = vector.extract_strided_slice %570 {offsets = [0, 16], sizes = [12, 8], strides = [1, 1]} : vector<12x32xf32> to vector<12x8xf32>
    %cst_187 = arith.constant dense<0.000000e+00> : vector<12x8xf32>
    %621 = tpu.matmul %619, %620, %cst_187 {dimension_numbers = #tpu.dot_dimension_numbers<[1], [0], [0], [1], [0, 0, 1, 1], [], []>} : vector<12x12xf32>, vector<12x8xf32>, vector<12x8xf32> -> vector<12x8xf32>
    %622 = vector.extract_strided_slice %568 {offsets = [0, 24], sizes = [12, 8], strides = [1, 1]} : vector<12x32xf32> to vector<12x8xf32>
    %623 = vector.extract_strided_slice %569 {offsets = [0, 24], sizes = [12, 8], strides = [1, 1]} : vector<12x32xf32> to vector<12x8xf32>
    %cst_188 = arith.constant dense<0.000000e+00> : vector<12x12xf32>
    %624 = tpu.matmul %622, %623, %cst_188 {dimension_numbers = #tpu.dot_dimension_numbers<[1], [1], [0], [0], [0, 0, 1, 0], [], []>} : vector<12x8xf32>, vector<12x8xf32>, vector<12x12xf32> -> vector<12x12xf32>
    %cst_189 = arith.constant 0.353553385 : f32
    %625 = vector.broadcast %cst_189 : f32 to vector<12x12xf32>
    %626 = arith.mulf %624, %625 : vector<12x12xf32>
    %cst_190 = arith.constant dense<0xFF800000> : vector<12xf32>
    %627 = vector.multi_reduction <maximumf>, %626, %cst_190 [1] : vector<12x12xf32> to vector<12xf32>
    %628 = vector.shape_cast %627 : vector<12xf32> to vector<12x1xf32>
    %629 = vector.broadcast %628 : vector<12x1xf32> to vector<12x12xf32>
    %630 = arith.subf %626, %629 : vector<12x12xf32>
    %631 = math.exp %630 : vector<12x12xf32>
    %cst_191 = arith.constant dense<0.000000e+00> : vector<12xf32>
    %632 = vector.multi_reduction <add>, %631, %cst_191 [1] : vector<12x12xf32> to vector<12xf32>
    %633 = vector.shape_cast %632 : vector<12xf32> to vector<12x1xf32>
    %634 = tpu.reciprocal %633 {approx = true} : vector<12x1xf32> -> vector<12x1xf32>
    %635 = vector.broadcast %634 : vector<12x1xf32> to vector<12x12xf32>
    %636 = arith.mulf %631, %635 : vector<12x12xf32>
    %637 = vector.extract_strided_slice %570 {offsets = [0, 24], sizes = [12, 8], strides = [1, 1]} : vector<12x32xf32> to vector<12x8xf32>
    %cst_192 = arith.constant dense<0.000000e+00> : vector<12x8xf32>
    %638 = tpu.matmul %636, %637, %cst_192 {dimension_numbers = #tpu.dot_dimension_numbers<[1], [0], [0], [1], [0, 0, 1, 1], [], []>} : vector<12x12xf32>, vector<12x8xf32>, vector<12x8xf32> -> vector<12x8xf32>
    %639 = tpu.concatenate %587, %604, %621, %638 in 1 : vector<12x8xf32>, vector<12x8xf32>, vector<12x8xf32>, vector<12x8xf32> -> vector<12x32xf32>
    %cst_193 = arith.constant dense<0.000000e+00> : vector<12x32xf32>
    %640 = tpu.matmul %639, %541, %cst_193 {dimension_numbers = #tpu.dot_dimension_numbers<[1], [0], [0], [1], [0, 0, 1, 1], [], []>} : vector<12x32xf32>, vector<32x32xf32>, vector<12x32xf32> -> vector<12x32xf32>
    %641 = vector.broadcast %537 : vector<1x32xf32> to vector<12x32xf32>
    %642 = arith.addf %640, %641 : vector<12x32xf32>
    %643 = arith.addf %525, %642 : vector<12x32xf32>
    %cst_194 = arith.constant dense<0.000000e+00> : vector<12xf32>
    %644 = vector.multi_reduction <add>, %643, %cst_194 [1] : vector<12x32xf32> to vector<12xf32>
    %645 = vector.shape_cast %644 : vector<12xf32> to vector<12x1xf32>
    %cst_195 = arith.constant 3.200000e+01 : f32
    %646 = vector.broadcast %cst_195 : f32 to vector<12x1xf32>
    %647 = arith.divf %645, %646 : vector<12x1xf32>
    %648 = vector.broadcast %647 : vector<12x1xf32> to vector<12x32xf32>
    %649 = arith.subf %643, %648 : vector<12x32xf32>
    %650 = arith.mulf %649, %649 : vector<12x32xf32>
    %cst_196 = arith.constant dense<0.000000e+00> : vector<12xf32>
    %651 = vector.multi_reduction <add>, %650, %cst_196 [1] : vector<12x32xf32> to vector<12xf32>
    %652 = vector.shape_cast %651 : vector<12xf32> to vector<12x1xf32>
    %cst_197 = arith.constant 3.200000e+01 : f32
    %653 = vector.broadcast %cst_197 : f32 to vector<12x1xf32>
    %654 = arith.divf %652, %653 : vector<12x1xf32>
    %655 = vector.broadcast %647 : vector<12x1xf32> to vector<12x32xf32>
    %656 = arith.subf %643, %655 : vector<12x32xf32>
    %cst_198 = arith.constant 9.99999974E-6 : f32
    %657 = vector.broadcast %cst_198 : f32 to vector<12x1xf32>
    %658 = arith.addf %654, %657 : vector<12x1xf32>
    %659 = math.rsqrt %658 : vector<12x1xf32>
    %660 = vector.broadcast %659 : vector<12x1xf32> to vector<12x32xf32>
    %661 = arith.mulf %656, %660 : vector<12x32xf32>
    %662 = vector.broadcast %534 : vector<1x32xf32> to vector<12x32xf32>
    %663 = arith.mulf %661, %662 : vector<12x32xf32>
    %664 = vector.broadcast %535 : vector<1x32xf32> to vector<12x32xf32>
    %665 = arith.addf %663, %664 : vector<12x32xf32>
    %cst_199 = arith.constant dense<0.000000e+00> : vector<12x64xf32>
    %666 = tpu.matmul %665, %542, %cst_199 {dimension_numbers = #tpu.dot_dimension_numbers<[1], [0], [0], [1], [0, 0, 1, 1], [], []>} : vector<12x32xf32>, vector<32x64xf32>, vector<12x64xf32> -> vector<12x64xf32>
    %667 = vector.broadcast %538 : vector<1x64xf32> to vector<12x64xf32>
    %668 = arith.addf %666, %667 : vector<12x64xf32>
    %cst_200 = arith.constant 0.000000e+00 : f32
    %669 = vector.broadcast %cst_200 : f32 to vector<12x64xf32>
    %670 = arith.maximumf %668, %669 : vector<12x64xf32>
    %cst_201 = arith.constant dense<0.000000e+00> : vector<12x32xf32>
    %671 = tpu.matmul %670, %531, %cst_201 {dimension_numbers = #tpu.dot_dimension_numbers<[1], [0], [0], [1], [0, 0, 1, 1], [], []>} : vector<12x64xf32>, vector<64x32xf32>, vector<12x32xf32> -> vector<12x32xf32>
    %672 = vector.broadcast %539 : vector<1x32xf32> to vector<12x32xf32>
    %673 = arith.addf %671, %672 : vector<12x32xf32>
    %674 = arith.addf %643, %673 : vector<12x32xf32>
    %cst_202 = arith.constant dense<0.000000e+00> : vector<12xf32>
    %675 = vector.multi_reduction <add>, %674, %cst_202 [1] : vector<12x32xf32> to vector<12xf32>
    %676 = vector.shape_cast %675 : vector<12xf32> to vector<12x1xf32>
    %cst_203 = arith.constant 3.200000e+01 : f32
    %677 = vector.broadcast %cst_203 : f32 to vector<12x1xf32>
    %678 = arith.divf %676, %677 : vector<12x1xf32>
    %679 = vector.broadcast %678 : vector<12x1xf32> to vector<12x32xf32>
    %680 = arith.subf %674, %679 : vector<12x32xf32>
    %681 = arith.mulf %680, %680 : vector<12x32xf32>
    %cst_204 = arith.constant dense<0.000000e+00> : vector<12xf32>
    %682 = vector.multi_reduction <add>, %681, %cst_204 [1] : vector<12x32xf32> to vector<12xf32>
    %683 = vector.shape_cast %682 : vector<12xf32> to vector<12x1xf32>
    %cst_205 = arith.constant 3.200000e+01 : f32
    %684 = vector.broadcast %cst_205 : f32 to vector<12x1xf32>
    %685 = arith.divf %683, %684 : vector<12x1xf32>
    %686 = vector.broadcast %678 : vector<12x1xf32> to vector<12x32xf32>
    %687 = arith.subf %674, %686 : vector<12x32xf32>
    %cst_206 = arith.constant 9.99999974E-6 : f32
    %688 = vector.broadcast %cst_206 : f32 to vector<12x1xf32>
    %689 = arith.addf %685, %688 : vector<12x1xf32>
    %690 = math.rsqrt %689 : vector<12x1xf32>
    %691 = vector.broadcast %690 : vector<12x1xf32> to vector<12x32xf32>
    %692 = arith.mulf %687, %691 : vector<12x32xf32>
    %693 = vector.broadcast %7 : vector<1x32xf32> to vector<12x32xf32>
    %694 = arith.mulf %692, %693 : vector<12x32xf32>
    %695 = vector.broadcast %8 : vector<1x32xf32> to vector<12x32xf32>
    %696 = arith.addf %694, %695 : vector<12x32xf32>
    %697 = vector.extract_strided_slice %696 {offsets = [4, 0], sizes = [8, 32], strides = [1, 1]} : vector<12x32xf32> to vector<8x32xf32>
    %cst_207 = arith.constant dense<0.000000e+00> : vector<8x11xf32>
    %698 = tpu.matmul %697, %12, %cst_207 {dimension_numbers = #tpu.dot_dimension_numbers<[1], [0], [0], [1], [0, 0, 1, 1], [], []>} : vector<8x32xf32>, vector<32x11xf32>, vector<8x11xf32> -> vector<8x11xf32>
    %699 = vector.broadcast %9 : vector<1x11xf32> to vector<8x11xf32>
    %700 = arith.addf %698, %699 : vector<8x11xf32>
    %701 = vector.extract_strided_slice %700 {offsets = [0, 0], sizes = [8, 1], strides = [1, 1]} : vector<8x11xf32> to vector<8x1xf32>
    %702 = vector.extract_strided_slice %700 {offsets = [0, 1], sizes = [8, 10], strides = [1, 1]} : vector<8x11xf32> to vector<8x10xf32>
    %cst_208 = arith.constant dense<0xFF800000> : vector<8xf32>
    %703 = vector.multi_reduction <maximumf>, %702, %cst_208 [1] : vector<8x10xf32> to vector<8xf32>
    %704 = vector.shape_cast %703 : vector<8xf32> to vector<8x1xf32>
    %705 = vector.broadcast %704 : vector<8x1xf32> to vector<8x10xf32>
    %706 = arith.subf %702, %705 : vector<8x10xf32>
    %707 = math.exp %706 : vector<8x10xf32>
    %cst_209 = arith.constant dense<0.000000e+00> : vector<8xf32>
    %708 = vector.multi_reduction <add>, %707, %cst_209 [1] : vector<8x10xf32> to vector<8xf32>
    %709 = vector.shape_cast %708 : vector<8xf32> to vector<8x1xf32>
    %cst_210 = arith.constant 1.000000e+00 : f32
    %710 = vector.broadcast %cst_210 : f32 to vector<8x1xf32>
    %711 = arith.divf %710, %709 : vector<8x1xf32>
    %712 = tpu.iota {dimensions = array<i32: 1>} : vector<8x10xi32>
    %713 = vector.broadcast %704 : vector<8x1xf32> to vector<8x10xf32>
    %714 = arith.cmpf oge, %702, %713 : vector<8x10xf32>
    %c10_i32 = arith.constant 10 : i32
    %715 = vector.broadcast %c10_i32 : i32 to vector<8x10xi32>
    %716 = arith.select %714, %712, %715 : vector<8x10xi1>, vector<8x10xi32>
    %cst_211 = arith.constant dense<2147483647> : vector<8xi32>
    %717 = vector.multi_reduction <minsi>, %716, %cst_211 [1] : vector<8x10xi32> to vector<8xi32>
    %718 = vector.shape_cast %717 : vector<8xi32> to vector<8x1xi32>
    %cst_212 = arith.constant dense<0.000000e+00> : vector<8x32xf32>
    %719 = tpu.matmul %697, %13, %cst_212 {dimension_numbers = #tpu.dot_dimension_numbers<[1], [0], [0], [1], [0, 0, 1, 1], [], []>} : vector<8x32xf32>, vector<32x32xf32>, vector<8x32xf32> -> vector<8x32xf32>
    %720 = vector.broadcast %10 : vector<1x32xf32> to vector<8x32xf32>
    %721 = arith.addf %719, %720 : vector<8x32xf32>
    %cst_213 = arith.constant 0.000000e+00 : f32
    %722 = vector.broadcast %cst_213 : f32 to vector<8x32xf32>
    %723 = arith.maximumf %721, %722 : vector<8x32xf32>
    %cst_214 = arith.constant dense<0.000000e+00> : vector<8x1xf32>
    %724 = tpu.matmul %723, %14, %cst_214 {dimension_numbers = #tpu.dot_dimension_numbers<[1], [0], [0], [1], [0, 0, 1, 1], [], []>} : vector<8x32xf32>, vector<32x1xf32>, vector<8x1xf32> -> vector<8x1xf32>
    %725 = vector.broadcast %11 : vector<1x1xf32> to vector<8x1xf32>
    %726 = arith.addf %724, %725 : vector<8x1xf32>
    %cst_215 = arith.constant 0.000000e+00 : f32
    %727 = vector.broadcast %cst_215 : f32 to vector<8x1xf32>
    %728 = arith.maximumf %726, %727 : vector<8x1xf32>
    %729 = math.absf %726 : vector<8x1xf32>
    %cst_216 = arith.constant 0.000000e+00 : f32
    %730 = vector.broadcast %cst_216 : f32 to vector<8x1xf32>
    %731 = arith.subf %730, %729 : vector<8x1xf32>
    %732 = math.exp %731 : vector<8x1xf32>
    %cst_217 = arith.constant 1.000000e+00 : f32
    %733 = vector.broadcast %cst_217 : f32 to vector<8x1xf32>
    %734 = arith.addf %733, %732 : vector<8x1xf32>
    %735 = math.log %734 : vector<8x1xf32>
    %736 = arith.addf %728, %735 : vector<8x1xf32>
    %c0_218 = arith.constant 0 : index
    %c0_219 = arith.constant 0 : index
    %c0_220 = arith.constant 0 : index
    %737 = vector.load %arg4[%c0_218, %c0_219, %c0_220] : memref<1x8x1xf32, #tpu.memory_space<vmem>>, vector<1x8x1xf32>
    %738 = vector.shape_cast %737 : vector<1x8x1xf32> to vector<8x1xf32>
    %739 = arith.mulf %711, %738 : vector<8x1xf32>
    %740 = arith.sitofp %718 : vector<8x1xi32> to vector<8x1xf32>
    %cst_221 = arith.constant 0.000000e+00 : f32
    %741 = vector.broadcast %cst_221 : f32 to vector<8x3xf32>
    %742 = tpu.concatenate %701, %711, %740, %736, %739, %741 in 1 : vector<8x1xf32>, vector<8x1xf32>, vector<8x1xf32>, vector<8x1xf32>, vector<8x1xf32>, vector<8x3xf32> -> vector<8x8xf32>
    %c0_222 = arith.constant 0 : index
    %c0_223 = arith.constant 0 : index
    %c0_224 = arith.constant 0 : index
    %743 = vector.load %arg14[%c0_222, %c0_223, %c0_224] : memref<1x8x8xf32, #tpu.memory_space<vmem>>, vector<1x8x8xf32>
    %744 = vector.shape_cast %743 : vector<1x8x8xf32> to vector<8x8xf32>
    %745 = vector.shape_cast %742 : vector<8x8xf32> to vector<1x8x8xf32>
    tpu.vector_store %arg14[%c0_222, %c0_223, %c0_224], %745 {strides = array<i32>} : memref<1x8x8xf32, #tpu.memory_space<vmem>>, vector<1x8x8xf32>,
    return
  }
  func.func @transform_0(%arg0: i32) -> (i32, i32, i32) {
    %c0_i32 = arith.constant 0 : i32
    %c0_i32_0 = arith.constant 0 : i32
    %c0_i32_1 = arith.constant 0 : i32
    return %arg0, %c0_i32, %c0_i32_0 : i32, i32, i32
  }
  func.func @transform_1(%arg0: i32) -> (i32, i32, i32) {
    %c0_i32 = arith.constant 0 : i32
    %c0_i32_0 = arith.constant 0 : i32
    %c0_i32_1 = arith.constant 0 : i32
    return %arg0, %c0_i32, %c0_i32_0 : i32, i32, i32
  }
  func.func @transform_2(%arg0: i32) -> (i32, i32, i32) {
    %c0_i32 = arith.constant 0 : i32
    %c0_i32_0 = arith.constant 0 : i32
    %c0_i32_1 = arith.constant 0 : i32
    return %arg0, %c0_i32, %c0_i32_0 : i32, i32, i32
  }
  func.func @transform_3(%arg0: i32) -> (i32, i32, i32) {
    %c0_i32 = arith.constant 0 : i32
    %c0_i32_0 = arith.constant 0 : i32
    %c0_i32_1 = arith.constant 0 : i32
    return %arg0, %c0_i32, %c0_i32_0 : i32, i32, i32
  }
  func.func @transform_4(%arg0: i32) -> (i32, i32) {
    %c0_i32 = arith.constant 0 : i32
    %c0_i32_0 = arith.constant 0 : i32
    %c0_i32_1 = arith.constant 0 : i32
    return %c0_i32, %c0_i32_0 : i32, i32
  }
  func.func @transform_5(%arg0: i32) -> (i32, i32) {
    %c0_i32 = arith.constant 0 : i32
    %c0_i32_0 = arith.constant 0 : i32
    %c0_i32_1 = arith.constant 0 : i32
    return %c0_i32, %c0_i32_0 : i32, i32
  }
  func.func @transform_6(%arg0: i32) -> (i32, i32, i32) {
    %c0_i32 = arith.constant 0 : i32
    %c0_i32_0 = arith.constant 0 : i32
    %c0_i32_1 = arith.constant 0 : i32
    %c0_i32_2 = arith.constant 0 : i32
    return %c0_i32, %c0_i32_0, %c0_i32_1 : i32, i32, i32
  }
  func.func @transform_7(%arg0: i32) -> (i32, i32, i32) {
    %c0_i32 = arith.constant 0 : i32
    %c0_i32_0 = arith.constant 0 : i32
    %c0_i32_1 = arith.constant 0 : i32
    %c0_i32_2 = arith.constant 0 : i32
    return %c0_i32, %c0_i32_0, %c0_i32_1 : i32, i32, i32
  }
  func.func @transform_8(%arg0: i32) -> (i32, i32, i32) {
    %c0_i32 = arith.constant 0 : i32
    %c0_i32_0 = arith.constant 0 : i32
    %c0_i32_1 = arith.constant 0 : i32
    %c0_i32_2 = arith.constant 0 : i32
    return %c0_i32, %c0_i32_0, %c0_i32_1 : i32, i32, i32
  }
  func.func @transform_9(%arg0: i32) -> (i32, i32, i32) {
    %c0_i32 = arith.constant 0 : i32
    %c0_i32_0 = arith.constant 0 : i32
    %c0_i32_1 = arith.constant 0 : i32
    %c0_i32_2 = arith.constant 0 : i32
    return %c0_i32, %c0_i32_0, %c0_i32_1 : i32, i32, i32
  }
  func.func @transform_10(%arg0: i32) -> (i32, i32, i32) {
    %c0_i32 = arith.constant 0 : i32
    %c0_i32_0 = arith.constant 0 : i32
    %c0_i32_1 = arith.constant 0 : i32
    %c0_i32_2 = arith.constant 0 : i32
    return %c0_i32, %c0_i32_0, %c0_i32_1 : i32, i32, i32
  }
  func.func @transform_11(%arg0: i32) -> (i32, i32, i32) {
    %c0_i32 = arith.constant 0 : i32
    %c0_i32_0 = arith.constant 0 : i32
    %c0_i32_1 = arith.constant 0 : i32
    %c0_i32_2 = arith.constant 0 : i32
    return %c0_i32, %c0_i32_0, %c0_i32_1 : i32, i32, i32
  }
  func.func @transform_12(%arg0: i32) -> (i32, i32) {
    %c0_i32 = arith.constant 0 : i32
    %c0_i32_0 = arith.constant 0 : i32
    %c0_i32_1 = arith.constant 0 : i32
    return %c0_i32, %c0_i32_0 : i32, i32
  }
  func.func @transform_13(%arg0: i32) -> (i32, i32, i32) {
    %c0_i32 = arith.constant 0 : i32
    %c0_i32_0 = arith.constant 0 : i32
    %c0_i32_1 = arith.constant 0 : i32
    return %arg0, %c0_i32, %c0_i32_0 : i32, i32, i32
  }
}

</mosaic_0001>

<llo_original>
// kernel: soia_dod_forward.1
$region0: #{soia_dod_forward.1}
  #allocation0 [shape = 'u32[]', space=smem, size = 0x4, offset = 0x4, fixed_abs, tag = 'smem constant byte address 0x4 - core index']
  #allocation1 [shape = 'u32[72,128]{1,0:T(1,128)}', space=vmem, size = 0x9000, scoped, tag = 'internal scratch']
  %s0 = inlined_call_operand.vmem [shape: f32[2,4,192], index: 0, kind: input, shape index: {}]
  %s1 = inlined_call_operand.vmem [shape: f32[2,8,4], index: 1, kind: input, shape index: {}]
  %s2 = inlined_call_operand.vmem [shape: f32[2,8,32], index: 2, kind: input, shape index: {}]
  %s3 = inlined_call_operand.vmem [shape: f32[2,8,1], index: 3, kind: input, shape index: {}]
  %s4 = inlined_call_operand.vmem [shape: f32[192,48], index: 4, kind: input, shape index: {}]
  %s5 = inlined_call_operand.vmem [shape: f32[8,48], index: 5, kind: input, shape index: {}]
  %s6 = inlined_call_operand.vmem [shape: f32[2,8,192], index: 6, kind: input, shape index: {}]
  %s7 = inlined_call_operand.vmem [shape: f32[2,48,384], index: 7, kind: input, shape index: {}]
  %s8 = inlined_call_operand.vmem [shape: f32[2,192,48], index: 8, kind: input, shape index: {}]
  %s9 = inlined_call_operand.vmem [shape: f32[2,8,96], index: 9, kind: input, shape index: {}]
  %s10 = inlined_call_operand.vmem [shape: f32[2,32,192], index: 10, kind: input, shape index: {}]
  %s11 = inlined_call_operand.vmem [shape: f32[2,64,32], index: 11, kind: input, shape index: {}]
  %s12 = inlined_call_operand.vmem [shape: f32[192,32], index: 12, kind: input, shape index: {}]
  %s13 = inlined_call_operand.vmem [shape: f32[2,8,8], index: 13, kind: output, shape index: {}]
  %s14 = sld [smem:[#allocation0]]
  $region85: #{soia_dod_forward.1} parent=0
    _
  %s16 = ssub.s32 1, %s14
  %s17 = scalar_select 0, %s16, %s14
  loop: start=0, step=1, limit=4
  $region2: #{soia_dod_forward.1} parent=0 // loop_pre_header
    _
  $region3: #{soia_dod_forward.1} parent=0 // loop_header
    %s19 = sphi 0, %s23
    %p20 = scmp.ge.s32.totalorder %s19, 4
    %s29 = sphi 0, %s31
    %s32 = sphi 0, %s29
    %s33 = sphi 0, %s32
    %s49 = sphi 0, %s33
    %s55 = sphi 0, %s57
    %s58 = sphi 0, %s55
    %s59 = sphi 0, %s58
    %s75 = sphi 0, %s59
    %s81 = sphi 0, %s83
    %s84 = sphi 0, %s81
    %s85 = sphi 0, %s84
    %s101 = sphi 0, %s85
    %s107 = sphi 0, %s109
    %s110 = sphi 0, %s107
    %s111 = sphi 0, %s110
    %s127 = sphi 0, %s111
    %s131 = sphi 0, %s131
    %s133 = sphi 0, %s131
    %s134 = sphi 0, %s133
    %s148 = sphi 0, %s134
    %s152 = sphi 0, %s152
    %s154 = sphi 0, %s152
    %s155 = sphi 0, %s154
    %s169 = sphi 0, %s155
    %s173 = sphi 0, %s173
    %s175 = sphi 0, %s173
    %s176 = sphi 0, %s175
    %s190 = sphi 0, %s176
    %s194 = sphi 0, %s194
    %s196 = sphi 0, %s194
    %s197 = sphi 0, %s196
    %s211 = sphi 0, %s197
    %s215 = sphi 0, %s215
    %s217 = sphi 0, %s215
    %s218 = sphi 0, %s217
    %s232 = sphi 0, %s218
    %s236 = sphi 0, %s236
    %s238 = sphi 0, %s236
    %s239 = sphi 0, %s238
    %s253 = sphi 0, %s239
    %s257 = sphi 0, %s257
    %s259 = sphi 0, %s257
    %s260 = sphi 0, %s259
    %s274 = sphi 0, %s260
    %s278 = sphi 0, %s278
    %s280 = sphi 0, %s278
    %s281 = sphi 0, %s280
    %s295 = sphi 0, %s281
    %s299 = sphi 0, %s299
    %s301 = sphi 0, %s299
    %s302 = sphi 0, %s301
    %s316 = sphi 0, %s302
    %s322 = sphi 0, %s324
    %s325 = sphi 0, %s322
    %s326 = sphi 0, %s325
    %s342 = sphi 0, %s326
  $region4: #{soia_dod_forward.1} parent=0 // loop_header_branch
    %22 = sbr.rel (%p20) target = $region8
  $region5: #{soia_dod_forward.1} parent=0 // loop_body
    %s24 = ssub.s32 %s19, 1
    %s25 = ssub.s32 %s19, 2
    %s26 = sadd.s32 %s19, 1
    %s27 = ssub.s32 %s19, %s26
    %p28 = scmp.eq.s32.totalorder %s27, 0
    %s30 = sadd.s32 %s29, 1
    %s31 = scalar_select %p28, %s29, %s30
    %p34 = pneg %p28
    %p35 = scmp.eq.s32.totalorder %s19, 1
    %p36 = por %p34, %p35
    %p37 = scmp.ne.s32.totalorder %s29, %s32
    %p38 = scmp.eq.s32.totalorder %s19, 0
    %p39 = por %p37, %p38
    %p40 = scmp.ne.s32.totalorder %s29, %s32
    %p41 = scmp.eq.s32.totalorder %s24, 1
    %p42 = por %p40, %p41
    %p43 = scmp.ne.s32.totalorder %s32, %s33
    %p44 = scmp.eq.s32.totalorder %s24, 0
    %p45 = por %p43, %p44
    %p46 = scmp.ne.s32.totalorder %s32, %s33
    %p47 = scmp.eq.s32.totalorder %s25, 1
    %p48 = por %p46, %p47
    %p50 = scmp.ne.s32.totalorder %s33, %s49
    %p51 = scmp.eq.s32.totalorder %s25, 0
    %p52 = por %p50, %p51
    %s53 = ssub.s32 %s19, %s26
    %p54 = scmp.eq.s32.totalorder %s53, 0
    %s56 = sadd.s32 %s55, 1
    %s57 = scalar_select %p54, %s55, %s56
    %p60 = pneg %p54
    %p61 = scmp.eq.s32.totalorder %s19, 1
    %p62 = por %p60, %p61
    %p63 = scmp.ne.s32.totalorder %s55, %s58
    %p64 = scmp.eq.s32.totalorder %s19, 0
    %p65 = por %p63, %p64
    %p66 = scmp.ne.s32.totalorder %s55, %s58
    %p67 = scmp.eq.s32.totalorder %s24, 1
    %p68 = por %p66, %p67
    %p69 = scmp.ne.s32.totalorder %s58, %s59
    %p70 = scmp.eq.s32.totalorder %s24, 0
    %p71 = por %p69, %p70
    %p72 = scmp.ne.s32.totalorder %s58, %s59
    %p73 = scmp.eq.s32.totalorder %s25, 1
    %p74 = por %p72, %p73
    %p76 = scmp.ne.s32.totalorder %s59, %s75
    %p77 = scmp.eq.s32.totalorder %s25, 0
    %p78 = por %p76, %p77
    %s79 = ssub.s32 %s19, %s26
    %p80 = scmp.eq.s32.totalorder %s79, 0
    %s82 = sadd.s32 %s81, 1
    %s83 = scalar_select %p80, %s81, %s82
    %p86 = pneg %p80
    %p87 = scmp.eq.s32.totalorder %s19, 1
    %p88 = por %p86, %p87
    %p89 = scmp.ne.s32.totalorder %s81, %s84
    %p90 = scmp.eq.s32.totalorder %s19, 0
    %p91 = por %p89, %p90
    %p92 = scmp.ne.s32.totalorder %s81, %s84
    %p93 = scmp.eq.s32.totalorder %s24, 1
    %p94 = por %p92, %p93
    %p95 = scmp.ne.s32.totalorder %s84, %s85
    %p96 = scmp.eq.s32.totalorder %s24, 0
    %p97 = por %p95, %p96
    %p98 = scmp.ne.s32.totalorder %s84, %s85
    %p99 = scmp.eq.s32.totalorder %s25, 1
    %p100 = por %p98, %p99
    %p102 = scmp.ne.s32.totalorder %s85, %s101
    %p103 = scmp.eq.s32.totalorder %s25, 0
    %p104 = por %p102, %p103
    %s105 = ssub.s32 %s19, %s26
    %p106 = scmp.eq.s32.totalorder %s105, 0
    %s108 = sadd.s32 %s107, 1
    %s109 = scalar_select %p106, %s107, %s108
    %p112 = pneg %p106
    %p113 = scmp.eq.s32.totalorder %s19, 1
    %p114 = por %p112, %p113
    %p115 = scmp.ne.s32.totalorder %s107, %s110
    %p116 = scmp.eq.s32.totalorder %s19, 0
    %p117 = por %p115, %p116
    %p118 = scmp.ne.s32.totalorder %s107, %s110
    %p119 = scmp.eq.s32.totalorder %s24, 1
    %p120 = por %p118, %p119
    %p121 = scmp.ne.s32.totalorder %s110, %s111
    %p122 = scmp.eq.s32.totalorder %s24, 0
    %p123 = por %p121, %p122
    %p124 = scmp.ne.s32.totalorder %s110, %s111
    %p125 = scmp.eq.s32.totalorder %s25, 1
    %p126 = por %p124, %p125
    %p128 = scmp.ne.s32.totalorder %s111, %s127
    %p129 = scmp.eq.s32.totalorder %s25, 0
    %p130 = por %p128, %p129
    %s132 = sadd.s32 %s131, 1
    %p135 = scmp.eq.s32.totalorder %s19, 1
    %p136 = scmp.ne.s32.totalorder %s131, %s133
    %p137 = scmp.eq.s32.totalorder %s19, 0
    %p138 = por %p136, %p137
    %p139 = scmp.ne.s32.totalorder %s131, %s133
    %p140 = scmp.eq.s32.totalorder %s24, 1
    %p141 = por %p139, %p140
    %p142 = scmp.ne.s32.totalorder %s133, %s134
    %p143 = scmp.eq.s32.totalorder %s24, 0
    %p144 = por %p142, %p143
    %p145 = scmp.ne.s32.totalorder %s133, %s134
    %p146 = scmp.eq.s32.totalorder %s25, 1
    %p147 = por %p145, %p146
    %p149 = scmp.ne.s32.totalorder %s134, %s148
    %p150 = scmp.eq.s32.totalorder %s25, 0
    %p151 = por %p149, %p150
    %s153 = sadd.s32 %s152, 1
    %p156 = scmp.eq.s32.totalorder %s19, 1
    %p157 = scmp.ne.s32.totalorder %s152, %s154
    %p158 = scmp.eq.s32.totalorder %s19, 0
    %p159 = por %p157, %p158
    %p160 = scmp.ne.s32.totalorder %s152, %s154
    %p161 = scmp.eq.s32.totalorder %s24, 1
    %p162 = por %p160, %p161
    %p163 = scmp.ne.s32.totalorder %s154, %s155
    %p164 = scmp.eq.s32.totalorder %s24, 0
    %p165 = por %p163, %p164
    %p166 = scmp.ne.s32.totalorder %s154, %s155
    %p167 = scmp.eq.s32.totalorder %s25, 1
    %p168 = por %p166, %p167
    %p170 = scmp.ne.s32.totalorder %s155, %s169
    %p171 = scmp.eq.s32.totalorder %s25, 0
    %p172 = por %p170, %p171
    %s174 = sadd.s32 %s173, 1
    %p177 = scmp.eq.s32.totalorder %s19, 1
    %p178 = scmp.ne.s32.totalorder %s173, %s175
    %p179 = scmp.eq.s32.totalorder %s19, 0
    %p180 = por %p178, %p179
    %p181 = scmp.ne.s32.totalorder %s173, %s175
    %p182 = scmp.eq.s32.totalorder %s24, 1
    %p183 = por %p181, %p182
    %p184 = scmp.ne.s32.totalorder %s175, %s176
    %p185 = scmp.eq.s32.totalorder %s24, 0
    %p186 = por %p184, %p185
    %p187 = scmp.ne.s32.totalorder %s175, %s176
    %p188 = scmp.eq.s32.totalorder %s25, 1
    %p189 = por %p187, %p188
    %p191 = scmp.ne.s32.totalorder %s176, %s190
    %p192 = scmp.eq.s32.totalorder %s25, 0
    %p193 = por %p191, %p192
    %s195 = sadd.s32 %s194, 1
    %p198 = scmp.eq.s32.totalorder %s19, 1
    %p199 = scmp.ne.s32.totalorder %s194, %s196
    %p200 = scmp.eq.s32.totalorder %s19, 0
    %p201 = por %p199, %p200
    %p202 = scmp.ne.s32.totalorder %s194, %s196
    %p203 = scmp.eq.s32.totalorder %s24, 1
    %p204 = por %p202, %p203
    %p205 = scmp.ne.s32.totalorder %s196, %s197
    %p206 = scmp.eq.s32.totalorder %s24, 0
    %p207 = por %p205, %p206
    %p208 = scmp.ne.s32.totalorder %s196, %s197
    %p209 = scmp.eq.s32.totalorder %s25, 1
    %p210 = por %p208, %p209
    %p212 = scmp.ne.s32.totalorder %s197, %s211
    %p213 = scmp.eq.s32.totalorder %s25, 0
    %p214 = por %p212, %p213
    %s216 = sadd.s32 %s215, 1
    %p219 = scmp.eq.s32.totalorder %s19, 1
    %p220 = scmp.ne.s32.totalorder %s215, %s217
    %p221 = scmp.eq.s32.totalorder %s19, 0
    %p222 = por %p220, %p221
    %p223 = scmp.ne.s32.totalorder %s215, %s217
    %p224 = scmp.eq.s32.totalorder %s24, 1
    %p225 = por %p223, %p224
    %p226 = scmp.ne.s32.totalorder %s217, %s218
    %p227 = scmp.eq.s32.totalorder %s24, 0
    %p228 = por %p226, %p227
    %p229 = scmp.ne.s32.totalorder %s217, %s218
    %p230 = scmp.eq.s32.totalorder %s25, 1
    %p231 = por %p229, %p230
    %p233 = scmp.ne.s32.totalorder %s218, %s232
    %p234 = scmp.eq.s32.totalorder %s25, 0
    %p235 = por %p233, %p234
    %s237 = sadd.s32 %s236, 1
    %p240 = scmp.eq.s32.totalorder %s19, 1
    %p241 = scmp.ne.s32.totalorder %s236, %s238
    %p242 = scmp.eq.s32.totalorder %s19, 0
    %p243 = por %p241, %p242
    %p244 = scmp.ne.s32.totalorder %s236, %s238
    %p245 = scmp.eq.s32.totalorder %s24, 1
    %p246 = por %p244, %p245
    %p247 = scmp.ne.s32.totalorder %s238, %s239
    %p248 = scmp.eq.s32.totalorder %s24, 0
    %p249 = por %p247, %p248
    %p250 = scmp.ne.s32.totalorder %s238, %s239
    %p251 = scmp.eq.s32.totalorder %s25, 1
    %p252 = por %p250, %p251
    %p254 = scmp.ne.s32.totalorder %s239, %s253
    %p255 = scmp.eq.s32.totalorder %s25, 0
    %p256 = por %p254, %p255
    %s258 = sadd.s32 %s257, 1
    %p261 = scmp.eq.s32.totalorder %s19, 1
    %p262 = scmp.ne.s32.totalorder %s257, %s259
    %p263 = scmp.eq.s32.totalorder %s19, 0
    %p264 = por %p262, %p263
    %p265 = scmp.ne.s32.totalorder %s257, %s259
    %p266 = scmp.eq.s32.totalorder %s24, 1
    %p267 = por %p265, %p266
    %p268 = scmp.ne.s32.totalorder %s259, %s260
    %p269 = scmp.eq.s32.totalorder %s24, 0
    %p270 = por %p268, %p269
    %p271 = scmp.ne.s32.totalorder %s259, %s260
    %p272 = scmp.eq.s32.totalorder %s25, 1
    %p273 = por %p271, %p272
    %p275 = scmp.ne.s32.totalorder %s260, %s274
    %p276 = scmp.eq.s32.totalorder %s25, 0
    %p277 = por %p275, %p276
    %s279 = sadd.s32 %s278, 1
    %p282 = scmp.eq.s32.totalorder %s19, 1
    %p283 = scmp.ne.s32.totalorder %s278, %s280
    %p284 = scmp.eq.s32.totalorder %s19, 0
    %p285 = por %p283, %p284
    %p286 = scmp.ne.s32.totalorder %s278, %s280
    %p287 = scmp.eq.s32.totalorder %s24, 1
    %p288 = por %p286, %p287
    %p289 = scmp.ne.s32.totalorder %s280, %s281
    %p290 = scmp.eq.s32.totalorder %s24, 0
    %p291 = por %p289, %p290
    %p292 = scmp.ne.s32.totalorder %s280, %s281
    %p293 = scmp.eq.s32.totalorder %s25, 1
    %p294 = por %p292, %p293
    %p296 = scmp.ne.s32.totalorder %s281, %s295
    %p297 = scmp.eq.s32.totalorder %s25, 0
    %p298 = por %p296, %p297
    %s300 = sadd.s32 %s299, 1
    %p303 = scmp.eq.s32.totalorder %s19, 1
    %p304 = scmp.ne.s32.totalorder %s299, %s301
    %p305 = scmp.eq.s32.totalorder %s19, 0
    %p306 = por %p304, %p305
    %p307 = scmp.ne.s32.totalorder %s299, %s301
    %p308 = scmp.eq.s32.totalorder %s24, 1
    %p309 = por %p307, %p308
    %p310 = scmp.ne.s32.totalorder %s301, %s302
    %p311 = scmp.eq.s32.totalorder %s24, 0
    %p312 = por %p310, %p311
    %p313 = scmp.ne.s32.totalorder %s301, %s302
    %p314 = scmp.eq.s32.totalorder %s25, 1
    %p315 = por %p313, %p314
    %p317 = scmp.ne.s32.totalorder %s302, %s316
    %p318 = scmp.eq.s32.totalorder %s25, 0
    %p319 = por %p317, %p318
    %s320 = ssub.s32 %s19, %s26
    %p321 = scmp.eq.s32.totalorder %s320, 0
    %s323 = sadd.s32 %s322, 1
    %s324 = scalar_select %p321, %s322, %s323
    %p327 = pneg %p321
    %p328 = scmp.eq.s32.totalorder %s19, 1
    %p329 = por %p327, %p328
    %p330 = scmp.ne.s32.totalorder %s322, %s325
    %p331 = scmp.eq.s32.totalorder %s19, 0
    %p332 = por %p330, %p331
    %p333 = scmp.ne.s32.totalorder %s322, %s325
    %p334 = scmp.eq.s32.totalorder %s24, 1
    %p335 = por %p333, %p334
    %p336 = scmp.ne.s32.totalorder %s325, %s326
    %p337 = scmp.eq.s32.totalorder %s24, 0
    %p338 = por %p336, %p337
    %p339 = scmp.ne.s32.totalorder %s325, %s326
    %p340 = scmp.eq.s32.totalorder %s25, 1
    %p341 = por %p339, %p340
    %p343 = scmp.ne.s32.totalorder %s326, %s342
    %p344 = scmp.eq.s32.totalorder %s25, 0
    %p345 = por %p343, %p344
    %p346 = scmp.le.s32.totalorder 1, %s19
    %p347 = scmp.lt.s32.totalorder %s19, 3
    %p348 = pnand %p346, %p347
    %p349 = pneg %p348
    // Predicated region
    $region9: #{soia_dod_forward.1} parent=5 // pred_check
      _
    $region10: #{soia_dod_forward.1} parent=5 // pred_check_branch
      %351 = sbr.rel (%p348) target = $region12
    $region11: #{soia_dod_forward.1} parent=5 // pred_region
      %s352 = ssub.s32 %s19, 1
      // Predicated region
      $region13: #{soia_dod_forward.1} parent=11 // pred_check
        %p353 = pneg %p144
      $region14: #{soia_dod_forward.1} parent=11 // pred_check_branch
        %355 = sbr.rel (%p353) target = $region16
      $region15: #{soia_dod_forward.1} parent=11 // pred_region
        _
      $region16: #{soia_dod_forward.1} parent=11 // pred_fallthru
        _
      // Predicated region
      $region17: #{soia_dod_forward.1} parent=11 // pred_check
        %p356 = pneg %p165
      $region18: #{soia_dod_forward.1} parent=11 // pred_check_branch
        %358 = sbr.rel (%p356) target = $region20
      $region19: #{soia_dod_forward.1} parent=11 // pred_region
        _
      $region20: #{soia_dod_forward.1} parent=11 // pred_fallthru
        _
      // Predicated region
      $region21: #{soia_dod_forward.1} parent=11 // pred_check
        %p359 = pneg %p186
      $region22: #{soia_dod_forward.1} parent=11 // pred_check_branch
        %361 = sbr.rel (%p359) target = $region24
      $region23: #{soia_dod_forward.1} parent=11 // pred_region
        _
      $region24: #{soia_dod_forward.1} parent=11 // pred_fallthru
        _
      // Predicated region
      $region25: #{soia_dod_forward.1} parent=11 // pred_check
        %p362 = pneg %p207
      $region26: #{soia_dod_forward.1} parent=11 // pred_check_branch
        %364 = sbr.rel (%p362) target = $region28
      $region27: #{soia_dod_forward.1} parent=11 // pred_region
        _
      $region28: #{soia_dod_forward.1} parent=11 // pred_fallthru
        _
      // Predicated region
      $region29: #{soia_dod_forward.1} parent=11 // pred_check
        %p365 = pneg %p228
      $region30: #{soia_dod_forward.1} parent=11 // pred_check_branch
        %367 = sbr.rel (%p365) target = $region32
      $region31: #{soia_dod_forward.1} parent=11 // pred_region
        _
      $region32: #{soia_dod_forward.1} parent=11 // pred_fallthru
        _
      // Predicated region
      $region33: #{soia_dod_forward.1} parent=11 // pred_check
        %p368 = pneg %p249
      $region34: #{soia_dod_forward.1} parent=11 // pred_check_branch
        %370 = sbr.rel (%p368) target = $region36
      $region35: #{soia_dod_forward.1} parent=11 // pred_region
        _
      $region36: #{soia_dod_forward.1} parent=11 // pred_fallthru
        _
      // Predicated region
      $region37: #{soia_dod_forward.1} parent=11 // pred_check
        %p371 = pneg %p270
      $region38: #{soia_dod_forward.1} parent=11 // pred_check_branch
        %373 = sbr.rel (%p371) target = $region40
      $region39: #{soia_dod_forward.1} parent=11 // pred_region
        _
      $region40: #{soia_dod_forward.1} parent=11 // pred_fallthru
        _
      // Predicated region
      $region41: #{soia_dod_forward.1} parent=11 // pred_check
        %p374 = pneg %p291
      $region42: #{soia_dod_forward.1} parent=11 // pred_check_branch
        %376 = sbr.rel (%p374) target = $region44
      $region43: #{soia_dod_forward.1} parent=11 // pred_region
        _
      $region44: #{soia_dod_forward.1} parent=11 // pred_fallthru
        _
      // Predicated region
      $region45: #{soia_dod_forward.1} parent=11 // pred_check
        %p377 = pneg %p312
      $region46: #{soia_dod_forward.1} parent=11 // pred_check_branch
        %379 = sbr.rel (%p377) target = $region48
      $region47: #{soia_dod_forward.1} parent=11 // pred_region
        _
      $region48: #{soia_dod_forward.1} parent=11 // pred_fallthru
        _
    $region12: #{soia_dod_forward.1} parent=5 // pred_fallthru
      _
    %p380 = scmp.lt.s32.totalorder %s19, 2
    // Predicated region
    $region49: #{soia_dod_forward.1} parent=5 // pred_check
      %p381 = pneg %p380
    $region50: #{soia_dod_forward.1} parent=5 // pred_check_branch
      %383 = sbr.rel (%p381) target = $region52
    $region51: #{soia_dod_forward.1} parent=5 // pred_region
      // Predicated region
      $region53: #{soia_dod_forward.1} parent=51 // pred_check
        %p384 = pneg %p39
      $region54: #{soia_dod_forward.1} parent=51 // pred_check_branch
        %386 = sbr.rel (%p384) target = $region56
      $region55: #{soia_dod_forward.1} parent=51 // pred_region
        %p387 = scmp.lt.s32.totalorder %s19, 1
        %s388 = scalar_select %p387, %s19, 1
        %s389 = smul.addr %s388, 2
        %s390 = smul.addr %s389, 4
        %s391 = scalar_lea.vmem %s0, %s390
      $region56: #{soia_dod_forward.1} parent=51 // pred_fallthru
        _
      // Predicated region
      $region57: #{soia_dod_forward.1} parent=51 // pred_check
        %p392 = pneg %p65
      $region58: #{soia_dod_forward.1} parent=51 // pred_check_branch
        %394 = sbr.rel (%p392) target = $region60
      $region59: #{soia_dod_forward.1} parent=51 // pred_region
        %p395 = scmp.lt.s32.totalorder %s19, 1
        %s396 = scalar_select %p395, %s19, 1
        %s397 = smul.addr %s396, 8
        %s398 = scalar_lea.vmem %s1, %s397
      $region60: #{soia_dod_forward.1} parent=51 // pred_fallthru
        _
      // Predicated region
      $region61: #{soia_dod_forward.1} parent=51 // pred_check
        %p399 = pneg %p91
      $region62: #{soia_dod_forward.1} parent=51 // pred_check_branch
        %401 = sbr.rel (%p399) target = $region64
      $region63: #{soia_dod_forward.1} parent=51 // pred_region
        %p402 = scmp.lt.s32.totalorder %s19, 1
        %s403 = scalar_select %p402, %s19, 1
        %s404 = smul.addr %s403, 8
        %s405 = scalar_lea.vmem %s2, %s404
      $region64: #{soia_dod_forward.1} parent=51 // pred_fallthru
        _
      // Predicated region
      $region65: #{soia_dod_forward.1} parent=51 // pred_check
        %p406 = pneg %p117
      $region66: #{soia_dod_forward.1} parent=51 // pred_check_branch
        %408 = sbr.rel (%p406) target = $region68
      $region67: #{soia_dod_forward.1} parent=51 // pred_region
        %p409 = scmp.lt.s32.totalorder %s19, 1
        %s410 = scalar_select %p409, %s19, 1
        %s411 = smul.addr %s410, 8
        %s412 = scalar_lea.vmem %s3, %s411
      $region68: #{soia_dod_forward.1} parent=51 // pred_fallthru
        _
    $region52: #{soia_dod_forward.1} parent=5 // pred_fallthru
      _
    %p413 = scmp.le.s32.totalorder 1, %s19
    %p414 = scmp.lt.s32.totalorder %s19, 3
    %p415 = pnand %p413, %p414
    %p416 = pneg %p415
    // Predicated region
    $region69: #{soia_dod_forward.1} parent=5 // pred_check
      _
    $region70: #{soia_dod_forward.1} parent=5 // pred_check_branch
      %418 = sbr.rel (%p415) target = $region72
    $region71: #{soia_dod_forward.1} parent=5 // pred_region
      %s419 = ssub.s32 %s19, 1
      %p420 = scmp.lt.s32.totalorder %s24, 1
      %s421 = scalar_select %p420, %s24, 1
      %s422 = smul.addr %s421, 2
      %s423 = smul.addr %s422, 4
      %s424 = scalar_lea.vmem %s0, %s423
      %p425 = pneg %p45
      %p426 = pneg %p42
      %p427 = scmp.lt.s32.totalorder %s24, 1
      %s428 = scalar_select %p427, %s24, 1
      %s429 = smul.addr %s428, 8
      %s430 = scalar_lea.vmem %s1, %s429
      %p431 = pneg %p71
      %p432 = pneg %p68
      %p433 = scmp.lt.s32.totalorder %s24, 1
      %s434 = scalar_select %p433, %s24, 1
      %s435 = smul.addr %s434, 8
      %s436 = scalar_lea.vmem %s2, %s435
      %p437 = pneg %p97
      %p438 = pneg %p94
      %p439 = scmp.lt.s32.totalorder %s24, 1
      %s440 = scalar_select %p439, %s24, 1
      %s441 = smul.addr %s440, 8
      %s442 = scalar_lea.vmem %s3, %s441
      %p443 = pneg %p123
      %p444 = pneg %p120
      %p445 = pneg %p144
      %p446 = pneg %p141
      %p447 = pneg %p165
      %p448 = pneg %p162
      %p449 = pneg %p186
      %p450 = pneg %p183
      %p451 = pneg %p207
      %p452 = pneg %p204
      %p453 = pneg %p228
      %p454 = pneg %p225
      %p455 = pneg %p249
      %p456 = pneg %p246
      %p457 = pneg %p270
      %p458 = pneg %p267
      %p459 = pneg %p291
      %p460 = pneg %p288
      %p461 = pneg %p312
      %p462 = pneg %p309
      %p463 = pneg %p338
      %p464 = pneg %p335
      %p465 = scmp.lt.s32.totalorder %s24, 1
      %s466 = scalar_select %p465, %s24, 1
      %s467 = smul.addr %s466, 8
      %s468 = scalar_lea.vmem %s13, %s467
      %p469 = scmp.lt.s32.totalorder %s24, 1
      %s470 = scalar_select %p469, %s24, 1
      %s471 = smul.addr %s470, 2
      %s472 = smul.addr %s471, 4
      %s473 = scalar_lea.vmem %s0, %s472
      %p474 = scmp.lt.s32.totalorder %s24, 1
      %s475 = scalar_select %p474, %s24, 1
      %s476 = smul.addr %s475, 8
      %s477 = scalar_lea.vmem %s1, %s476
      %p478 = scmp.lt.s32.totalorder %s24, 1
      %s479 = scalar_select %p478, %s24, 1
      %s480 = smul.addr %s479, 8
      %s481 = scalar_lea.vmem %s2, %s480
      %p482 = scmp.lt.s32.totalorder %s24, 1
      %s483 = scalar_select %p482, %s24, 1
      %s484 = smul.addr %s483, 8
      %s485 = scalar_lea.vmem %s3, %s484
      %p486 = scmp.lt.s32.totalorder %s24, 1
      %s487 = scalar_select %p486, %s24, 1
      %s488 = smul.addr %s487, 8
      %s489 = scalar_lea.vmem %s13, %s488
      %v490 = vld [vmem:[%s12] sm:$0xff]
      %v491 = vld [vmem:[%s12 + $0x8] sm:$0xff]
      %v492 = vld [vmem:[%s12 + $0x10] sm:$0xff]
      %v493 = vld [vmem:[%s12 + $0x18] sm:$0xff]
      %v494 = vld [vmem:[%s12 + $0x20] sm:$0xff]
      %v495 = vld [vmem:[%s12 + $0x28] sm:$0xff]
      %v496 = vld [vmem:[%s12 + $0x30] sm:$0xff]
      %v497 = vld [vmem:[%s12 + $0x38] sm:$0xff]
      %v498 = vld [vmem:[%s12 + $0x40] sm:$0xff]
      %v499 = vld [vmem:[%s12 + $0x48] sm:$0xff]
      %v500 = vld [vmem:[%s12 + $0x50] sm:$0xff]
      %v501 = vld [vmem:[%s12 + $0x58] sm:$0xff]
      %v502 = vld [vmem:[%s12 + $0x60] sm:$0xff]
      %v503 = vld [vmem:[%s12 + $0x68] sm:$0xff]
      %v504 = vld [vmem:[%s12 + $0x70] sm:$0xff]
      %v505 = vld [vmem:[%s12 + $0x78] sm:$0xff]
      %v506 = vld [vmem:[%s12 + $0x80] sm:$0xff]
      %v507 = vld [vmem:[%s12 + $0x88] sm:$0xff]
      %v508 = vld [vmem:[%s12 + $0x90] sm:$0xff]
      %v509 = vld [vmem:[%s12 + $0x98] sm:$0xff]
      %v510 = vld [vmem:[%s12 + $0xa0] sm:$0xff]
      %v511 = vld [vmem:[%s12 + $0xa8] sm:$0xff]
      %v512 = vld [vmem:[%s12 + $0xb0] sm:$0xff]
      %v513 = vld [vmem:[%s12 + $0xb8] sm:$0xff]
      %v514 = vld [vmem:[%s477] sm:$0xff]
      %v515 = vperm.slane %v501, 1
      %vm516 = vcmask 31744
      %v518 = vsel %vm516, %v514, 0
      %vm520 = vcmask 1043456
      %v522 = vsel %vm520, %v496, 0
      %524 = vmatpush.msra.mxu0 0.0
      %525 = vmatpush.msra.mxu0 0.0
      %526 = vmatpush.msra.mxu0 0.0
      %527 = vmatpush.msra.mxu0 0.0
      %528 = vmatpush.msra.mxu0 0.0
      %529 = vmatpush.msra.mxu0 0.0
      %530 = vmatpush.msra.mxu0 0.0
      %531 = vmatpush.msra.mxu0 0.0
      %532 = vmatpush.msra.mxu0 0.0
      %533 = vmatpush.msra.mxu0 0.0
      %534 = vmatpush.msra.mxu0 0.0
      %535 = vmatpush.msra.mxu0 0.0
      %536 = vmatpush.msra.mxu0 0.0
      %537 = vmatpush.msra.mxu0 0.0
      %538 = vmatpush.msra.mxu0 0.0
      %539 = vmatpush.msra.mxu0 %v522
      %540 = vmatmul.f32.gmra.mxu0 %v518
      %v541 = vpop.f32.mrf.mxu0
      %v542 = vadd.f32 %v515, %v541
      %543 = vdwg.mxu0
      %v544 = vmax.f32 %v542, 0.0
      %v545 = vperm.slane %v501, 2
      %vm546 = vcmask 261120
      %v548 = vsel %vm546, %v544, 0
      %550 = vmatpush.msra.mxu0 0.0
      %551 = vmatpush.msra.mxu0 0.0
      %552 = vmatpush.msra.mxu0 0.0
      %553 = vmatpush.msra.mxu0 0.0
      %554 = vmatpush.msra.mxu0 0.0
      %555 = vmatpush.msra.mxu0 0.0
      %556 = vmatpush.msra.mxu0 0.0
      %557 = vmatpush.msra.mxu0 0.0
      %558 = vmatpush.msra.mxu0 0.0
      %559 = vmatpush.msra.mxu0 0.0
      %560 = vmatpush.msra.mxu0 0.0
      %561 = vmatpush.msra.mxu0 0.0
      %562 = vmatpush.msra.mxu0 %v500
      %563 = vmatpush.msra.mxu0 %v499
      %564 = vmatpush.msra.mxu0 %v498
      %565 = vmatpush.msra.mxu0 %v497
      %566 = vmatmul.f32.gmra.mxu0 %v548
      %v567 = vpop.f32.mrf.mxu0
      %v568 = vadd.f32 %v545, %v567
      %569 = vdwg.mxu0
      %v570 = vld [vmem:[%s481] sm:$0xff]
      %v571 = vadd.f32 %v568, %v570
      %v572 = vld [vmem:[%s5] sm:$0xff]
      %v573 = vld [vmem:[%s473] sm:$0xff]
      %v574 = vld [vmem:[%s4] sm:$0xff]
      %v575 = vld [vmem:[%s4 + $0x8] sm:$0xff]
      %v576 = vld [vmem:[%s4 + $0x10] sm:$0xff]
      %v577 = vld [vmem:[%s4 + $0x18] sm:$0xff]
      %v578 = vld [vmem:[%s4 + $0x20] sm:$0xff]
      %v579 = vld [vmem:[%s4 + $0x28] sm:$0xff]
      %v580 = vld [vmem:[%s4 + $0x30] sm:$0xff]
      %v581 = vld [vmem:[%s4 + $0x38] sm:$0xff]
      %v582 = vld [vmem:[%s4 + $0x40] sm:$0xff]
      %v583 = vld [vmem:[%s4 + $0x48] sm:$0xff]
      %v584 = vld [vmem:[%s4 + $0x50] sm:$0xff]
      %v585 = vld [vmem:[%s4 + $0x58] sm:$0xff]
      %v586 = vld [vmem:[%s4 + $0x60] sm:$0xff]
      %v587 = vld [vmem:[%s4 + $0x68] sm:$0xff]
      %v588 = vld [vmem:[%s4 + $0x70] sm:$0xff]
      %v589 = vld [vmem:[%s4 + $0x78] sm:$0xff]
      %v590 = vld [vmem:[%s4 + $0x80] sm:$0xff]
      %v591 = vld [vmem:[%s4 + $0x88] sm:$0xff]
      %v592 = vld [vmem:[%s4 + $0x90] sm:$0xff]
      %v593 = vld [vmem:[%s4 + $0x98] sm:$0xff]
      %v594 = vld [vmem:[%s4 + $0xa0] sm:$0xff]
      %v595 = vld [vmem:[%s4 + $0xa8] sm:$0xff]
      %v596 = vld [vmem:[%s4 + $0xb0] sm:$0xff]
      %v597 = vld [vmem:[%s4 + $0xb8] sm:$0xff]
      %599 = vst [vmem:[#allocation1] ss:$2 sm:$0xff] %v573
      %v600 = vld.sshfl [vmem:[#allocation1] sm:$0xff pattern:$0x75316420]
      %v601 = vld.sshfl [vmem:[#allocation1 + $0x8] sm:$0xff pattern:$0x75316420]
      %v604 = vrot.slane %v572, 1
      %vm606 = vcmask 523264
      %v607 = vsel %vm606, %v601, 0
      %609 = vmatpush.msra.mxu0 %v589
      %610 = vmatpush.msra.mxu0 %v588
      %611 = vmatpush.msra.mxu0 %v587
      %612 = vmatpush.msra.mxu0 %v586
      %613 = vmatpush.msra.mxu0 %v585
      %614 = vmatpush.msra.mxu0 %v584
      %615 = vmatpush.msra.mxu0 %v583
      %616 = vmatpush.msra.mxu0 %v582
      %617 = vmatpush.msra.mxu0 %v581
      %618 = vmatpush.msra.mxu0 %v580
      %619 = vmatpush.msra.mxu0 %v579
      %620 = vmatpush.msra.mxu0 %v578
      %621 = vmatpush.msra.mxu0 %v577
      %622 = vmatpush.msra.mxu0 %v576
      %623 = vmatpush.msra.mxu0 %v575
      %624 = vmatpush.msra.mxu0 %v574
      %625 = vmatmul.f32.gmra.mxu0 %v600
      %v626 = vpop.f32.mrf.mxu0
      %v627 = vadd.f32 %v604, %v626
      %628 = vdwg.mxu0
      %629 = vmatpush.msra.mxu0 0.0
      %630 = vmatpush.msra.mxu0 0.0
      %631 = vmatpush.msra.mxu0 0.0
      %632 = vmatpush.msra.mxu0 0.0
      %633 = vmatpush.msra.mxu0 0.0
      %634 = vmatpush.msra.mxu0 0.0
      %635 = vmatpush.msra.mxu0 0.0
      %636 = vmatpush.msra.mxu0 0.0
      %637 = vmatpush.msra.mxu0 %v597
      %638 = vmatpush.msra.mxu0 %v596
      %639 = vmatpush.msra.mxu0 %v595
      %640 = vmatpush.msra.mxu0 %v594
      %641 = vmatpush.msra.mxu0 %v593
      %642 = vmatpush.msra.mxu0 %v592
      %643 = vmatpush.msra.mxu0 %v591
      %644 = vmatpush.msra.mxu0 %v590
      %645 = vmatmul.f32.gmra.mxu0 %v607
      %v646 = vpop.f32.mrf.mxu0
      %v647 = vadd.f32 %v627, %v646
      %648 = vdwg.mxu0
      %v650 = vrot.slane %v647, 7
      %vm652 = vcmask 1040384
      %v653 = vsel %vm652, %v572, %v650
      %vm654 = vcmask 389120
      %v655 = vsel %vm654, %v653, 0.0
      %656 = vadd.xlane.f32.xlu0 %v655
      %v657 = vpop.xlane.xlu0 %656
      %v658 = vrcp.pop 48.0
      %v659 = vmul.f32 48.0, %v658
      %v660 = vsub.f32 1.0, %v659
      %v661 = vmul.f32 %v658, %v660
      %v662 = vadd.f32 %v658, %v661
      %vm663 = vweird.f32 %v658
      %v664 = vsel %vm663, %v658, %v662
      %v665 = vmul.f32 %v657, %v664
      %v666 = vsub.f32 %v653, %v665
      %v667 = vmul.f32 %v666, %v666
      %v668 = vsel %vm654, %v667, 0.0
      %669 = vadd.xlane.f32.xlu0 %v668
      %v670 = vpop.xlane.xlu0 %669
      %v671 = vmul.f32 %v670, %v664
      %v672 = vadd.f32 %v671, 1e-05
      %v673 = vrsqrt.pop %v672
      %v674 = vmul.f32 %v673, %v672
      %v675 = vmul.f32 %v674, %v673
      %v676 = vmul.f32 0.5, %v675
      %v677 = vsub.f32 1.5, %v676
      %v678 = vmul.f32 %v673, %v677
      %vm679 = vweird.f32 %v672
      %vm680 = vweird.f32 %v673
      %vm681 = vmor %vm679, %vm680
      %v682 = vsel %vm681, %v673, %v678
      %v683 = vmul.f32 %v666, %v682
      %v684 = vperm.slane %v572, 5
      %v685 = vmul.f32 %v683, %v684
      %v686 = vperm.slane %v572, 6
      %v687 = vadd.f32 %v685, %v686
      %v688 = vld [vmem:[%s6] sm:$0xff]
      %v689 = vld [vmem:[%s6 + $0x8] sm:$0xff]
      %v690 = vld [vmem:[%s7] sm:$0xff]
      %v691 = vld [vmem:[%s7 + $0x8] sm:$0xff]
      %v692 = vld [vmem:[%s7 + $0x10] sm:$0xff]
      %v693 = vld [vmem:[%s7 + $0x18] sm:$0xff]
      %v694 = vld [vmem:[%s7 + $0x20] sm:$0xff]
      %v695 = vld [vmem:[%s7 + $0x28] sm:$0xff]
      %v696 = vld [vmem:[%s7 + $0x30] sm:$0xff]
      %v697 = vld [vmem:[%s7 + $0x38] sm:$0xff]
      %v698 = vld [vmem:[%s7 + $0x40] sm:$0xff]
      %v699 = vld [vmem:[%s7 + $0x48] sm:$0xff]
      %v700 = vld [vmem:[%s7 + $0x50] sm:$0xff]
      %v701 = vld [vmem:[%s7 + $0x58] sm:$0xff]
      %v702 = vld [vmem:[%s7 + $0x60] sm:$0xff]
      %v703 = vld [vmem:[%s7 + $0x68] sm:$0xff]
      %v704 = vld [vmem:[%s7 + $0x70] sm:$0xff]
      %v705 = vld [vmem:[%s7 + $0x78] sm:$0xff]
      %v706 = vld [vmem:[%s7 + $0x80] sm:$0xff]
      %v707 = vld [vmem:[%s7 + $0x88] sm:$0xff]
      %v708 = vld [vmem:[%s8] sm:$0xff]
      %v709 = vld [vmem:[%s8 + $0x8] sm:$0xff]
      %v710 = vld [vmem:[%s8 + $0x10] sm:$0xff]
      %v711 = vld [vmem:[%s8 + $0x18] sm:$0xff]
      %v712 = vld [vmem:[%s8 + $0x20] sm:$0xff]
      %v713 = vld [vmem:[%s8 + $0x28] sm:$0xff]
      %v714 = vld [vmem:[%s8 + $0x30] sm:$0xff]
      %v715 = vld [vmem:[%s8 + $0x38] sm:$0xff]
      %v716 = vld [vmem:[%s8 + $0x40] sm:$0xff]
      %v717 = vld [vmem:[%s8 + $0x48] sm:$0xff]
      %v718 = vld [vmem:[%s8 + $0x50] sm:$0xff]
      %v719 = vld [vmem:[%s8 + $0x58] sm:$0xff]
      %v720 = vld [vmem:[%s8 + $0x60] sm:$0xff]
      %v721 = vld [vmem:[%s8 + $0x68] sm:$0xff]
      %v722 = vld [vmem:[%s8 + $0x70] sm:$0xff]
      %v723 = vld [vmem:[%s8 + $0x78] sm:$0xff]
      %v724 = vld [vmem:[%s8 + $0x80] sm:$0xff]
      %v725 = vld [vmem:[%s8 + $0x88] sm:$0xff]
      %v726 = vld [vmem:[%s8 + $0x90] sm:$0xff]
      %v727 = vld [vmem:[%s8 + $0x98] sm:$0xff]
      %v728 = vld [vmem:[%s8 + $0xa0] sm:$0xff]
      %v729 = vld [vmem:[%s8 + $0xa8] sm:$0xff]
      %v730 = vld [vmem:[%s8 + $0xb0] sm:$0xff]
      %v731 = vld [vmem:[%s8 + $0xb8] sm:$0xff]
      %v732 = vsel %vm654, %v687, 0.0
      %733 = vadd.xlane.f32.xlu0 %v732
      %v734 = vpop.xlane.xlu0 %733
      %v735 = vmul.f32 %v734, %v664
      %v736 = vsub.f32 %v687, %v735
      %v737 = vmul.f32 %v736, %v736
      %v738 = vsel %vm654, %v737, 0.0
      %739 = vadd.xlane.f32.xlu0 %v738
      %v740 = vpop.xlane.xlu0 %739
      %v741 = vmul.f32 %v740, %v664
      %v742 = vadd.f32 %v741, 1e-05
      %v743 = vrsqrt.pop %v742
      %v744 = vmul.f32 %v743, %v742
      %v745 = vmul.f32 %v744, %v743
      %v746 = vmul.f32 0.5, %v745
      %v747 = vsub.f32 1.5, %v746
      %v748 = vmul.f32 %v743, %v747
      %vm749 = vweird.f32 %v742
      %vm750 = vweird.f32 %v743
      %vm751 = vmor %vm749, %vm750
      %v752 = vsel %vm751, %v743, %v748
      %v753 = vmul.f32 %v736, %v752
      %v754 = vperm.slane %v688, 0
      %v755 = vmul.f32 %v753, %v754
      %v756 = vperm.slane %v688, 1
      %v757 = vadd.f32 %v755, %v756
      %v758 = vperm.slane %v688, 4
      %v759 = vperm.slane %v689, 4
      %vm760 = vcmask 392192
      %v762 = vsel %vm760, %v757, 0
      %764 = vmatpush.msra.mxu0 0.0
      %765 = vmatpush.msra.mxu0 0.0
      %766 = vmatpush.msra.mxu0 0.0
      %767 = vmatpush.msra.mxu0 0.0
      %768 = vmatpush.msra.mxu0 0.0
      %769 = vmatpush.msra.mxu0 0.0
      %770 = vmatpush.msra.mxu0 0.0
      %771 = vmatpush.msra.mxu0 0.0
      %772 = vmatpush.msra.mxu0 0.0
      %773 = vmatpush.msra.mxu0 0.0
      %774 = vmatpush.msra.mxu0 %v705
      %775 = vmatpush.msra.mxu0 %v702
      %776 = vmatpush.msra.mxu0 %v699
      %777 = vmatpush.msra.mxu0 %v696
      %778 = vmatpush.msra.mxu0 %v693
      %779 = vmatpush.msra.mxu0 %v690
      %780 = vmatmul.f32.gmra.mxu0 %v762
      %v781 = vpop.f32.mrf.mxu0
      %v782 = vadd.f32 %v758, %v781
      %783 = vdwg.mxu0
      %784 = vmatpush.msra.mxu0 0.0
      %785 = vmatpush.msra.mxu0 0.0
      %786 = vmatpush.msra.mxu0 0.0
      %787 = vmatpush.msra.mxu0 0.0
      %788 = vmatpush.msra.mxu0 0.0
      %789 = vmatpush.msra.mxu0 0.0
      %790 = vmatpush.msra.mxu0 0.0
      %791 = vmatpush.msra.mxu0 0.0
      %792 = vmatpush.msra.mxu0 0.0
      %793 = vmatpush.msra.mxu0 0.0
      %794 = vmatpush.msra.mxu0 %v706
      %795 = vmatpush.msra.mxu0 %v703
      %796 = vmatpush.msra.mxu0 %v700
      %797 = vmatpush.msra.mxu0 %v697
      %798 = vmatpush.msra.mxu0 %v694
      %799 = vmatpush.msra.mxu0 %v691
      %800 = vmatmul.f32.gmra.mxu0 %v762
      %v801 = vpop.f32.mrf.mxu0
      %v802 = vadd.f32 %v759, %v801
      %803 = vdwg.mxu0
      %805 = vrot.lane.b32.xlu0 %v782, 80
      %v806 = vpop.permute.xlu0 %805
      %vm807 = vcmask 97280
      %v808 = vsel %vm807, %v782, 0
      %v810 = vsel %vm807, %v806, 0
      %812 = vmatpush.xpose.msra.mxu0 0.0
      %813 = vmatpush.xpose.msra.mxu0 0.0
      %814 = vmatpush.xpose.msra.mxu0 0.0
      %815 = vmatpush.xpose.msra.mxu0 0.0
      %816 = vmatpush.xpose.msra.mxu0 0.0
      %817 = vmatpush.xpose.msra.mxu0 0.0
      %818 = vmatpush.xpose.msra.mxu0 0.0
      %819 = vmatpush.xpose.msra.mxu0 0.0
      %820 = vmatpush.xpose.msra.mxu0 0.0
      %821 = vmatpush.xpose.msra.mxu0 0.0
      %822 = vmatpush.xpose.msra.mxu0 0.0
      %823 = vmatpush.xpose.msra.mxu0 0.0
      %824 = vmatpush.xpose.msra.mxu0 0.0
      %825 = vmatpush.xpose.msra.mxu0 0.0
      %826 = vmatpush.xpose.msra.mxu0 0.0
      %827 = vmatpush.xpose.msra.mxu0 %v810
      %828 = vmatmul.f32.gmra.mxu0 %v808
      %v829 = vpop.f32.mrf.mxu0
      %v830 = vadd.f32 0.0, %v829
      %831 = vdwg.mxu0
      %v832 = vmul.f32 %v830, 0.28867513
      %vm833 = vcmask 36864
      %v834 = vsel %vm833, %v832, -inf
      %835 = vmax.xlane.f32.xlu0 %v834
      %v836 = vpop.xlane.xlu0 %835
      %v837 = vsub.f32 %v832, %v836
      %v838 = vmul.f32 %v837, 1.442695
      %v839 = vpow.pop %v838
      %v840 = vsel %vm833, %v839, 0.0
      %841 = vadd.xlane.f32.xlu0 %v840
      %v842 = vpop.xlane.xlu0 %841
      %v843 = vrcp.pop %v842
      %v844 = vmul.f32 %v839, %v843
      %845 = vrot.lane.b32.xlu0 %v782, 32
      %v846 = vpop.permute.xlu0 %845
      %vm847 = vcmask 39936
      %v849 = vsel %vm847, %v844, 0
      %vm851 = vcmask 1044480
      %v852 = vsel %vm851, %v846, 0
      %854 = vmatpush.msra.mxu0 0.0
      %855 = vmatpush.msra.mxu0 0.0
      %856 = vmatpush.msra.mxu0 0.0
      %857 = vmatpush.msra.mxu0 0.0
      %858 = vmatpush.msra.mxu0 0.0
      %859 = vmatpush.msra.mxu0 0.0
      %860 = vmatpush.msra.mxu0 0.0
      %861 = vmatpush.msra.mxu0 0.0
      %862 = vmatpush.msra.mxu0 0.0
      %863 = vmatpush.msra.mxu0 0.0
      %864 = vmatpush.msra.mxu0 0.0
      %865 = vmatpush.msra.mxu0 0.0
      %866 = vmatpush.msra.mxu0 0.0
      %867 = vmatpush.msra.mxu0 0.0
      %868 = vmatpush.msra.mxu0 0.0
      %869 = vmatpush.msra.mxu0 %v852
      %870 = vmatmul.f32.gmra.mxu0 %v849
      %v871 = vpop.f32.mrf.mxu0
      %v872 = vadd.f32 0.0, %v871
      %873 = vdwg.mxu0
      %874 = vrot.lane.b32.xlu0 %v782, 116
      %v875 = vpop.permute.xlu0 %874
      %876 = vrot.lane.b32.xlu0 %v782, 68
      %v877 = vpop.permute.xlu0 %876
      %v878 = vsel %vm807, %v875, 0
      %v880 = vsel %vm807, %v877, 0
      %882 = vmatpush.xpose.msra.mxu0 0.0
      %883 = vmatpush.xpose.msra.mxu0 0.0
      %884 = vmatpush.xpose.msra.mxu0 0.0
      %885 = vmatpush.xpose.msra.mxu0 0.0
      %886 = vmatpush.xpose.msra.mxu0 0.0
      %887 = vmatpush.xpose.msra.mxu0 0.0
      %888 = vmatpush.xpose.msra.mxu0 0.0
      %889 = vmatpush.xpose.msra.mxu0 0.0
      %890 = vmatpush.xpose.msra.mxu0 0.0
      %891 = vmatpush.xpose.msra.mxu0 0.0
      %892 = vmatpush.xpose.msra.mxu0 0.0
      %893 = vmatpush.xpose.msra.mxu0 0.0
      %894 = vmatpush.xpose.msra.mxu0 0.0
      %895 = vmatpush.xpose.msra.mxu0 0.0
      %896 = vmatpush.xpose.msra.mxu0 0.0
      %897 = vmatpush.xpose.msra.mxu0 %v880
      %898 = vmatmul.f32.gmra.mxu0 %v878
      %v899 = vpop.f32.mrf.mxu0
      %v900 = vadd.f32 0.0, %v899
      %901 = vdwg.mxu0
      %v902 = vmul.f32 %v900, 0.28867513
      %v903 = vsel %vm833, %v902, -inf
      %904 = vmax.xlane.f32.xlu0 %v903
      %v905 = vpop.xlane.xlu0 %904
      %v906 = vsub.f32 %v902, %v905
      %v907 = vmul.f32 %v906, 1.442695
      %v908 = vpow.pop %v907
      %v909 = vsel %vm833, %v908, 0.0
      %910 = vadd.xlane.f32.xlu0 %v909
      %v911 = vpop.xlane.xlu0 %910
      %v912 = vrcp.pop %v911
      %v913 = vmul.f32 %v908, %v912
      %914 = vrot.lane.b32.xlu0 %v782, 20
      %v915 = vpop.permute.xlu0 %914
      %v917 = vsel %vm847, %v913, 0
      %v919 = vsel %vm851, %v915, 0
      %921 = vmatpush.msra.mxu0 0.0
      %922 = vmatpush.msra.mxu0 0.0
      %923 = vmatpush.msra.mxu0 0.0
      %924 = vmatpush.msra.mxu0 0.0
      %925 = vmatpush.msra.mxu0 0.0
      %926 = vmatpush.msra.mxu0 0.0
      %927 = vmatpush.msra.mxu0 0.0
      %928 = vmatpush.msra.mxu0 0.0
      %929 = vmatpush.msra.mxu0 0.0
      %930 = vmatpush.msra.mxu0 0.0
      %931 = vmatpush.msra.mxu0 0.0
      %932 = vmatpush.msra.mxu0 0.0
      %933 = vmatpush.msra.mxu0 0.0
      %934 = vmatpush.msra.mxu0 0.0
      %935 = vmatpush.msra.mxu0 0.0
      %936 = vmatpush.msra.mxu0 %v919
      %937 = vmatmul.f32.gmra.mxu0 %v917
      %v938 = vpop.f32.mrf.mxu0
      %v939 = vadd.f32 0.0, %v938
      %940 = vdwg.mxu0
      %941 = vrot.lane.b32.xlu0 %v782, 104
      %v942 = vpop.permute.xlu0 %941
      %943 = vrot.lane.b32.xlu0 %v782, 56
      %v944 = vpop.permute.xlu0 %943
      %v945 = vsel %vm807, %v942, 0
      %v947 = vsel %vm807, %v944, 0
      %949 = vmatpush.xpose.msra.mxu0 0.0
      %950 = vmatpush.xpose.msra.mxu0 0.0
      %951 = vmatpush.xpose.msra.mxu0 0.0
      %952 = vmatpush.xpose.msra.mxu0 0.0
      %953 = vmatpush.xpose.msra.mxu0 0.0
      %954 = vmatpush.xpose.msra.mxu0 0.0
      %955 = vmatpush.xpose.msra.mxu0 0.0
      %956 = vmatpush.xpose.msra.mxu0 0.0
      %957 = vmatpush.xpose.msra.mxu0 0.0
      %958 = vmatpush.xpose.msra.mxu0 0.0
      %959 = vmatpush.xpose.msra.mxu0 0.0
      %960 = vmatpush.xpose.msra.mxu0 0.0
      %961 = vmatpush.xpose.msra.mxu0 0.0
      %962 = vmatpush.xpose.msra.mxu0 0.0
      %963 = vmatpush.xpose.msra.mxu0 0.0
      %964 = vmatpush.xpose.msra.mxu0 %v947
      %965 = vmatmul.f32.gmra.mxu0 %v945
      %v966 = vpop.f32.mrf.mxu0
      %v967 = vadd.f32 0.0, %v966
      %968 = vdwg.mxu0
      %v969 = vmul.f32 %v967, 0.28867513
      %v970 = vsel %vm833, %v969, -inf
      %971 = vmax.xlane.f32.xlu0 %v970
      %v972 = vpop.xlane.xlu0 %971
      %v973 = vsub.f32 %v969, %v972
      %v974 = vmul.f32 %v973, 1.442695
      %v975 = vpow.pop %v974
      %v976 = vsel %vm833, %v975, 0.0
      %977 = vadd.xlane.f32.xlu0 %v976
      %v978 = vpop.xlane.xlu0 %977
      %v979 = vrcp.pop %v978
      %v980 = vmul.f32 %v975, %v979
      %982 = vrot.lane.b32.xlu0 %v782, 8
      %v983 = vpop.permute.xlu0 %982
      %984 = vrot.lane.b32.xlu0 %v802, 8
      %v985 = vpop.permute.xlu0 %984
      %vm986 = vcmask 64512
      %v987 = vsel %vm986, %v983, %v985
      %v989 = vsel %vm847, %v980, 0
      %v991 = vsel %vm851, %v987, 0
      %993 = vmatpush.msra.mxu0 0.0
      %994 = vmatpush.msra.mxu0 0.0
      %995 = vmatpush.msra.mxu0 0.0
      %996 = vmatpush.msra.mxu0 0.0
      %997 = vmatpush.msra.mxu0 0.0
      %998 = vmatpush.msra.mxu0 0.0
      %999 = vmatpush.msra.mxu0 0.0
      %1000 = vmatpush.msra.mxu0 0.0
      %1001 = vmatpush.msra.mxu0 0.0
      %1002 = vmatpush.msra.mxu0 0.0
      %1003 = vmatpush.msra.mxu0 0.0
      %1004 = vmatpush.msra.mxu0 0.0
      %1005 = vmatpush.msra.mxu0 0.0
      %1006 = vmatpush.msra.mxu0 0.0
      %1007 = vmatpush.msra.mxu0 0.0
      %1008 = vmatpush.msra.mxu0 %v991
      %1009 = vmatmul.f32.gmra.mxu0 %v989
      %v1010 = vpop.f32.mrf.mxu0
      %v1011 = vadd.f32 0.0, %v1010
      %1012 = vdwg.mxu0
      %1013 = vrot.lane.b32.xlu0 %v782, 92
      %v1014 = vpop.permute.xlu0 %1013
      %1015 = vrot.lane.b32.xlu0 %v782, 44
      %v1016 = vpop.permute.xlu0 %1015
      %v1017 = vsel %vm807, %v1014, 0
      %v1019 = vsel %vm807, %v1016, 0
      %1021 = vmatpush.xpose.msra.mxu0 0.0
      %1022 = vmatpush.xpose.msra.mxu0 0.0
      %1023 = vmatpush.xpose.msra.mxu0 0.0
      %1024 = vmatpush.xpose.msra.mxu0 0.0
      %1025 = vmatpush.xpose.msra.mxu0 0.0
      %1026 = vmatpush.xpose.msra.mxu0 0.0
      %1027 = vmatpush.xpose.msra.mxu0 0.0
      %1028 = vmatpush.xpose.msra.mxu0 0.0
      %1029 = vmatpush.xpose.msra.mxu0 0.0
      %1030 = vmatpush.xpose.msra.mxu0 0.0
      %1031 = vmatpush.xpose.msra.mxu0 0.0
      %1032 = vmatpush.xpose.msra.mxu0 0.0
      %1033 = vmatpush.xpose.msra.mxu0 0.0
      %1034 = vmatpush.xpose.msra.mxu0 0.0
      %1035 = vmatpush.xpose.msra.mxu0 0.0
      %1036 = vmatpush.xpose.msra.mxu0 %v1019
      %1037 = vmatmul.f32.gmra.mxu0 %v1017
      %v1038 = vpop.f32.mrf.mxu0
      %v1039 = vadd.f32 0.0, %v1038
      %1040 = vdwg.mxu0
      %v1041 = vmul.f32 %v1039, 0.28867513
      %v1042 = vsel %vm833, %v1041, -inf
      %1043 = vmax.xlane.f32.xlu0 %v1042
      %v1044 = vpop.xlane.xlu0 %1043
      %v1045 = vsub.f32 %v1041, %v1044
      %v1046 = vmul.f32 %v1045, 1.442695
      %v1047 = vpow.pop %v1046
      %v1048 = vsel %vm833, %v1047, 0.0
      %1049 = vadd.xlane.f32.xlu0 %v1048
      %v1050 = vpop.xlane.xlu0 %1049
      %v1051 = vrcp.pop %v1050
      %v1052 = vmul.f32 %v1047, %v1051
      %1053 = vrot.lane.b32.xlu0 %v802, 124
      %v1054 = vpop.permute.xlu0 %1053
      %v1056 = vsel %vm847, %v1052, 0
      %v1058 = vsel %vm851, %v1054, 0
      %1060 = vmatpush.msra.mxu0 0.0
      %1061 = vmatpush.msra.mxu0 0.0
      %1062 = vmatpush.msra.mxu0 0.0
      %1063 = vmatpush.msra.mxu0 0.0
      %1064 = vmatpush.msra.mxu0 0.0
      %1065 = vmatpush.msra.mxu0 0.0
      %1066 = vmatpush.msra.mxu0 0.0
      %1067 = vmatpush.msra.mxu0 0.0
      %1068 = vmatpush.msra.mxu0 0.0
      %1069 = vmatpush.msra.mxu0 0.0
      %1070 = vmatpush.msra.mxu0 0.0
      %1071 = vmatpush.msra.mxu0 0.0
      %1072 = vmatpush.msra.mxu0 0.0
      %1073 = vmatpush.msra.mxu0 0.0
      %1074 = vmatpush.msra.mxu0 0.0
      %1075 = vmatpush.msra.mxu0 %v1058
      %1076 = vmatmul.f32.gmra.mxu0 %v1056
      %v1077 = vpop.f32.mrf.mxu0
      %v1078 = vadd.f32 0.0, %v1077
      %1079 = vdwg.mxu0
      %1081 = vrot.lane.b32.xlu0 %v939, 12
      %v1082 = vpop.permute.xlu0 %1081
      %1085 = vrot.lane.b32.xlu0 %v1011, 24
      %v1086 = vpop.permute.xlu0 %1085
      %1089 = vrot.lane.b32.xlu0 %v1078, 36
      %v1090 = vpop.permute.xlu0 %1089
      %v1092 = vsel %vm807, %v872, %v1082
      %vm1093 = vcmask 195584
      %v1094 = vsel %vm1093, %v1092, %v1086
      %vm1095 = vcmask 293888
      %v1096 = vsel %vm1095, %v1094, %v1090
      %v1097 = vperm.slane %v688, 5
      %1104 = vrot.lane.b32.xlu0 %v691, 112
      %v1105 = vpop.permute.xlu0 %1104
      %1106 = vrot.lane.b32.xlu0 %v694, 112
      %v1107 = vpop.permute.xlu0 %1106
      %1108 = vrot.lane.b32.xlu0 %v697, 112
      %v1109 = vpop.permute.xlu0 %1108
      %1110 = vrot.lane.b32.xlu0 %v700, 112
      %v1111 = vpop.permute.xlu0 %1110
      %1112 = vrot.lane.b32.xlu0 %v703, 112
      %v1113 = vpop.permute.xlu0 %1112
      %1114 = vrot.lane.b32.xlu0 %v706, 112
      %v1115 = vpop.permute.xlu0 %1114
      %v1123 = vsel %vm760, %v1096, 0
      %1125 = vmatpush.msra.mxu0 0.0
      %1126 = vmatpush.msra.mxu0 0.0
      %1127 = vmatpush.msra.mxu0 0.0
      %1128 = vmatpush.msra.mxu0 0.0
      %1129 = vmatpush.msra.mxu0 0.0
      %1130 = vmatpush.msra.mxu0 0.0
      %1131 = vmatpush.msra.mxu0 0.0
      %1132 = vmatpush.msra.mxu0 0.0
      %1133 = vmatpush.msra.mxu0 0.0
      %1134 = vmatpush.msra.mxu0 0.0
      %1135 = vmatpush.msra.mxu0 %v1115
      %1136 = vmatpush.msra.mxu0 %v1113
      %1137 = vmatpush.msra.mxu0 %v1111
      %1138 = vmatpush.msra.mxu0 %v1109
      %1139 = vmatpush.msra.mxu0 %v1107
      %1140 = vmatpush.msra.mxu0 %v1105
      %1141 = vmatmul.f32.gmra.mxu0 %v1123
      %v1142 = vpop.f32.mrf.mxu0
      %v1143 = vadd.f32 %v1097, %v1142
      %1144 = vdwg.mxu0
      %v1145 = vadd.f32 %v687, %v1143
      %v1146 = vsel %vm654, %v1145, 0.0
      %1147 = vadd.xlane.f32.xlu0 %v1146
      %v1148 = vpop.xlane.xlu0 %1147
      %v1149 = vmul.f32 %v1148, %v664
      %v1150 = vsub.f32 %v1145, %v1149
      %v1151 = vmul.f32 %v1150, %v1150
      %v1152 = vsel %vm654, %v1151, 0.0
      %1153 = vadd.xlane.f32.xlu0 %v1152
      %v1154 = vpop.xlane.xlu0 %1153
      %v1155 = vmul.f32 %v1154, %v664
      %v1156 = vadd.f32 %v1155, 1e-05
      %v1157 = vrsqrt.pop %v1156
      %v1158 = vmul.f32 %v1157, %v1156
      %v1159 = vmul.f32 %v1158, %v1157
      %v1160 = vmul.f32 0.5, %v1159
      %v1161 = vsub.f32 1.5, %v1160
      %v1162 = vmul.f32 %v1157, %v1161
      %vm1163 = vweird.f32 %v1156
      %vm1164 = vweird.f32 %v1157
      %vm1165 = vmor %vm1163, %vm1164
      %v1166 = vsel %vm1165, %v1157, %v1162
      %v1167 = vmul.f32 %v1150, %v1166
      %v1168 = vperm.slane %v688, 2
      %v1169 = vmul.f32 %v1167, %v1168
      %v1170 = vperm.slane %v688, 3
      %v1171 = vadd.f32 %v1169, %v1170
      %v1172 = vperm.slane %v688, 6
      %v1173 = vperm.slane %v689, 6
      %1180 = vrot.lane.b32.xlu0 %v691, 64
      %v1181 = vpop.permute.xlu0 %1180
      %1182 = vrot.lane.b32.xlu0 %v692, 64
      %v1183 = vpop.permute.xlu0 %1182
      %1184 = vrot.lane.b32.xlu0 %v694, 64
      %v1185 = vpop.permute.xlu0 %1184
      %1186 = vrot.lane.b32.xlu0 %v695, 64
      %v1187 = vpop.permute.xlu0 %1186
      %1188 = vrot.lane.b32.xlu0 %v697, 64
      %v1189 = vpop.permute.xlu0 %1188
      %1190 = vrot.lane.b32.xlu0 %v698, 64
      %v1191 = vpop.permute.xlu0 %1190
      %1192 = vrot.lane.b32.xlu0 %v700, 64
      %v1193 = vpop.permute.xlu0 %1192
      %1194 = vrot.lane.b32.xlu0 %v701, 64
      %v1195 = vpop.permute.xlu0 %1194
      %1196 = vrot.lane.b32.xlu0 %v703, 64
      %v1197 = vpop.permute.xlu0 %1196
      %1198 = vrot.lane.b32.xlu0 %v704, 64
      %v1199 = vpop.permute.xlu0 %1198
      %1200 = vrot.lane.b32.xlu0 %v706, 64
      %v1201 = vpop.permute.xlu0 %1200
      %1202 = vrot.lane.b32.xlu0 %v707, 64
      %v1203 = vpop.permute.xlu0 %1202
      %v1204 = vsel %vm606, %v1181, %v1183
      %v1205 = vsel %vm606, %v1185, %v1187
      %v1206 = vsel %vm606, %v1189, %v1191
      %v1207 = vsel %vm606, %v1193, %v1195
      %v1208 = vsel %vm606, %v1197, %v1199
      %v1209 = vsel %vm606, %v1201, %v1203
      %v1223 = vsel %vm760, %v1171, 0
      %1225 = vmatpush.msra.mxu0 0.0
      %1226 = vmatpush.msra.mxu0 0.0
      %1227 = vmatpush.msra.mxu0 0.0
      %1228 = vmatpush.msra.mxu0 0.0
      %1229 = vmatpush.msra.mxu0 0.0
      %1230 = vmatpush.msra.mxu0 0.0
      %1231 = vmatpush.msra.mxu0 0.0
      %1232 = vmatpush.msra.mxu0 0.0
      %1233 = vmatpush.msra.mxu0 0.0
      %1234 = vmatpush.msra.mxu0 0.0
      %1235 = vmatpush.msra.mxu0 %v1209
      %1236 = vmatpush.msra.mxu0 %v1208
      %1237 = vmatpush.msra.mxu0 %v1207
      %1238 = vmatpush.msra.mxu0 %v1206
      %1239 = vmatpush.msra.mxu0 %v1205
      %1240 = vmatpush.msra.mxu0 %v1204
      %1241 = vmatmul.f32.gmra.mxu0 %v1223
      %v1242 = vpop.f32.mrf.mxu0
      %v1243 = vadd.f32 %v1172, %v1242
      %1244 = vdwg.mxu0
      %1245 = vmatpush.msra.mxu0 0.0
      %1246 = vmatpush.msra.mxu0 0.0
      %1247 = vmatpush.msra.mxu0 0.0
      %1248 = vmatpush.msra.mxu0 0.0
      %1249 = vmatpush.msra.mxu0 0.0
      %1250 = vmatpush.msra.mxu0 0.0
      %1251 = vmatpush.msra.mxu0 0.0
      %1252 = vmatpush.msra.mxu0 0.0
      %1253 = vmatpush.msra.mxu0 0.0
      %1254 = vmatpush.msra.mxu0 0.0
      %1255 = vmatpush.msra.mxu0 %v1203
      %1256 = vmatpush.msra.mxu0 %v1199
      %1257 = vmatpush.msra.mxu0 %v1195
      %1258 = vmatpush.msra.mxu0 %v1191
      %1259 = vmatpush.msra.mxu0 %v1187
      %1260 = vmatpush.msra.mxu0 %v1183
      %1261 = vmatmul.f32.gmra.mxu0 %v1223
      %v1262 = vpop.f32.mrf.mxu0
      %v1263 = vadd.f32 %v1173, %v1262
      %1264 = vdwg.mxu0
      %v1265 = vmul.f32 %v1243, -1.702
      %v1266 = vmul.f32 %v1263, -1.702
      %v1267 = vmul.f32 %v1265, 1.442695
      %v1268 = vpow.pop %v1267
      %v1269 = vmul.f32 %v1266, 1.442695
      %v1270 = vpow.pop %v1269
      %v1271 = vadd.f32 %v1268, 1.0
      %v1272 = vadd.f32 %v1270, 1.0
      %v1273 = vrcp.pop %v1271
      %v1274 = vmul.f32 %v1271, %v1273
      %v1275 = vsub.f32 1.0, %v1274
      %v1276 = vmul.f32 %v1273, %v1275
      %v1277 = vadd.f32 %v1273, %v1276
      %vm1278 = vweird.f32 %v1271
      %vm1279 = vweird.f32 %v1273
      %vm1280 = vmor %vm1278, %vm1279
      %v1281 = vsel %vm1280, %v1273, %v1277
      %v1282 = vand.u32 2147483647, %v1271
      %vm1283 = vcmp.eq.f32.partialorder %v1282, 8.507059e+37
      %v1284 = vand.u32 %v1271, 2147483648
      %v1285 = vor.u32 1.1754944e-38, %v1284
      %v1286 = vsel %vm1283, %v1285, %v1281
      %v1287 = vmul.f32 1.0, %v1286
      %v1288 = vrcp.pop %v1272
      %v1289 = vmul.f32 %v1272, %v1288
      %v1290 = vsub.f32 1.0, %v1289
      %v1291 = vmul.f32 %v1288, %v1290
      %v1292 = vadd.f32 %v1288, %v1291
      %vm1293 = vweird.f32 %v1272
      %vm1294 = vweird.f32 %v1288
      %vm1295 = vmor %vm1293, %vm1294
      %v1296 = vsel %vm1295, %v1288, %v1292
      %v1297 = vand.u32 2147483647, %v1272
      %vm1298 = vcmp.eq.f32.partialorder %v1297, 8.507059e+37
      %v1299 = vand.u32 %v1272, 2147483648
      %v1300 = vor.u32 1.1754944e-38, %v1299
      %v1301 = vsel %vm1298, %v1300, %v1296
      %v1302 = vmul.f32 1.0, %v1301
      %v1303 = vmul.f32 %v1243, %v1287
      %v1304 = vmul.f32 %v1263, %v1302
      %v1305 = vperm.slane %v688, 7
      %v1307 = vsel %vm606, %v1304, 0
      %1309 = vmatpush.msra.mxu0 %v723
      %1310 = vmatpush.msra.mxu0 %v722
      %1311 = vmatpush.msra.mxu0 %v721
      %1312 = vmatpush.msra.mxu0 %v720
      %1313 = vmatpush.msra.mxu0 %v719
      %1314 = vmatpush.msra.mxu0 %v718
      %1315 = vmatpush.msra.mxu0 %v717
      %1316 = vmatpush.msra.mxu0 %v716
      %1317 = vmatpush.msra.mxu0 %v715
      %1318 = vmatpush.msra.mxu0 %v714
      %1319 = vmatpush.msra.mxu0 %v713
      %1320 = vmatpush.msra.mxu0 %v712
      %1321 = vmatpush.msra.mxu0 %v711
      %1322 = vmatpush.msra.mxu0 %v710
      %1323 = vmatpush.msra.mxu0 %v709
      %1324 = vmatpush.msra.mxu0 %v708
      %1325 = vmatmul.f32.gmra.mxu0 %v1303
      %v1326 = vpop.f32.mrf.mxu0
      %v1327 = vadd.f32 %v1305, %v1326
      %1328 = vdwg.mxu0
      %1329 = vmatpush.msra.mxu0 0.0
      %1330 = vmatpush.msra.mxu0 0.0
      %1331 = vmatpush.msra.mxu0 0.0
      %1332 = vmatpush.msra.mxu0 0.0
      %1333 = vmatpush.msra.mxu0 0.0
      %1334 = vmatpush.msra.mxu0 0.0
      %1335 = vmatpush.msra.mxu0 0.0
      %1336 = vmatpush.msra.mxu0 0.0
      %1337 = vmatpush.msra.mxu0 %v731
      %1338 = vmatpush.msra.mxu0 %v730
      %1339 = vmatpush.msra.mxu0 %v729
      %1340 = vmatpush.msra.mxu0 %v728
      %1341 = vmatpush.msra.mxu0 %v727
      %1342 = vmatpush.msra.mxu0 %v726
      %1343 = vmatpush.msra.mxu0 %v725
      %1344 = vmatpush.msra.mxu0 %v724
      %1345 = vmatmul.f32.gmra.mxu0 %v1307
      %v1346 = vpop.f32.mrf.mxu0
      %v1347 = vadd.f32 %v1327, %v1346
      %1348 = vdwg.mxu0
      %v1349 = vadd.f32 %v1145, %v1347
      %s1350 = scalar_lea.vmem %s6, 16
      %v1351 = vld [vmem:[%s1350] sm:$0xff]
      %v1352 = vld [vmem:[%s1350 + $0x8] sm:$0xff]
      %s1353 = scalar_lea.vmem %s7, 144
      %v1354 = vld [vmem:[%s1353] sm:$0xff]
      %v1355 = vld [vmem:[%s1353 + $0x8] sm:$0xff]
      %v1356 = vld [vmem:[%s1353 + $0x10] sm:$0xff]
      %v1357 = vld [vmem:[%s1353 + $0x18] sm:$0xff]
      %v1358 = vld [vmem:[%s1353 + $0x20] sm:$0xff]
      %v1359 = vld [vmem:[%s1353 + $0x28] sm:$0xff]
      %v1360 = vld [vmem:[%s1353 + $0x30] sm:$0xff]
      %v1361 = vld [vmem:[%s1353 + $0x38] sm:$0xff]
      %v1362 = vld [vmem:[%s1353 + $0x40] sm:$0xff]
      %v1363 = vld [vmem:[%s1353 + $0x48] sm:$0xff]
      %v1364 = vld [vmem:[%s1353 + $0x50] sm:$0xff]
      %v1365 = vld [vmem:[%s1353 + $0x58] sm:$0xff]
      %v1366 = vld [vmem:[%s1353 + $0x60] sm:$0xff]
      %v1367 = vld [vmem:[%s1353 + $0x68] sm:$0xff]
      %v1368 = vld [vmem:[%s1353 + $0x70] sm:$0xff]
      %v1369 = vld [vmem:[%s1353 + $0x78] sm:$0xff]
      %v1370 = vld [vmem:[%s1353 + $0x80] sm:$0xff]
      %v1371 = vld [vmem:[%s1353 + $0x88] sm:$0xff]
      %s1372 = scalar_lea.vmem %s8, 192
      %v1373 = vld [vmem:[%s1372] sm:$0xff]
      %v1374 = vld [vmem:[%s1372 + $0x8] sm:$0xff]
      %v1375 = vld [vmem:[%s1372 + $0x10] sm:$0xff]
      %v1376 = vld [vmem:[%s1372 + $0x18] sm:$0xff]
      %v1377 = vld [vmem:[%s1372 + $0x20] sm:$0xff]
      %v1378 = vld [vmem:[%s1372 + $0x28] sm:$0xff]
      %v1379 = vld [vmem:[%s1372 + $0x30] sm:$0xff]
      %v1380 = vld [vmem:[%s1372 + $0x38] sm:$0xff]
      %v1381 = vld [vmem:[%s1372 + $0x40] sm:$0xff]
      %v1382 = vld [vmem:[%s1372 + $0x48] sm:$0xff]
      %v1383 = vld [vmem:[%s1372 + $0x50] sm:$0xff]
      %v1384 = vld [vmem:[%s1372 + $0x58] sm:$0xff]
      %v1385 = vld [vmem:[%s1372 + $0x60] sm:$0xff]
      %v1386 = vld [vmem:[%s1372 + $0x68] sm:$0xff]
      %v1387 = vld [vmem:[%s1372 + $0x70] sm:$0xff]
      %v1388 = vld [vmem:[%s1372 + $0x78] sm:$0xff]
      %v1389 = vld [vmem:[%s1372 + $0x80] sm:$0xff]
      %v1390 = vld [vmem:[%s1372 + $0x88] sm:$0xff]
      %v1391 = vld [vmem:[%s1372 + $0x90] sm:$0xff]
      %v1392 = vld [vmem:[%s1372 + $0x98] sm:$0xff]
      %v1393 = vld [vmem:[%s1372 + $0xa0] sm:$0xff]
      %v1394 = vld [vmem:[%s1372 + $0xa8] sm:$0xff]
      %v1395 = vld [vmem:[%s1372 + $0xb0] sm:$0xff]
      %v1396 = vld [vmem:[%s1372 + $0xb8] sm:$0xff]
      %v1397 = vsel %vm654, %v1349, 0.0
      %1398 = vadd.xlane.f32.xlu0 %v1397
      %v1399 = vpop.xlane.xlu0 %1398
      %v1400 = vmul.f32 %v1399, %v664
      %v1401 = vsub.f32 %v1349, %v1400
      %v1402 = vmul.f32 %v1401, %v1401
      %v1403 = vsel %vm654, %v1402, 0.0
      %1404 = vadd.xlane.f32.xlu0 %v1403
      %v1405 = vpop.xlane.xlu0 %1404
      %v1406 = vmul.f32 %v1405, %v664
      %v1407 = vadd.f32 %v1406, 1e-05
      %v1408 = vrsqrt.pop %v1407
      %v1409 = vmul.f32 %v1408, %v1407
      %v1410 = vmul.f32 %v1409, %v1408
      %v1411 = vmul.f32 0.5, %v1410
      %v1412 = vsub.f32 1.5, %v1411
      %v1413 = vmul.f32 %v1408, %v1412
      %vm1414 = vweird.f32 %v1407
      %vm1415 = vweird.f32 %v1408
      %vm1416 = vmor %vm1414, %vm1415
      %v1417 = vsel %vm1416, %v1408, %v1413
      %v1418 = vmul.f32 %v1401, %v1417
      %v1419 = vperm.slane %v1351, 0
      %v1420 = vmul.f32 %v1418, %v1419
      %v1421 = vperm.slane %v1351, 1
      %v1422 = vadd.f32 %v1420, %v1421
      %v1423 = vperm.slane %v1351, 4
      %v1424 = vperm.slane %v1352, 4
      %v1426 = vsel %vm760, %v1422, 0
      %1428 = vmatpush.msra.mxu0 0.0
      %1429 = vmatpush.msra.mxu0 0.0
      %1430 = vmatpush.msra.mxu0 0.0
      %1431 = vmatpush.msra.mxu0 0.0
      %1432 = vmatpush.msra.mxu0 0.0
      %1433 = vmatpush.msra.mxu0 0.0
      %1434 = vmatpush.msra.mxu0 0.0
      %1435 = vmatpush.msra.mxu0 0.0
      %1436 = vmatpush.msra.mxu0 0.0
      %1437 = vmatpush.msra.mxu0 0.0
      %1438 = vmatpush.msra.mxu0 %v1369
      %1439 = vmatpush.msra.mxu0 %v1366
      %1440 = vmatpush.msra.mxu0 %v1363
      %1441 = vmatpush.msra.mxu0 %v1360
      %1442 = vmatpush.msra.mxu0 %v1357
      %1443 = vmatpush.msra.mxu0 %v1354
      %1444 = vmatmul.f32.gmra.mxu0 %v1426
      %v1445 = vpop.f32.mrf.mxu0
      %v1446 = vadd.f32 %v1423, %v1445
      %1447 = vdwg.mxu0
      %1448 = vmatpush.msra.mxu0 0.0
      %1449 = vmatpush.msra.mxu0 0.0
      %1450 = vmatpush.msra.mxu0 0.0
      %1451 = vmatpush.msra.mxu0 0.0
      %1452 = vmatpush.msra.mxu0 0.0
      %1453 = vmatpush.msra.mxu0 0.0
      %1454 = vmatpush.msra.mxu0 0.0
      %1455 = vmatpush.msra.mxu0 0.0
      %1456 = vmatpush.msra.mxu0 0.0
      %1457 = vmatpush.msra.mxu0 0.0
      %1458 = vmatpush.msra.mxu0 %v1370
      %1459 = vmatpush.msra.mxu0 %v1367
      %1460 = vmatpush.msra.mxu0 %v1364
      %1461 = vmatpush.msra.mxu0 %v1361
      %1462 = vmatpush.msra.mxu0 %v1358
      %1463 = vmatpush.msra.mxu0 %v1355
      %1464 = vmatmul.f32.gmra.mxu0 %v1426
      %v1465 = vpop.f32.mrf.mxu0
      %v1466 = vadd.f32 %v1424, %v1465
      %1467 = vdwg.mxu0
      %1469 = vrot.lane.b32.xlu0 %v1446, 80
      %v1470 = vpop.permute.xlu0 %1469
      %v1471 = vsel %vm807, %v1446, 0
      %v1473 = vsel %vm807, %v1470, 0
      %1475 = vmatpush.xpose.msra.mxu0 0.0
      %1476 = vmatpush.xpose.msra.mxu0 0.0
      %1477 = vmatpush.xpose.msra.mxu0 0.0
      %1478 = vmatpush.xpose.msra.mxu0 0.0
      %1479 = vmatpush.xpose.msra.mxu0 0.0
      %1480 = vmatpush.xpose.msra.mxu0 0.0
      %1481 = vmatpush.xpose.msra.mxu0 0.0
      %1482 = vmatpush.xpose.msra.mxu0 0.0
      %1483 = vmatpush.xpose.msra.mxu0 0.0
      %1484 = vmatpush.xpose.msra.mxu0 0.0
      %1485 = vmatpush.xpose.msra.mxu0 0.0
      %1486 = vmatpush.xpose.msra.mxu0 0.0
      %1487 = vmatpush.xpose.msra.mxu0 0.0
      %1488 = vmatpush.xpose.msra.mxu0 0.0
      %1489 = vmatpush.xpose.msra.mxu0 0.0
      %1490 = vmatpush.xpose.msra.mxu0 %v1473
      %1491 = vmatmul.f32.gmra.mxu0 %v1471
      %v1492 = vpop.f32.mrf.mxu0
      %v1493 = vadd.f32 0.0, %v1492
      %1494 = vdwg.mxu0
      %v1495 = vmul.f32 %v1493, 0.28867513
      %v1496 = vsel %vm833, %v1495, -inf
      %1497 = vmax.xlane.f32.xlu0 %v1496
      %v1498 = vpop.xlane.xlu0 %1497
      %v1499 = vsub.f32 %v1495, %v1498
      %v1500 = vmul.f32 %v1499, 1.442695
      %v1501 = vpow.pop %v1500
      %v1502 = vsel %vm833, %v1501, 0.0
      %1503 = vadd.xlane.f32.xlu0 %v1502
      %v1504 = vpop.xlane.xlu0 %1503
      %v1505 = vrcp.pop %v1504
      %v1506 = vmul.f32 %v1501, %v1505
      %1507 = vrot.lane.b32.xlu0 %v1446, 32
      %v1508 = vpop.permute.xlu0 %1507
      %v1510 = vsel %vm847, %v1506, 0
      %v1512 = vsel %vm851, %v1508, 0
      %1514 = vmatpush.msra.mxu0 0.0
      %1515 = vmatpush.msra.mxu0 0.0
      %1516 = vmatpush.msra.mxu0 0.0
      %1517 = vmatpush.msra.mxu0 0.0
      %1518 = vmatpush.msra.mxu0 0.0
      %1519 = vmatpush.msra.mxu0 0.0
      %1520 = vmatpush.msra.mxu0 0.0
      %1521 = vmatpush.msra.mxu0 0.0
      %1522 = vmatpush.msra.mxu0 0.0
      %1523 = vmatpush.msra.mxu0 0.0
      %1524 = vmatpush.msra.mxu0 0.0
      %1525 = vmatpush.msra.mxu0 0.0
      %1526 = vmatpush.msra.mxu0 0.0
      %1527 = vmatpush.msra.mxu0 0.0
      %1528 = vmatpush.msra.mxu0 0.0
      %1529 = vmatpush.msra.mxu0 %v1512
      %1530 = vmatmul.f32.gmra.mxu0 %v1510
      %v1531 = vpop.f32.mrf.mxu0
      %v1532 = vadd.f32 0.0, %v1531
      %1533 = vdwg.mxu0
      %1534 = vrot.lane.b32.xlu0 %v1446, 116
      %v1535 = vpop.permute.xlu0 %1534
      %1536 = vrot.lane.b32.xlu0 %v1446, 68
      %v1537 = vpop.permute.xlu0 %1536
      %v1538 = vsel %vm807, %v1535, 0
      %v1540 = vsel %vm807, %v1537, 0
      %1542 = vmatpush.xpose.msra.mxu0 0.0
      %1543 = vmatpush.xpose.msra.mxu0 0.0
      %1544 = vmatpush.xpose.msra.mxu0 0.0
      %1545 = vmatpush.xpose.msra.mxu0 0.0
      %1546 = vmatpush.xpose.msra.mxu0 0.0
      %1547 = vmatpush.xpose.msra.mxu0 0.0
      %1548 = vmatpush.xpose.msra.mxu0 0.0
      %1549 = vmatpush.xpose.msra.mxu0 0.0
      %1550 = vmatpush.xpose.msra.mxu0 0.0
      %1551 = vmatpush.xpose.msra.mxu0 0.0
      %1552 = vmatpush.xpose.msra.mxu0 0.0
      %1553 = vmatpush.xpose.msra.mxu0 0.0
      %1554 = vmatpush.xpose.msra.mxu0 0.0
      %1555 = vmatpush.xpose.msra.mxu0 0.0
      %1556 = vmatpush.xpose.msra.mxu0 0.0
      %1557 = vmatpush.xpose.msra.mxu0 %v1540
      %1558 = vmatmul.f32.gmra.mxu0 %v1538
      %v1559 = vpop.f32.mrf.mxu0
      %v1560 = vadd.f32 0.0, %v1559
      %1561 = vdwg.mxu0
      %v1562 = vmul.f32 %v1560, 0.28867513
      %v1563 = vsel %vm833, %v1562, -inf
      %1564 = vmax.xlane.f32.xlu0 %v1563
      %v1565 = vpop.xlane.xlu0 %1564
      %v1566 = vsub.f32 %v1562, %v1565
      %v1567 = vmul.f32 %v1566, 1.442695
      %v1568 = vpow.pop %v1567
      %v1569 = vsel %vm833, %v1568, 0.0
      %1570 = vadd.xlane.f32.xlu0 %v1569
      %v1571 = vpop.xlane.xlu0 %1570
      %v1572 = vrcp.pop %v1571
      %v1573 = vmul.f32 %v1568, %v1572
      %1574 = vrot.lane.b32.xlu0 %v1446, 20
      %v1575 = vpop.permute.xlu0 %1574
      %v1577 = vsel %vm847, %v1573, 0
      %v1579 = vsel %vm851, %v1575, 0
      %1581 = vmatpush.msra.mxu0 0.0
      %1582 = vmatpush.msra.mxu0 0.0
      %1583 = vmatpush.msra.mxu0 0.0
      %1584 = vmatpush.msra.mxu0 0.0
      %1585 = vmatpush.msra.mxu0 0.0
      %1586 = vmatpush.msra.mxu0 0.0
      %1587 = vmatpush.msra.mxu0 0.0
      %1588 = vmatpush.msra.mxu0 0.0
      %1589 = vmatpush.msra.mxu0 0.0
      %1590 = vmatpush.msra.mxu0 0.0
      %1591 = vmatpush.msra.mxu0 0.0
      %1592 = vmatpush.msra.mxu0 0.0
      %1593 = vmatpush.msra.mxu0 0.0
      %1594 = vmatpush.msra.mxu0 0.0
      %1595 = vmatpush.msra.mxu0 0.0
      %1596 = vmatpush.msra.mxu0 %v1579
      %1597 = vmatmul.f32.gmra.mxu0 %v1577
      %v1598 = vpop.f32.mrf.mxu0
      %v1599 = vadd.f32 0.0, %v1598
      %1600 = vdwg.mxu0
      %1601 = vrot.lane.b32.xlu0 %v1446, 104
      %v1602 = vpop.permute.xlu0 %1601
      %1603 = vrot.lane.b32.xlu0 %v1446, 56
      %v1604 = vpop.permute.xlu0 %1603
      %v1605 = vsel %vm807, %v1602, 0
      %v1607 = vsel %vm807, %v1604, 0
      %1609 = vmatpush.xpose.msra.mxu0 0.0
      %1610 = vmatpush.xpose.msra.mxu0 0.0
      %1611 = vmatpush.xpose.msra.mxu0 0.0
      %1612 = vmatpush.xpose.msra.mxu0 0.0
      %1613 = vmatpush.xpose.msra.mxu0 0.0
      %1614 = vmatpush.xpose.msra.mxu0 0.0
      %1615 = vmatpush.xpose.msra.mxu0 0.0
      %1616 = vmatpush.xpose.msra.mxu0 0.0
      %1617 = vmatpush.xpose.msra.mxu0 0.0
      %1618 = vmatpush.xpose.msra.mxu0 0.0
      %1619 = vmatpush.xpose.msra.mxu0 0.0
      %1620 = vmatpush.xpose.msra.mxu0 0.0
      %1621 = vmatpush.xpose.msra.mxu0 0.0
      %1622 = vmatpush.xpose.msra.mxu0 0.0
      %1623 = vmatpush.xpose.msra.mxu0 0.0
      %1624 = vmatpush.xpose.msra.mxu0 %v1607
      %1625 = vmatmul.f32.gmra.mxu0 %v1605
      %v1626 = vpop.f32.mrf.mxu0
      %v1627 = vadd.f32 0.0, %v1626
      %1628 = vdwg.mxu0
      %v1629 = vmul.f32 %v1627, 0.28867513
      %v1630 = vsel %vm833, %v1629, -inf
      %1631 = vmax.xlane.f32.xlu0 %v1630
      %v1632 = vpop.xlane.xlu0 %1631
      %v1633 = vsub.f32 %v1629, %v1632
      %v1634 = vmul.f32 %v1633, 1.442695
      %v1635 = vpow.pop %v1634
      %v1636 = vsel %vm833, %v1635, 0.0
      %1637 = vadd.xlane.f32.xlu0 %v1636
      %v1638 = vpop.xlane.xlu0 %1637
      %v1639 = vrcp.pop %v1638
      %v1640 = vmul.f32 %v1635, %v1639
      %1642 = vrot.lane.b32.xlu0 %v1446, 8
      %v1643 = vpop.permute.xlu0 %1642
      %1644 = vrot.lane.b32.xlu0 %v1466, 8
      %v1645 = vpop.permute.xlu0 %1644
      %v1646 = vsel %vm986, %v1643, %v1645
      %v1648 = vsel %vm847, %v1640, 0
      %v1650 = vsel %vm851, %v1646, 0
      %1652 = vmatpush.msra.mxu0 0.0
      %1653 = vmatpush.msra.mxu0 0.0
      %1654 = vmatpush.msra.mxu0 0.0
      %1655 = vmatpush.msra.mxu0 0.0
      %1656 = vmatpush.msra.mxu0 0.0
      %1657 = vmatpush.msra.mxu0 0.0
      %1658 = vmatpush.msra.mxu0 0.0
      %1659 = vmatpush.msra.mxu0 0.0
      %1660 = vmatpush.msra.mxu0 0.0
      %1661 = vmatpush.msra.mxu0 0.0
      %1662 = vmatpush.msra.mxu0 0.0
      %1663 = vmatpush.msra.mxu0 0.0
      %1664 = vmatpush.msra.mxu0 0.0
      %1665 = vmatpush.msra.mxu0 0.0
      %1666 = vmatpush.msra.mxu0 0.0
      %1667 = vmatpush.msra.mxu0 %v1650
      %1668 = vmatmul.f32.gmra.mxu0 %v1648
      %v1669 = vpop.f32.mrf.mxu0
      %v1670 = vadd.f32 0.0, %v1669
      %1671 = vdwg.mxu0
      %1672 = vrot.lane.b32.xlu0 %v1446, 92
      %v1673 = vpop.permute.xlu0 %1672
      %1674 = vrot.lane.b32.xlu0 %v1446, 44
      %v1675 = vpop.permute.xlu0 %1674
      %v1676 = vsel %vm807, %v1673, 0
      %v1678 = vsel %vm807, %v1675, 0
      %1680 = vmatpush.xpose.msra.mxu0 0.0
      %1681 = vmatpush.xpose.msra.mxu0 0.0
      %1682 = vmatpush.xpose.msra.mxu0 0.0
      %1683 = vmatpush.xpose.msra.mxu0 0.0
      %1684 = vmatpush.xpose.msra.mxu0 0.0
      %1685 = vmatpush.xpose.msra.mxu0 0.0
      %1686 = vmatpush.xpose.msra.mxu0 0.0
      %1687 = vmatpush.xpose.msra.mxu0 0.0
      %1688 = vmatpush.xpose.msra.mxu0 0.0
      %1689 = vmatpush.xpose.msra.mxu0 0.0
      %1690 = vmatpush.xpose.msra.mxu0 0.0
      %1691 = vmatpush.xpose.msra.mxu0 0.0
      %1692 = vmatpush.xpose.msra.mxu0 0.0
      %1693 = vmatpush.xpose.msra.mxu0 0.0
      %1694 = vmatpush.xpose.msra.mxu0 0.0
      %1695 = vmatpush.xpose.msra.mxu0 %v1678
      %1696 = vmatmul.f32.gmra.mxu0 %v1676
      %v1697 = vpop.f32.mrf.mxu0
      %v1698 = vadd.f32 0.0, %v1697
      %1699 = vdwg.mxu0
      %v1700 = vmul.f32 %v1698, 0.28867513
      %v1701 = vsel %vm833, %v1700, -inf
      %1702 = vmax.xlane.f32.xlu0 %v1701
      %v1703 = vpop.xlane.xlu0 %1702
      %v1704 = vsub.f32 %v1700, %v1703
      %v1705 = vmul.f32 %v1704, 1.442695
      %v1706 = vpow.pop %v1705
      %v1707 = vsel %vm833, %v1706, 0.0
      %1708 = vadd.xlane.f32.xlu0 %v1707
      %v1709 = vpop.xlane.xlu0 %1708
      %v1710 = vrcp.pop %v1709
      %v1711 = vmul.f32 %v1706, %v1710
      %1712 = vrot.lane.b32.xlu0 %v1466, 124
      %v1713 = vpop.permute.xlu0 %1712
      %v1715 = vsel %vm847, %v1711, 0
      %v1717 = vsel %vm851, %v1713, 0
      %1719 = vmatpush.msra.mxu0 0.0
      %1720 = vmatpush.msra.mxu0 0.0
      %1721 = vmatpush.msra.mxu0 0.0
      %1722 = vmatpush.msra.mxu0 0.0
      %1723 = vmatpush.msra.mxu0 0.0
      %1724 = vmatpush.msra.mxu0 0.0
      %1725 = vmatpush.msra.mxu0 0.0
      %1726 = vmatpush.msra.mxu0 0.0
      %1727 = vmatpush.msra.mxu0 0.0
      %1728 = vmatpush.msra.mxu0 0.0
      %1729 = vmatpush.msra.mxu0 0.0
      %1730 = vmatpush.msra.mxu0 0.0
      %1731 = vmatpush.msra.mxu0 0.0
      %1732 = vmatpush.msra.mxu0 0.0
      %1733 = vmatpush.msra.mxu0 0.0
      %1734 = vmatpush.msra.mxu0 %v1717
      %1735 = vmatmul.f32.gmra.mxu0 %v1715
      %v1736 = vpop.f32.mrf.mxu0
      %v1737 = vadd.f32 0.0, %v1736
      %1738 = vdwg.mxu0
      %1740 = vrot.lane.b32.xlu0 %v1599, 12
      %v1741 = vpop.permute.xlu0 %1740
      %1744 = vrot.lane.b32.xlu0 %v1670, 24
      %v1745 = vpop.permute.xlu0 %1744
      %1748 = vrot.lane.b32.xlu0 %v1737, 36
      %v1749 = vpop.permute.xlu0 %1748
      %v1751 = vsel %vm807, %v1532, %v1741
      %v1752 = vsel %vm1093, %v1751, %v1745
      %v1753 = vsel %vm1095, %v1752, %v1749
      %v1754 = vperm.slane %v1351, 5
      %1761 = vrot.lane.b32.xlu0 %v1355, 112
      %v1762 = vpop.permute.xlu0 %1761
      %1763 = vrot.lane.b32.xlu0 %v1358, 112
      %v1764 = vpop.permute.xlu0 %1763
      %1765 = vrot.lane.b32.xlu0 %v1361, 112
      %v1766 = vpop.permute.xlu0 %1765
      %1767 = vrot.lane.b32.xlu0 %v1364, 112
      %v1768 = vpop.permute.xlu0 %1767
      %1769 = vrot.lane.b32.xlu0 %v1367, 112
      %v1770 = vpop.permute.xlu0 %1769
      %1771 = vrot.lane.b32.xlu0 %v1370, 112
      %v1772 = vpop.permute.xlu0 %1771
      %v1780 = vsel %vm760, %v1753, 0
      %1782 = vmatpush.msra.mxu0 0.0
      %1783 = vmatpush.msra.mxu0 0.0
      %1784 = vmatpush.msra.mxu0 0.0
      %1785 = vmatpush.msra.mxu0 0.0
      %1786 = vmatpush.msra.mxu0 0.0
      %1787 = vmatpush.msra.mxu0 0.0
      %1788 = vmatpush.msra.mxu0 0.0
      %1789 = vmatpush.msra.mxu0 0.0
      %1790 = vmatpush.msra.mxu0 0.0
      %1791 = vmatpush.msra.mxu0 0.0
      %1792 = vmatpush.msra.mxu0 %v1772
      %1793 = vmatpush.msra.mxu0 %v1770
      %1794 = vmatpush.msra.mxu0 %v1768
      %1795 = vmatpush.msra.mxu0 %v1766
      %1796 = vmatpush.msra.mxu0 %v1764
      %1797 = vmatpush.msra.mxu0 %v1762
      %1798 = vmatmul.f32.gmra.mxu0 %v1780
      %v1799 = vpop.f32.mrf.mxu0
      %v1800 = vadd.f32 %v1754, %v1799
      %1801 = vdwg.mxu0
      %v1802 = vadd.f32 %v1349, %v1800
      %v1803 = vsel %vm654, %v1802, 0.0
      %1804 = vadd.xlane.f32.xlu0 %v1803
      %v1805 = vpop.xlane.xlu0 %1804
      %v1806 = vmul.f32 %v1805, %v664
      %v1807 = vsub.f32 %v1802, %v1806
      %v1808 = vmul.f32 %v1807, %v1807
      %v1809 = vsel %vm654, %v1808, 0.0
      %1810 = vadd.xlane.f32.xlu0 %v1809
      %v1811 = vpop.xlane.xlu0 %1810
      %v1812 = vmul.f32 %v1811, %v664
      %v1813 = vadd.f32 %v1812, 1e-05
      %v1814 = vrsqrt.pop %v1813
      %v1815 = vmul.f32 %v1814, %v1813
      %v1816 = vmul.f32 %v1815, %v1814
      %v1817 = vmul.f32 0.5, %v1816
      %v1818 = vsub.f32 1.5, %v1817
      %v1819 = vmul.f32 %v1814, %v1818
      %vm1820 = vweird.f32 %v1813
      %vm1821 = vweird.f32 %v1814
      %vm1822 = vmor %vm1820, %vm1821
      %v1823 = vsel %vm1822, %v1814, %v1819
      %v1824 = vmul.f32 %v1807, %v1823
      %v1825 = vperm.slane %v1351, 2
      %v1826 = vmul.f32 %v1824, %v1825
      %v1827 = vperm.slane %v1351, 3
      %v1828 = vadd.f32 %v1826, %v1827
      %v1829 = vperm.slane %v1351, 6
      %v1830 = vperm.slane %v1352, 6
      %1837 = vrot.lane.b32.xlu0 %v1355, 64
      %v1838 = vpop.permute.xlu0 %1837
      %1839 = vrot.lane.b32.xlu0 %v1356, 64
      %v1840 = vpop.permute.xlu0 %1839
      %1841 = vrot.lane.b32.xlu0 %v1358, 64
      %v1842 = vpop.permute.xlu0 %1841
      %1843 = vrot.lane.b32.xlu0 %v1359, 64
      %v1844 = vpop.permute.xlu0 %1843
      %1845 = vrot.lane.b32.xlu0 %v1361, 64
      %v1846 = vpop.permute.xlu0 %1845
      %1847 = vrot.lane.b32.xlu0 %v1362, 64
      %v1848 = vpop.permute.xlu0 %1847
      %1849 = vrot.lane.b32.xlu0 %v1364, 64
      %v1850 = vpop.permute.xlu0 %1849
      %1851 = vrot.lane.b32.xlu0 %v1365, 64
      %v1852 = vpop.permute.xlu0 %1851
      %1853 = vrot.lane.b32.xlu0 %v1367, 64
      %v1854 = vpop.permute.xlu0 %1853
      %1855 = vrot.lane.b32.xlu0 %v1368, 64
      %v1856 = vpop.permute.xlu0 %1855
      %1857 = vrot.lane.b32.xlu0 %v1370, 64
      %v1858 = vpop.permute.xlu0 %1857
      %1859 = vrot.lane.b32.xlu0 %v1371, 64
      %v1860 = vpop.permute.xlu0 %1859
      %v1861 = vsel %vm606, %v1838, %v1840
      %v1862 = vsel %vm606, %v1842, %v1844
      %v1863 = vsel %vm606, %v1846, %v1848
      %v1864 = vsel %vm606, %v1850, %v1852
      %v1865 = vsel %vm606, %v1854, %v1856
      %v1866 = vsel %vm606, %v1858, %v1860
      %v1880 = vsel %vm760, %v1828, 0
      %1882 = vmatpush.msra.mxu0 0.0
      %1883 = vmatpush.msra.mxu0 0.0
      %1884 = vmatpush.msra.mxu0 0.0
      %1885 = vmatpush.msra.mxu0 0.0
      %1886 = vmatpush.msra.mxu0 0.0
      %1887 = vmatpush.msra.mxu0 0.0
      %1888 = vmatpush.msra.mxu0 0.0
      %1889 = vmatpush.msra.mxu0 0.0
      %1890 = vmatpush.msra.mxu0 0.0
      %1891 = vmatpush.msra.mxu0 0.0
      %1892 = vmatpush.msra.mxu0 %v1866
      %1893 = vmatpush.msra.mxu0 %v1865
      %1894 = vmatpush.msra.mxu0 %v1864
      %1895 = vmatpush.msra.mxu0 %v1863
      %1896 = vmatpush.msra.mxu0 %v1862
      %1897 = vmatpush.msra.mxu0 %v1861
      %1898 = vmatmul.f32.gmra.mxu0 %v1880
      %v1899 = vpop.f32.mrf.mxu0
      %v1900 = vadd.f32 %v1829, %v1899
      %1901 = vdwg.mxu0
      %1902 = vmatpush.msra.mxu0 0.0
      %1903 = vmatpush.msra.mxu0 0.0
      %1904 = vmatpush.msra.mxu0 0.0
      %1905 = vmatpush.msra.mxu0 0.0
      %1906 = vmatpush.msra.mxu0 0.0
      %1907 = vmatpush.msra.mxu0 0.0
      %1908 = vmatpush.msra.mxu0 0.0
      %1909 = vmatpush.msra.mxu0 0.0
      %1910 = vmatpush.msra.mxu0 0.0
      %1911 = vmatpush.msra.mxu0 0.0
      %1912 = vmatpush.msra.mxu0 %v1860
      %1913 = vmatpush.msra.mxu0 %v1856
      %1914 = vmatpush.msra.mxu0 %v1852
      %1915 = vmatpush.msra.mxu0 %v1848
      %1916 = vmatpush.msra.mxu0 %v1844
      %1917 = vmatpush.msra.mxu0 %v1840
      %1918 = vmatmul.f32.gmra.mxu0 %v1880
      %v1919 = vpop.f32.mrf.mxu0
      %v1920 = vadd.f32 %v1830, %v1919
      %1921 = vdwg.mxu0
      %v1922 = vmul.f32 %v1900, -1.702
      %v1923 = vmul.f32 %v1920, -1.702
      %v1924 = vmul.f32 %v1922, 1.442695
      %v1925 = vpow.pop %v1924
      %v1926 = vmul.f32 %v1923, 1.442695
      %v1927 = vpow.pop %v1926
      %v1928 = vadd.f32 %v1925, 1.0
      %v1929 = vadd.f32 %v1927, 1.0
      %v1930 = vrcp.pop %v1928
      %v1931 = vmul.f32 %v1928, %v1930
      %v1932 = vsub.f32 1.0, %v1931
      %v1933 = vmul.f32 %v1930, %v1932
      %v1934 = vadd.f32 %v1930, %v1933
      %vm1935 = vweird.f32 %v1928
      %vm1936 = vweird.f32 %v1930
      %vm1937 = vmor %vm1935, %vm1936
      %v1938 = vsel %vm1937, %v1930, %v1934
      %v1939 = vand.u32 2147483647, %v1928
      %vm1940 = vcmp.eq.f32.partialorder %v1939, 8.507059e+37
      %v1941 = vand.u32 %v1928, 2147483648
      %v1942 = vor.u32 1.1754944e-38, %v1941
      %v1943 = vsel %vm1940, %v1942, %v1938
      %v1944 = vmul.f32 1.0, %v1943
      %v1945 = vrcp.pop %v1929
      %v1946 = vmul.f32 %v1929, %v1945
      %v1947 = vsub.f32 1.0, %v1946
      %v1948 = vmul.f32 %v1945, %v1947
      %v1949 = vadd.f32 %v1945, %v1948
      %vm1950 = vweird.f32 %v1929
      %vm1951 = vweird.f32 %v1945
      %vm1952 = vmor %vm1950, %vm1951
      %v1953 = vsel %vm1952, %v1945, %v1949
      %v1954 = vand.u32 2147483647, %v1929
      %vm1955 = vcmp.eq.f32.partialorder %v1954, 8.507059e+37
      %v1956 = vand.u32 %v1929, 2147483648
      %v1957 = vor.u32 1.1754944e-38, %v1956
      %v1958 = vsel %vm1955, %v1957, %v1953
      %v1959 = vmul.f32 1.0, %v1958
      %v1960 = vmul.f32 %v1900, %v1944
      %v1961 = vmul.f32 %v1920, %v1959
      %v1962 = vperm.slane %v1351, 7
      %v1964 = vsel %vm606, %v1961, 0
      %1966 = vmatpush.msra.mxu0 %v1388
      %1967 = vmatpush.msra.mxu0 %v1387
      %1968 = vmatpush.msra.mxu0 %v1386
      %1969 = vmatpush.msra.mxu0 %v1385
      %1970 = vmatpush.msra.mxu0 %v1384
      %1971 = vmatpush.msra.mxu0 %v1383
      %1972 = vmatpush.msra.mxu0 %v1382
      %1973 = vmatpush.msra.mxu0 %v1381
      %1974 = vmatpush.msra.mxu0 %v1380
      %1975 = vmatpush.msra.mxu0 %v1379
      %1976 = vmatpush.msra.mxu0 %v1378
      %1977 = vmatpush.msra.mxu0 %v1377
      %1978 = vmatpush.msra.mxu0 %v1376
      %1979 = vmatpush.msra.mxu0 %v1375
      %1980 = vmatpush.msra.mxu0 %v1374
      %1981 = vmatpush.msra.mxu0 %v1373
      %1982 = vmatmul.f32.gmra.mxu0 %v1960
      %v1983 = vpop.f32.mrf.mxu0
      %v1984 = vadd.f32 %v1962, %v1983
      %1985 = vdwg.mxu0
      %1986 = vmatpush.msra.mxu0 0.0
      %1987 = vmatpush.msra.mxu0 0.0
      %1988 = vmatpush.msra.mxu0 0.0
      %1989 = vmatpush.msra.mxu0 0.0
      %1990 = vmatpush.msra.mxu0 0.0
      %1991 = vmatpush.msra.mxu0 0.0
      %1992 = vmatpush.msra.mxu0 0.0
      %1993 = vmatpush.msra.mxu0 0.0
      %1994 = vmatpush.msra.mxu0 %v1396
      %1995 = vmatpush.msra.mxu0 %v1395
      %1996 = vmatpush.msra.mxu0 %v1394
      %1997 = vmatpush.msra.mxu0 %v1393
      %1998 = vmatpush.msra.mxu0 %v1392
      %1999 = vmatpush.msra.mxu0 %v1391
      %2000 = vmatpush.msra.mxu0 %v1390
      %2001 = vmatpush.msra.mxu0 %v1389
      %2002 = vmatmul.f32.gmra.mxu0 %v1964
      %v2003 = vpop.f32.mrf.mxu0
      %v2004 = vadd.f32 %v1984, %v2003
      %2005 = vdwg.mxu0
      %v2006 = vadd.f32 %v1802, %v2004
      %v2007 = vperm.slane %v501, 0
      %v2009 = vrot.slane %v2006, 1
      %v2010 = vsel %vm760, %v2009, 0
      %2012 = vmatpush.msra.mxu0 0.0
      %2013 = vmatpush.msra.mxu0 0.0
      %2014 = vmatpush.msra.mxu0 0.0
      %2015 = vmatpush.msra.mxu0 0.0
      %2016 = vmatpush.msra.mxu0 0.0
      %2017 = vmatpush.msra.mxu0 0.0
      %2018 = vmatpush.msra.mxu0 0.0
      %2019 = vmatpush.msra.mxu0 0.0
      %2020 = vmatpush.msra.mxu0 0.0
      %2021 = vmatpush.msra.mxu0 0.0
      %2022 = vmatpush.msra.mxu0 %v495
      %2023 = vmatpush.msra.mxu0 %v494
      %2024 = vmatpush.msra.mxu0 %v493
      %2025 = vmatpush.msra.mxu0 %v492
      %2026 = vmatpush.msra.mxu0 %v491
      %2027 = vmatpush.msra.mxu0 %v490
      %2028 = vmatmul.f32.gmra.mxu0 %v2010
      %v2029 = vpop.f32.mrf.mxu0
      %v2030 = vadd.f32 %v2007, %v2029
      %2031 = vdwg.mxu0
      %v2033 = vrot.slane %v571, 4
      %v2035 = vsel %vm520, %v2030, %v2033
      %v2036 = vld [vmem:[%s9] sm:$0xff]
      %v2037 = vld [vmem:[%s10] sm:$0xff]
      %v2038 = vld [vmem:[%s10 + $0x8] sm:$0xff]
      %v2039 = vld [vmem:[%s10 + $0x10] sm:$0xff]
      %v2040 = vld [vmem:[%s10 + $0x18] sm:$0xff]
      %v2041 = vld [vmem:[%s10 + $0x20] sm:$0xff]
      %v2042 = vld [vmem:[%s10 + $0x28] sm:$0xff]
      %v2043 = vld [vmem:[%s10 + $0x30] sm:$0xff]
      %v2044 = vld [vmem:[%s10 + $0x38] sm:$0xff]
      %v2045 = vld [vmem:[%s11] sm:$0xff]
      %v2046 = vld [vmem:[%s11 + $0x8] sm:$0xff]
      %v2047 = vld [vmem:[%s11 + $0x10] sm:$0xff]
      %v2048 = vld [vmem:[%s11 + $0x18] sm:$0xff]
      %v2049 = vld [vmem:[%s11 + $0x20] sm:$0xff]
      %v2050 = vld [vmem:[%s11 + $0x28] sm:$0xff]
      %v2051 = vld [vmem:[%s11 + $0x30] sm:$0xff]
      %v2052 = vld [vmem:[%s11 + $0x38] sm:$0xff]
      %v2053 = vsel %vm546, %v2035, 0.0
      %2054 = vadd.xlane.f32.xlu0 %v2053
      %v2055 = vpop.xlane.xlu0 %2054
      %vm2056 = vcmask 257024
      %v2057 = vsel %vm2056, %v2033, 0.0
      %2058 = vadd.xlane.f32.xlu0 %v2057
      %v2059 = vpop.xlane.xlu0 %2058
      %v2060 = vrcp.pop 32.0
      %v2061 = vmul.f32 32.0, %v2060
      %v2062 = vsub.f32 1.0, %v2061
      %v2063 = vmul.f32 %v2060, %v2062
      %v2064 = vadd.f32 %v2060, %v2063
      %vm2065 = vweird.f32 %v2060
      %v2066 = vsel %vm2065, %v2060, %v2064
      %v2067 = vmul.f32 %v2055, %v2066
      %v2068 = vmul.f32 %v2059, %v2066
      %v2069 = vsub.f32 %v2035, %v2067
      %v2070 = vsub.f32 %v2033, %v2068
      %v2071 = vmul.f32 %v2069, %v2069
      %v2072 = vmul.f32 %v2070, %v2070
      %v2073 = vsel %vm546, %v2071, 0.0
      %2074 = vadd.xlane.f32.xlu0 %v2073
      %v2075 = vpop.xlane.xlu0 %2074
      %v2076 = vsel %vm2056, %v2072, 0.0
      %2077 = vadd.xlane.f32.xlu0 %v2076
      %v2078 = vpop.xlane.xlu0 %2077
      %v2079 = vmul.f32 %v2075, %v2066
      %v2080 = vmul.f32 %v2078, %v2066
      %v2081 = vadd.f32 %v2079, 1e-05
      %v2082 = vadd.f32 %v2080, 1e-05
      %v2083 = vrsqrt.pop %v2081
      %v2084 = vmul.f32 %v2083, %v2081
      %v2085 = vmul.f32 %v2084, %v2083
      %v2086 = vmul.f32 0.5, %v2085
      %v2087 = vsub.f32 1.5, %v2086
      %v2088 = vmul.f32 %v2083, %v2087
      %vm2089 = vweird.f32 %v2081
      %vm2090 = vweird.f32 %v2083
      %vm2091 = vmor %vm2089, %vm2090
      %v2092 = vsel %vm2091, %v2083, %v2088
      %v2093 = vrsqrt.pop %v2082
      %v2094 = vmul.f32 %v2093, %v2082
      %v2095 = vmul.f32 %v2094, %v2093
      %v2096 = vmul.f32 0.5, %v2095
      %v2097 = vsub.f32 1.5, %v2096
      %v2098 = vmul.f32 %v2093, %v2097
      %vm2099 = vweird.f32 %v2082
      %vm2100 = vweird.f32 %v2093
      %vm2101 = vmor %vm2099, %vm2100
      %v2102 = vsel %vm2101, %v2093, %v2098
      %v2103 = vmul.f32 %v2069, %v2092
      %v2104 = vmul.f32 %v2070, %v2102
      %v2105 = vperm.slane %v2036, 0
      %v2106 = vmul.f32 %v2103, %v2105
      %v2107 = vmul.f32 %v2104, %v2105
      %v2108 = vperm.slane %v2036, 1
      %v2109 = vadd.f32 %v2106, %v2108
      %v2110 = vadd.f32 %v2107, %v2108
      %v2111 = vperm.slane %v2036, 4
      %v2113 = vsel %vm546, %v2109, 0
      %v2116 = vsel %vm546, %v2110, 0
      %2118 = vmatpush.msra.mxu0 0.0
      %2119 = vmatpush.msra.mxu0 0.0
      %2120 = vmatpush.msra.mxu0 0.0
      %2121 = vmatpush.msra.mxu0 0.0
      %2122 = vmatpush.msra.mxu0 0.0
      %2123 = vmatpush.msra.mxu0 0.0
      %2124 = vmatpush.msra.mxu0 0.0
      %2125 = vmatpush.msra.mxu0 0.0
      %2126 = vmatpush.msra.mxu0 0.0
      %2127 = vmatpush.msra.mxu0 0.0
      %2128 = vmatpush.msra.mxu0 0.0
      %2129 = vmatpush.msra.mxu0 0.0
      %2130 = vmatpush.msra.mxu0 %v2043
      %2131 = vmatpush.msra.mxu0 %v2041
      %2132 = vmatpush.msra.mxu0 %v2039
      %2133 = vmatpush.msra.mxu0 %v2037
      %2134 = vmatmul.f32.gmra.mxu0 %v2113
      %v2135 = vpop.f32.mrf.mxu0
      %v2136 = vadd.f32 %v2111, %v2135
      %2137 = vmatmul.f32.gmra.mxu0 %v2116
      %v2138 = vpop.f32.mrf.mxu0
      %v2139 = vadd.f32 %v2111, %v2138
      %2140 = vdwg.mxu0
      %2143 = vrot.lane.b32.xlu0 %v2136, 96
      %v2144 = vpop.permute.xlu0 %2143
      %2145 = vrot.lane.b32.xlu0 %v2139, 96
      %v2146 = vpop.permute.xlu0 %2145
      %v2147 = vsel %vm986, %v2136, 0
      %v2149 = vsel %vm986, %v2139, 0
      %v2151 = vsel %vm986, %v2144, 0
      %v2153 = vsel %vm986, %v2146, 0
      %2155 = vmatpush.xpose.msra.mxu0 0.0
      %2156 = vmatpush.xpose.msra.mxu0 0.0
      %2157 = vmatpush.xpose.msra.mxu0 0.0
      %2158 = vmatpush.xpose.msra.mxu0 0.0
      %2159 = vmatpush.xpose.msra.mxu0 0.0
      %2160 = vmatpush.xpose.msra.mxu0 0.0
      %2161 = vmatpush.xpose.msra.mxu0 0.0
      %2162 = vmatpush.xpose.msra.mxu0 0.0
      %2163 = vmatpush.xpose.msra.mxu0 0.0
      %2164 = vmatpush.xpose.msra.mxu0 0.0
      %2165 = vmatpush.xpose.msra.mxu0 0.0
      %2166 = vmatpush.xpose.msra.mxu0 0.0
      %2167 = vmatpush.xpose.msra.mxu0 0.0
      %2168 = vmatpush.xpose.msra.mxu0 0.0
      %2169 = vmatpush.xpose.msra.mxu0 %v2153
      %2170 = vmatpush.xpose.msra.mxu0 %v2151
      %2171 = vmatmul.f32.gmra.mxu0 %v2147
      %v2172 = vpop.f32.mrf.mxu0
      %v2173 = vadd.f32 0.0, %v2172
      %2174 = vmatmul.f32.gmra.mxu0 %v2149
      %v2175 = vpop.f32.mrf.mxu0
      %v2176 = vadd.f32 0.0, %v2175
      %2177 = vdwg.mxu0
      %v2178 = vmul.f32 %v2173, 0.35355338
      %v2179 = vmul.f32 %v2176, 0.35355338
      %v2180 = vsel %vm807, %v2178, -inf
      %2181 = vmax.xlane.f32.xlu0 %v2180
      %v2182 = vpop.xlane.xlu0 %2181
      %vm2183 = vcmask 93184
      %v2184 = vsel %vm2183, %v2179, -inf
      %2185 = vmax.xlane.f32.xlu0 %v2184
      %v2186 = vpop.xlane.xlu0 %2185
      %v2187 = vsub.f32 %v2178, %v2182
      %v2188 = vsub.f32 %v2179, %v2186
      %v2189 = vmul.f32 %v2187, 1.442695
      %v2190 = vpow.pop %v2189
      %v2191 = vmul.f32 %v2188, 1.442695
      %v2192 = vpow.pop %v2191
      %v2193 = vsel %vm807, %v2190, 0.0
      %2194 = vadd.xlane.f32.xlu0 %v2193
      %v2195 = vpop.xlane.xlu0 %2194
      %v2196 = vsel %vm2183, %v2192, 0.0
      %2197 = vadd.xlane.f32.xlu0 %v2196
      %v2198 = vpop.xlane.xlu0 %2197
      %v2199 = vrcp.pop %v2195
      %v2200 = vrcp.pop %v2198
      %v2201 = vmul.f32 %v2190, %v2199
      %v2202 = vmul.f32 %v2192, %v2200
      %2203 = vrot.lane.b32.xlu0 %v2136, 64
      %v2204 = vpop.permute.xlu0 %2203
      %2205 = vrot.lane.b32.xlu0 %v2139, 64
      %v2206 = vpop.permute.xlu0 %2205
      %v2209 = vsel %vm807, %v2201, 0
      %v2212 = vsel %vm807, %v2202, 0
      %v2214 = vsel %vm520, %v2206, 0
      %2216 = vmatpush.msra.mxu0 0.0
      %2217 = vmatpush.msra.mxu0 0.0
      %2218 = vmatpush.msra.mxu0 0.0
      %2219 = vmatpush.msra.mxu0 0.0
      %2220 = vmatpush.msra.mxu0 0.0
      %2221 = vmatpush.msra.mxu0 0.0
      %2222 = vmatpush.msra.mxu0 0.0
      %2223 = vmatpush.msra.mxu0 0.0
      %2224 = vmatpush.msra.mxu0 0.0
      %2225 = vmatpush.msra.mxu0 0.0
      %2226 = vmatpush.msra.mxu0 0.0
      %2227 = vmatpush.msra.mxu0 0.0
      %2228 = vmatpush.msra.mxu0 0.0
      %2229 = vmatpush.msra.mxu0 0.0
      %2230 = vmatpush.msra.mxu0 %v2214
      %2231 = vmatpush.msra.mxu0 %v2204
      %2232 = vmatmul.f32.gmra.mxu0 %v2209
      %v2233 = vpop.f32.mrf.mxu0
      %v2234 = vadd.f32 0.0, %v2233
      %2235 = vmatmul.f32.gmra.mxu0 %v2212
      %v2236 = vpop.f32.mrf.mxu0
      %v2237 = vadd.f32 0.0, %v2236
      %2238 = vdwg.mxu0
      %2239 = vrot.lane.b32.xlu0 %v2136, 120
      %v2240 = vpop.permute.xlu0 %2239
      %2241 = vrot.lane.b32.xlu0 %v2139, 120
      %v2242 = vpop.permute.xlu0 %2241
      %2243 = vrot.lane.b32.xlu0 %v2136, 88
      %v2244 = vpop.permute.xlu0 %2243
      %2245 = vrot.lane.b32.xlu0 %v2139, 88
      %v2246 = vpop.permute.xlu0 %2245
      %v2247 = vsel %vm986, %v2240, 0
      %v2249 = vsel %vm986, %v2242, 0
      %v2251 = vsel %vm986, %v2244, 0
      %v2253 = vsel %vm986, %v2246, 0
      %2255 = vmatpush.xpose.msra.mxu0 0.0
      %2256 = vmatpush.xpose.msra.mxu0 0.0
      %2257 = vmatpush.xpose.msra.mxu0 0.0
      %2258 = vmatpush.xpose.msra.mxu0 0.0
      %2259 = vmatpush.xpose.msra.mxu0 0.0
      %2260 = vmatpush.xpose.msra.mxu0 0.0
      %2261 = vmatpush.xpose.msra.mxu0 0.0
      %2262 = vmatpush.xpose.msra.mxu0 0.0
      %2263 = vmatpush.xpose.msra.mxu0 0.0
      %2264 = vmatpush.xpose.msra.mxu0 0.0
      %2265 = vmatpush.xpose.msra.mxu0 0.0
      %2266 = vmatpush.xpose.msra.mxu0 0.0
      %2267 = vmatpush.xpose.msra.mxu0 0.0
      %2268 = vmatpush.xpose.msra.mxu0 0.0
      %2269 = vmatpush.xpose.msra.mxu0 %v2253
      %2270 = vmatpush.xpose.msra.mxu0 %v2251
      %2271 = vmatmul.f32.gmra.mxu0 %v2247
      %v2272 = vpop.f32.mrf.mxu0
      %v2273 = vadd.f32 0.0, %v2272
      %2274 = vmatmul.f32.gmra.mxu0 %v2249
      %v2275 = vpop.f32.mrf.mxu0
      %v2276 = vadd.f32 0.0, %v2275
      %2277 = vdwg.mxu0
      %v2278 = vmul.f32 %v2273, 0.35355338
      %v2279 = vmul.f32 %v2276, 0.35355338
      %v2280 = vsel %vm807, %v2278, -inf
      %2281 = vmax.xlane.f32.xlu0 %v2280
      %v2282 = vpop.xlane.xlu0 %2281
      %v2283 = vsel %vm2183, %v2279, -inf
      %2284 = vmax.xlane.f32.xlu0 %v2283
      %v2285 = vpop.xlane.xlu0 %2284
      %v2286 = vsub.f32 %v2278, %v2282
      %v2287 = vsub.f32 %v2279, %v2285
      %v2288 = vmul.f32 %v2286, 1.442695
      %v2289 = vpow.pop %v2288
      %v2290 = vmul.f32 %v2287, 1.442695
      %v2291 = vpow.pop %v2290
      %v2292 = vsel %vm807, %v2289, 0.0
      %2293 = vadd.xlane.f32.xlu0 %v2292
      %v2294 = vpop.xlane.xlu0 %2293
      %v2295 = vsel %vm2183, %v2291, 0.0
      %2296 = vadd.xlane.f32.xlu0 %v2295
      %v2297 = vpop.xlane.xlu0 %2296
      %v2298 = vrcp.pop %v2294
      %v2299 = vrcp.pop %v2297
      %v2300 = vmul.f32 %v2289, %v2298
      %v2301 = vmul.f32 %v2291, %v2299
      %2302 = vrot.lane.b32.xlu0 %v2136, 56
      %v2303 = vpop.permute.xlu0 %2302
      %2304 = vrot.lane.b32.xlu0 %v2139, 56
      %v2305 = vpop.permute.xlu0 %2304
      %v2308 = vsel %vm807, %v2300, 0
      %v2311 = vsel %vm807, %v2301, 0
      %v2313 = vsel %vm520, %v2305, 0
      %2315 = vmatpush.msra.mxu0 0.0
      %2316 = vmatpush.msra.mxu0 0.0
      %2317 = vmatpush.msra.mxu0 0.0
      %2318 = vmatpush.msra.mxu0 0.0
      %2319 = vmatpush.msra.mxu0 0.0
      %2320 = vmatpush.msra.mxu0 0.0
      %2321 = vmatpush.msra.mxu0 0.0
      %2322 = vmatpush.msra.mxu0 0.0
      %2323 = vmatpush.msra.mxu0 0.0
      %2324 = vmatpush.msra.mxu0 0.0
      %2325 = vmatpush.msra.mxu0 0.0
      %2326 = vmatpush.msra.mxu0 0.0
      %2327 = vmatpush.msra.mxu0 0.0
      %2328 = vmatpush.msra.mxu0 0.0
      %2329 = vmatpush.msra.mxu0 %v2313
      %2330 = vmatpush.msra.mxu0 %v2303
      %2331 = vmatmul.f32.gmra.mxu0 %v2308
      %v2332 = vpop.f32.mrf.mxu0
      %v2333 = vadd.f32 0.0, %v2332
      %2334 = vmatmul.f32.gmra.mxu0 %v2311
      %v2335 = vpop.f32.mrf.mxu0
      %v2336 = vadd.f32 0.0, %v2335
      %2337 = vdwg.mxu0
      %2338 = vrot.lane.b32.xlu0 %v2136, 112
      %v2339 = vpop.permute.xlu0 %2338
      %2340 = vrot.lane.b32.xlu0 %v2139, 112
      %v2341 = vpop.permute.xlu0 %2340
      %2342 = vrot.lane.b32.xlu0 %v2136, 80
      %v2343 = vpop.permute.xlu0 %2342
      %2344 = vrot.lane.b32.xlu0 %v2139, 80
      %v2345 = vpop.permute.xlu0 %2344
      %v2346 = vsel %vm986, %v2339, 0
      %v2348 = vsel %vm986, %v2341, 0
      %v2350 = vsel %vm986, %v2343, 0
      %v2352 = vsel %vm986, %v2345, 0
      %2354 = vmatpush.xpose.msra.mxu0 0.0
      %2355 = vmatpush.xpose.msra.mxu0 0.0
      %2356 = vmatpush.xpose.msra.mxu0 0.0
      %2357 = vmatpush.xpose.msra.mxu0 0.0
      %2358 = vmatpush.xpose.msra.mxu0 0.0
      %2359 = vmatpush.xpose.msra.mxu0 0.0
      %2360 = vmatpush.xpose.msra.mxu0 0.0
      %2361 = vmatpush.xpose.msra.mxu0 0.0
      %2362 = vmatpush.xpose.msra.mxu0 0.0
      %2363 = vmatpush.xpose.msra.mxu0 0.0
      %2364 = vmatpush.xpose.msra.mxu0 0.0
      %2365 = vmatpush.xpose.msra.mxu0 0.0
      %2366 = vmatpush.xpose.msra.mxu0 0.0
      %2367 = vmatpush.xpose.msra.mxu0 0.0
      %2368 = vmatpush.xpose.msra.mxu0 %v2352
      %2369 = vmatpush.xpose.msra.mxu0 %v2350
      %2370 = vmatmul.f32.gmra.mxu0 %v2346
      %v2371 = vpop.f32.mrf.mxu0
      %v2372 = vadd.f32 0.0, %v2371
      %2373 = vmatmul.f32.gmra.mxu0 %v2348
      %v2374 = vpop.f32.mrf.mxu0
      %v2375 = vadd.f32 0.0, %v2374
      %2376 = vdwg.mxu0
      %v2377 = vmul.f32 %v2372, 0.35355338
      %v2378 = vmul.f32 %v2375, 0.35355338
      %v2379 = vsel %vm807, %v2377, -inf
      %2380 = vmax.xlane.f32.xlu0 %v2379
      %v2381 = vpop.xlane.xlu0 %2380
      %v2382 = vsel %vm2183, %v2378, -inf
      %2383 = vmax.xlane.f32.xlu0 %v2382
      %v2384 = vpop.xlane.xlu0 %2383
      %v2385 = vsub.f32 %v2377, %v2381
      %v2386 = vsub.f32 %v2378, %v2384
      %v2387 = vmul.f32 %v2385, 1.442695
      %v2388 = vpow.pop %v2387
      %v2389 = vmul.f32 %v2386, 1.442695
      %v2390 = vpow.pop %v2389
      %v2391 = vsel %vm807, %v2388, 0.0
      %2392 = vadd.xlane.f32.xlu0 %v2391
      %v2393 = vpop.xlane.xlu0 %2392
      %v2394 = vsel %vm2183, %v2390, 0.0
      %2395 = vadd.xlane.f32.xlu0 %v2394
      %v2396 = vpop.xlane.xlu0 %2395
      %v2397 = vrcp.pop %v2393
      %v2398 = vrcp.pop %v2396
      %v2399 = vmul.f32 %v2388, %v2397
      %v2400 = vmul.f32 %v2390, %v2398
      %2401 = vrot.lane.b32.xlu0 %v2136, 48
      %v2402 = vpop.permute.xlu0 %2401
      %2403 = vrot.lane.b32.xlu0 %v2139, 48
      %v2404 = vpop.permute.xlu0 %2403
      %v2407 = vsel %vm807, %v2399, 0
      %v2410 = vsel %vm807, %v2400, 0
      %v2412 = vsel %vm520, %v2404, 0
      %2414 = vmatpush.msra.mxu0 0.0
      %2415 = vmatpush.msra.mxu0 0.0
      %2416 = vmatpush.msra.mxu0 0.0
      %2417 = vmatpush.msra.mxu0 0.0
      %2418 = vmatpush.msra.mxu0 0.0
      %2419 = vmatpush.msra.mxu0 0.0
      %2420 = vmatpush.msra.mxu0 0.0
      %2421 = vmatpush.msra.mxu0 0.0
      %2422 = vmatpush.msra.mxu0 0.0
      %2423 = vmatpush.msra.mxu0 0.0
      %2424 = vmatpush.msra.mxu0 0.0
      %2425 = vmatpush.msra.mxu0 0.0
      %2426 = vmatpush.msra.mxu0 0.0
      %2427 = vmatpush.msra.mxu0 0.0
      %2428 = vmatpush.msra.mxu0 %v2412
      %2429 = vmatpush.msra.mxu0 %v2402
      %2430 = vmatmul.f32.gmra.mxu0 %v2407
      %v2431 = vpop.f32.mrf.mxu0
      %v2432 = vadd.f32 0.0, %v2431
      %2433 = vmatmul.f32.gmra.mxu0 %v2410
      %v2434 = vpop.f32.mrf.mxu0
      %v2435 = vadd.f32 0.0, %v2434
      %2436 = vdwg.mxu0
      %2437 = vrot.lane.b32.xlu0 %v2136, 104
      %v2438 = vpop.permute.xlu0 %2437
      %2439 = vrot.lane.b32.xlu0 %v2139, 104
      %v2440 = vpop.permute.xlu0 %2439
      %2441 = vrot.lane.b32.xlu0 %v2136, 72
      %v2442 = vpop.permute.xlu0 %2441
      %2443 = vrot.lane.b32.xlu0 %v2139, 72
      %v2444 = vpop.permute.xlu0 %2443
      %v2445 = vsel %vm986, %v2438, 0
      %v2447 = vsel %vm986, %v2440, 0
      %v2449 = vsel %vm986, %v2442, 0
      %v2451 = vsel %vm986, %v2444, 0
      %2453 = vmatpush.xpose.msra.mxu0 0.0
      %2454 = vmatpush.xpose.msra.mxu0 0.0
      %2455 = vmatpush.xpose.msra.mxu0 0.0
      %2456 = vmatpush.xpose.msra.mxu0 0.0
      %2457 = vmatpush.xpose.msra.mxu0 0.0
      %2458 = vmatpush.xpose.msra.mxu0 0.0
      %2459 = vmatpush.xpose.msra.mxu0 0.0
      %2460 = vmatpush.xpose.msra.mxu0 0.0
      %2461 = vmatpush.xpose.msra.mxu0 0.0
      %2462 = vmatpush.xpose.msra.mxu0 0.0
      %2463 = vmatpush.xpose.msra.mxu0 0.0
      %2464 = vmatpush.xpose.msra.mxu0 0.0
      %2465 = vmatpush.xpose.msra.mxu0 0.0
      %2466 = vmatpush.xpose.msra.mxu0 0.0
      %2467 = vmatpush.xpose.msra.mxu0 %v2451
      %2468 = vmatpush.xpose.msra.mxu0 %v2449
      %2469 = vmatmul.f32.gmra.mxu0 %v2445
      %v2470 = vpop.f32.mrf.mxu0
      %v2471 = vadd.f32 0.0, %v2470
      %2472 = vmatmul.f32.gmra.mxu0 %v2447
      %v2473 = vpop.f32.mrf.mxu0
      %v2474 = vadd.f32 0.0, %v2473
      %2475 = vdwg.mxu0
      %v2476 = vmul.f32 %v2471, 0.35355338
      %v2477 = vmul.f32 %v2474, 0.35355338
      %v2478 = vsel %vm807, %v2476, -inf
      %2479 = vmax.xlane.f32.xlu0 %v2478
      %v2480 = vpop.xlane.xlu0 %2479
      %v2481 = vsel %vm2183, %v2477, -inf
      %2482 = vmax.xlane.f32.xlu0 %v2481
      %v2483 = vpop.xlane.xlu0 %2482
      %v2484 = vsub.f32 %v2476, %v2480
      %v2485 = vsub.f32 %v2477, %v2483
      %v2486 = vmul.f32 %v2484, 1.442695
      %v2487 = vpow.pop %v2486
      %v2488 = vmul.f32 %v2485, 1.442695
      %v2489 = vpow.pop %v2488
      %v2490 = vsel %vm807, %v2487, 0.0
      %2491 = vadd.xlane.f32.xlu0 %v2490
      %v2492 = vpop.xlane.xlu0 %2491
      %v2493 = vsel %vm2183, %v2489, 0.0
      %2494 = vadd.xlane.f32.xlu0 %v2493
      %v2495 = vpop.xlane.xlu0 %2494
      %v2496 = vrcp.pop %v2492
      %v2497 = vrcp.pop %v2495
      %v2498 = vmul.f32 %v2487, %v2496
      %v2499 = vmul.f32 %v2489, %v2497
      %2500 = vrot.lane.b32.xlu0 %v2136, 40
      %v2501 = vpop.permute.xlu0 %2500
      %2502 = vrot.lane.b32.xlu0 %v2139, 40
      %v2503 = vpop.permute.xlu0 %2502
      %v2506 = vsel %vm807, %v2498, 0
      %v2509 = vsel %vm807, %v2499, 0
      %v2511 = vsel %vm520, %v2503, 0
      %2513 = vmatpush.msra.mxu0 0.0
      %2514 = vmatpush.msra.mxu0 0.0
      %2515 = vmatpush.msra.mxu0 0.0
      %2516 = vmatpush.msra.mxu0 0.0
      %2517 = vmatpush.msra.mxu0 0.0
      %2518 = vmatpush.msra.mxu0 0.0
      %2519 = vmatpush.msra.mxu0 0.0
      %2520 = vmatpush.msra.mxu0 0.0
      %2521 = vmatpush.msra.mxu0 0.0
      %2522 = vmatpush.msra.mxu0 0.0
      %2523 = vmatpush.msra.mxu0 0.0
      %2524 = vmatpush.msra.mxu0 0.0
      %2525 = vmatpush.msra.mxu0 0.0
      %2526 = vmatpush.msra.mxu0 0.0
      %2527 = vmatpush.msra.mxu0 %v2511
      %2528 = vmatpush.msra.mxu0 %v2501
      %2529 = vmatmul.f32.gmra.mxu0 %v2506
      %v2530 = vpop.f32.mrf.mxu0
      %v2531 = vadd.f32 0.0, %v2530
      %2532 = vmatmul.f32.gmra.mxu0 %v2509
      %v2533 = vpop.f32.mrf.mxu0
      %v2534 = vadd.f32 0.0, %v2533
      %2535 = vdwg.mxu0
      %2538 = vrot.lane.b32.xlu0 %v2333, 8
      %v2539 = vpop.permute.xlu0 %2538
      %2540 = vrot.lane.b32.xlu0 %v2336, 8
      %v2541 = vpop.permute.xlu0 %2540
      %2546 = vrot.lane.b32.xlu0 %v2432, 16
      %v2547 = vpop.permute.xlu0 %2546
      %2548 = vrot.lane.b32.xlu0 %v2435, 16
      %v2549 = vpop.permute.xlu0 %2548
      %2554 = vrot.lane.b32.xlu0 %v2531, 24
      %v2555 = vpop.permute.xlu0 %2554
      %2556 = vrot.lane.b32.xlu0 %v2534, 24
      %v2557 = vpop.permute.xlu0 %2556
      %v2560 = vsel %vm986, %v2234, %v2539
      %v2561 = vsel %vm986, %v2237, %v2541
      %vm2562 = vcmask 130048
      %v2563 = vsel %vm2562, %v2560, %v2547
      %v2564 = vsel %vm2562, %v2561, %v2549
      %v2565 = vsel %vm1093, %v2563, %v2555
      %v2566 = vsel %vm1093, %v2564, %v2557
      %v2567 = vperm.slane %v2036, 5
      %2572 = vrot.lane.b32.xlu0 %v2037, 32
      %v2573 = vpop.permute.xlu0 %2572
      %2574 = vrot.lane.b32.xlu0 %v2039, 32
      %v2575 = vpop.permute.xlu0 %2574
      %2576 = vrot.lane.b32.xlu0 %v2041, 32
      %v2577 = vpop.permute.xlu0 %2576
      %2578 = vrot.lane.b32.xlu0 %v2043, 32
      %v2579 = vpop.permute.xlu0 %2578
      %v2585 = vsel %vm546, %v2565, 0
      %v2588 = vsel %vm546, %v2566, 0
      %2590 = vmatpush.msra.mxu0 0.0
      %2591 = vmatpush.msra.mxu0 0.0
      %2592 = vmatpush.msra.mxu0 0.0
      %2593 = vmatpush.msra.mxu0 0.0
      %2594 = vmatpush.msra.mxu0 0.0
      %2595 = vmatpush.msra.mxu0 0.0
      %2596 = vmatpush.msra.mxu0 0.0
      %2597 = vmatpush.msra.mxu0 0.0
      %2598 = vmatpush.msra.mxu0 0.0
      %2599 = vmatpush.msra.mxu0 0.0
      %2600 = vmatpush.msra.mxu0 0.0
      %2601 = vmatpush.msra.mxu0 0.0
      %2602 = vmatpush.msra.mxu0 %v2579
      %2603 = vmatpush.msra.mxu0 %v2577
      %2604 = vmatpush.msra.mxu0 %v2575
      %2605 = vmatpush.msra.mxu0 %v2573
      %2606 = vmatmul.f32.gmra.mxu0 %v2585
      %v2607 = vpop.f32.mrf.mxu0
      %v2608 = vadd.f32 %v2567, %v2607
      %2609 = vmatmul.f32.gmra.mxu0 %v2588
      %v2610 = vpop.f32.mrf.mxu0
      %v2611 = vadd.f32 %v2567, %v2610
      %2612 = vdwg.mxu0
      %v2613 = vadd.f32 %v2035, %v2608
      %v2614 = vadd.f32 %v2033, %v2611
      %v2615 = vsel %vm546, %v2613, 0.0
      %2616 = vadd.xlane.f32.xlu0 %v2615
      %v2617 = vpop.xlane.xlu0 %2616
      %v2618 = vsel %vm2056, %v2614, 0.0
      %2619 = vadd.xlane.f32.xlu0 %v2618
      %v2620 = vpop.xlane.xlu0 %2619
      %v2621 = vmul.f32 %v2617, %v2066
      %v2622 = vmul.f32 %v2620, %v2066
      %v2623 = vsub.f32 %v2613, %v2621
      %v2624 = vsub.f32 %v2614, %v2622
      %v2625 = vmul.f32 %v2623, %v2623
      %v2626 = vmul.f32 %v2624, %v2624
      %v2627 = vsel %vm546, %v2625, 0.0
      %2628 = vadd.xlane.f32.xlu0 %v2627
      %v2629 = vpop.xlane.xlu0 %2628
      %v2630 = vsel %vm2056, %v2626, 0.0
      %2631 = vadd.xlane.f32.xlu0 %v2630
      %v2632 = vpop.xlane.xlu0 %2631
      %v2633 = vmul.f32 %v2629, %v2066
      %v2634 = vmul.f32 %v2632, %v2066
      %v2635 = vadd.f32 %v2633, 1e-05
      %v2636 = vadd.f32 %v2634, 1e-05
      %v2637 = vrsqrt.pop %v2635
      %v2638 = vmul.f32 %v2637, %v2635
      %v2639 = vmul.f32 %v2638, %v2637
      %v2640 = vmul.f32 0.5, %v2639
      %v2641 = vsub.f32 1.5, %v2640
      %v2642 = vmul.f32 %v2637, %v2641
      %vm2643 = vweird.f32 %v2635
      %vm2644 = vweird.f32 %v2637
      %vm2645 = vmor %vm2643, %vm2644
      %v2646 = vsel %vm2645, %v2637, %v2642
      %v2647 = vrsqrt.pop %v2636
      %v2648 = vmul.f32 %v2647, %v2636
      %v2649 = vmul.f32 %v2648, %v2647
      %v2650 = vmul.f32 0.5, %v2649
      %v2651 = vsub.f32 1.5, %v2650
      %v2652 = vmul.f32 %v2647, %v2651
      %vm2653 = vweird.f32 %v2636
      %vm2654 = vweird.f32 %v2647
      %vm2655 = vmor %vm2653, %vm2654
      %v2656 = vsel %vm2655, %v2647, %v2652
      %v2657 = vmul.f32 %v2623, %v2646
      %v2658 = vmul.f32 %v2624, %v2656
      %v2659 = vperm.slane %v2036, 2
      %v2660 = vmul.f32 %v2657, %v2659
      %v2661 = vmul.f32 %v2658, %v2659
      %v2662 = vperm.slane %v2036, 3
      %v2663 = vadd.f32 %v2660, %v2662
      %v2664 = vadd.f32 %v2661, %v2662
      %v2665 = vperm.slane %v2036, 6
      %v2667 = vsel %vm546, %v2663, 0
      %v2670 = vsel %vm546, %v2664, 0
      %2672 = vmatpush.msra.mxu0 0.0
      %2673 = vmatpush.msra.mxu0 0.0
      %2674 = vmatpush.msra.mxu0 0.0
      %2675 = vmatpush.msra.mxu0 0.0
      %2676 = vmatpush.msra.mxu0 0.0
      %2677 = vmatpush.msra.mxu0 0.0
      %2678 = vmatpush.msra.mxu0 0.0
      %2679 = vmatpush.msra.mxu0 0.0
      %2680 = vmatpush.msra.mxu0 0.0
      %2681 = vmatpush.msra.mxu0 0.0
      %2682 = vmatpush.msra.mxu0 0.0
      %2683 = vmatpush.msra.mxu0 0.0
      %2684 = vmatpush.msra.mxu0 %v2044
      %2685 = vmatpush.msra.mxu0 %v2042
      %2686 = vmatpush.msra.mxu0 %v2040
      %2687 = vmatpush.msra.mxu0 %v2038
      %2688 = vmatmul.f32.gmra.mxu0 %v2667
      %v2689 = vpop.f32.mrf.mxu0
      %v2690 = vadd.f32 %v2665, %v2689
      %2691 = vmatmul.f32.gmra.mxu0 %v2670
      %v2692 = vpop.f32.mrf.mxu0
      %v2693 = vadd.f32 %v2665, %v2692
      %2694 = vdwg.mxu0
      %v2695 = vmax.f32 %v2690, 0.0
      %v2696 = vmax.f32 %v2693, 0.0
      %v2697 = vperm.slane %v2036, 7
      %v2699 = vsel %vm606, %v2695, 0
      %v2702 = vsel %vm606, %v2696, 0
      %2704 = vmatpush.msra.mxu0 0.0
      %2705 = vmatpush.msra.mxu0 0.0
      %2706 = vmatpush.msra.mxu0 0.0
      %2707 = vmatpush.msra.mxu0 0.0
      %2708 = vmatpush.msra.mxu0 0.0
      %2709 = vmatpush.msra.mxu0 0.0
      %2710 = vmatpush.msra.mxu0 0.0
      %2711 = vmatpush.msra.mxu0 0.0
      %2712 = vmatpush.msra.mxu0 %v2052
      %2713 = vmatpush.msra.mxu0 %v2051
      %2714 = vmatpush.msra.mxu0 %v2050
      %2715 = vmatpush.msra.mxu0 %v2049
      %2716 = vmatpush.msra.mxu0 %v2048
      %2717 = vmatpush.msra.mxu0 %v2047
      %2718 = vmatpush.msra.mxu0 %v2046
      %2719 = vmatpush.msra.mxu0 %v2045
      %2720 = vmatmul.f32.gmra.mxu0 %v2699
      %v2721 = vpop.f32.mrf.mxu0
      %v2722 = vadd.f32 %v2697, %v2721
      %2723 = vmatmul.f32.gmra.mxu0 %v2702
      %v2724 = vpop.f32.mrf.mxu0
      %v2725 = vadd.f32 %v2697, %v2724
      %2726 = vdwg.mxu0
      %v2727 = vadd.f32 %v2613, %v2722
      %v2728 = vadd.f32 %v2614, %v2725
      %s2729 = scalar_lea.vmem %s9, 8
      %v2730 = vld [vmem:[%s2729] sm:$0xff]
      %s2731 = scalar_lea.vmem %s10, 64
      %v2732 = vld [vmem:[%s2731] sm:$0xff]
      %v2733 = vld [vmem:[%s2731 + $0x8] sm:$0xff]
      %v2734 = vld [vmem:[%s2731 + $0x10] sm:$0xff]
      %v2735 = vld [vmem:[%s2731 + $0x18] sm:$0xff]
      %v2736 = vld [vmem:[%s2731 + $0x20] sm:$0xff]
      %v2737 = vld [vmem:[%s2731 + $0x28] sm:$0xff]
      %v2738 = vld [vmem:[%s2731 + $0x30] sm:$0xff]
      %v2739 = vld [vmem:[%s2731 + $0x38] sm:$0xff]
      %s2740 = scalar_lea.vmem %s11, 64
      %v2741 = vld [vmem:[%s2740] sm:$0xff]
      %v2742 = vld [vmem:[%s2740 + $0x8] sm:$0xff]
      %v2743 = vld [vmem:[%s2740 + $0x10] sm:$0xff]
      %v2744 = vld [vmem:[%s2740 + $0x18] sm:$0xff]
      %v2745 = vld [vmem:[%s2740 + $0x20] sm:$0xff]
      %v2746 = vld [vmem:[%s2740 + $0x28] sm:$0xff]
      %v2747 = vld [vmem:[%s2740 + $0x30] sm:$0xff]
      %v2748 = vld [vmem:[%s2740 + $0x38] sm:$0xff]
      %v2749 = vsel %vm546, %v2727, 0.0
      %2750 = vadd.xlane.f32.xlu0 %v2749
      %v2751 = vpop.xlane.xlu0 %2750
      %v2752 = vsel %vm2056, %v2728, 0.0
      %2753 = vadd.xlane.f32.xlu0 %v2752
      %v2754 = vpop.xlane.xlu0 %2753
      %v2755 = vmul.f32 %v2751, %v2066
      %v2756 = vmul.f32 %v2754, %v2066
      %v2757 = vsub.f32 %v2727, %v2755
      %v2758 = vsub.f32 %v2728, %v2756
      %v2759 = vmul.f32 %v2757, %v2757
      %v2760 = vmul.f32 %v2758, %v2758
      %v2761 = vsel %vm546, %v2759, 0.0
      %2762 = vadd.xlane.f32.xlu0 %v2761
      %v2763 = vpop.xlane.xlu0 %2762
      %v2764 = vsel %vm2056, %v2760, 0.0
      %2765 = vadd.xlane.f32.xlu0 %v2764
      %v2766 = vpop.xlane.xlu0 %2765
      %v2767 = vmul.f32 %v2763, %v2066
      %v2768 = vmul.f32 %v2766, %v2066
      %v2769 = vadd.f32 %v2767, 1e-05
      %v2770 = vadd.f32 %v2768, 1e-05
      %v2771 = vrsqrt.pop %v2769
      %v2772 = vmul.f32 %v2771, %v2769
      %v2773 = vmul.f32 %v2772, %v2771
      %v2774 = vmul.f32 0.5, %v2773
      %v2775 = vsub.f32 1.5, %v2774
      %v2776 = vmul.f32 %v2771, %v2775
      %vm2777 = vweird.f32 %v2769
      %vm2778 = vweird.f32 %v2771
      %vm2779 = vmor %vm2777, %vm2778
      %v2780 = vsel %vm2779, %v2771, %v2776
      %v2781 = vrsqrt.pop %v2770
      %v2782 = vmul.f32 %v2781, %v2770
      %v2783 = vmul.f32 %v2782, %v2781
      %v2784 = vmul.f32 0.5, %v2783
      %v2785 = vsub.f32 1.5, %v2784
      %v2786 = vmul.f32 %v2781, %v2785
      %vm2787 = vweird.f32 %v2770
      %vm2788 = vweird.f32 %v2781
      %vm2789 = vmor %vm2787, %vm2788
      %v2790 = vsel %vm2789, %v2781, %v2786
      %v2791 = vmul.f32 %v2757, %v2780
      %v2792 = vmul.f32 %v2758, %v2790
      %v2793 = vperm.slane %v2730, 0
      %v2794 = vmul.f32 %v2791, %v2793
      %v2795 = vmul.f32 %v2792, %v2793
      %v2796 = vperm.slane %v2730, 1
      %v2797 = vadd.f32 %v2794, %v2796
      %v2798 = vadd.f32 %v2795, %v2796
      %v2799 = vperm.slane %v2730, 4
      %v2801 = vsel %vm546, %v2797, 0
      %v2804 = vsel %vm546, %v2798, 0
      %2806 = vmatpush.msra.mxu0 0.0
      %2807 = vmatpush.msra.mxu0 0.0
      %2808 = vmatpush.msra.mxu0 0.0
      %2809 = vmatpush.msra.mxu0 0.0
      %2810 = vmatpush.msra.mxu0 0.0
      %2811 = vmatpush.msra.mxu0 0.0
      %2812 = vmatpush.msra.mxu0 0.0
      %2813 = vmatpush.msra.mxu0 0.0
      %2814 = vmatpush.msra.mxu0 0.0
      %2815 = vmatpush.msra.mxu0 0.0
      %2816 = vmatpush.msra.mxu0 0.0
      %2817 = vmatpush.msra.mxu0 0.0
      %2818 = vmatpush.msra.mxu0 %v2738
      %2819 = vmatpush.msra.mxu0 %v2736
      %2820 = vmatpush.msra.mxu0 %v2734
      %2821 = vmatpush.msra.mxu0 %v2732
      %2822 = vmatmul.f32.gmra.mxu0 %v2801
      %v2823 = vpop.f32.mrf.mxu0
      %v2824 = vadd.f32 %v2799, %v2823
      %2825 = vmatmul.f32.gmra.mxu0 %v2804
      %v2826 = vpop.f32.mrf.mxu0
      %v2827 = vadd.f32 %v2799, %v2826
      %2828 = vdwg.mxu0
      %2831 = vrot.lane.b32.xlu0 %v2824, 96
      %v2832 = vpop.permute.xlu0 %2831
      %2833 = vrot.lane.b32.xlu0 %v2827, 96
      %v2834 = vpop.permute.xlu0 %2833
      %v2835 = vsel %vm986, %v2824, 0
      %v2837 = vsel %vm986, %v2827, 0
      %v2839 = vsel %vm986, %v2832, 0
      %v2841 = vsel %vm986, %v2834, 0
      %2843 = vmatpush.xpose.msra.mxu0 0.0
      %2844 = vmatpush.xpose.msra.mxu0 0.0
      %2845 = vmatpush.xpose.msra.mxu0 0.0
      %2846 = vmatpush.xpose.msra.mxu0 0.0
      %2847 = vmatpush.xpose.msra.mxu0 0.0
      %2848 = vmatpush.xpose.msra.mxu0 0.0
      %2849 = vmatpush.xpose.msra.mxu0 0.0
      %2850 = vmatpush.xpose.msra.mxu0 0.0
      %2851 = vmatpush.xpose.msra.mxu0 0.0
      %2852 = vmatpush.xpose.msra.mxu0 0.0
      %2853 = vmatpush.xpose.msra.mxu0 0.0
      %2854 = vmatpush.xpose.msra.mxu0 0.0
      %2855 = vmatpush.xpose.msra.mxu0 0.0
      %2856 = vmatpush.xpose.msra.mxu0 0.0
      %2857 = vmatpush.xpose.msra.mxu0 %v2841
      %2858 = vmatpush.xpose.msra.mxu0 %v2839
      %2859 = vmatmul.f32.gmra.mxu0 %v2835
      %v2860 = vpop.f32.mrf.mxu0
      %v2861 = vadd.f32 0.0, %v2860
      %2862 = vmatmul.f32.gmra.mxu0 %v2837
      %v2863 = vpop.f32.mrf.mxu0
      %v2864 = vadd.f32 0.0, %v2863
      %2865 = vdwg.mxu0
      %v2866 = vmul.f32 %v2861, 0.35355338
      %v2867 = vmul.f32 %v2864, 0.35355338
      %v2868 = vsel %vm807, %v2866, -inf
      %2869 = vmax.xlane.f32.xlu0 %v2868
      %v2870 = vpop.xlane.xlu0 %2869
      %v2871 = vsel %vm2183, %v2867, -inf
      %2872 = vmax.xlane.f32.xlu0 %v2871
      %v2873 = vpop.xlane.xlu0 %2872
      %v2874 = vsub.f32 %v2866, %v2870
      %v2875 = vsub.f32 %v2867, %v2873
      %v2876 = vmul.f32 %v2874, 1.442695
      %v2877 = vpow.pop %v2876
      %v2878 = vmul.f32 %v2875, 1.442695
      %v2879 = vpow.pop %v2878
      %v2880 = vsel %vm807, %v2877, 0.0
      %2881 = vadd.xlane.f32.xlu0 %v2880
      %v2882 = vpop.xlane.xlu0 %2881
      %v2883 = vsel %vm2183, %v2879, 0.0
      %2884 = vadd.xlane.f32.xlu0 %v2883
      %v2885 = vpop.xlane.xlu0 %2884
      %v2886 = vrcp.pop %v2882
      %v2887 = vrcp.pop %v2885
      %v2888 = vmul.f32 %v2877, %v2886
      %v2889 = vmul.f32 %v2879, %v2887
      %2890 = vrot.lane.b32.xlu0 %v2824, 64
      %v2891 = vpop.permute.xlu0 %2890
      %2892 = vrot.lane.b32.xlu0 %v2827, 64
      %v2893 = vpop.permute.xlu0 %2892
      %v2896 = vsel %vm807, %v2888, 0
      %v2899 = vsel %vm807, %v2889, 0
      %v2901 = vsel %vm520, %v2893, 0
      %2903 = vmatpush.msra.mxu0 0.0
      %2904 = vmatpush.msra.mxu0 0.0
      %2905 = vmatpush.msra.mxu0 0.0
      %2906 = vmatpush.msra.mxu0 0.0
      %2907 = vmatpush.msra.mxu0 0.0
      %2908 = vmatpush.msra.mxu0 0.0
      %2909 = vmatpush.msra.mxu0 0.0
      %2910 = vmatpush.msra.mxu0 0.0
      %2911 = vmatpush.msra.mxu0 0.0
      %2912 = vmatpush.msra.mxu0 0.0
      %2913 = vmatpush.msra.mxu0 0.0
      %2914 = vmatpush.msra.mxu0 0.0
      %2915 = vmatpush.msra.mxu0 0.0
      %2916 = vmatpush.msra.mxu0 0.0
      %2917 = vmatpush.msra.mxu0 %v2901
      %2918 = vmatpush.msra.mxu0 %v2891
      %2919 = vmatmul.f32.gmra.mxu0 %v2896
      %v2920 = vpop.f32.mrf.mxu0
      %v2921 = vadd.f32 0.0, %v2920
      %2922 = vmatmul.f32.gmra.mxu0 %v2899
      %v2923 = vpop.f32.mrf.mxu0
      %v2924 = vadd.f32 0.0, %v2923
      %2925 = vdwg.mxu0
      %2926 = vrot.lane.b32.xlu0 %v2824, 120
      %v2927 = vpop.permute.xlu0 %2926
      %2928 = vrot.lane.b32.xlu0 %v2827, 120
      %v2929 = vpop.permute.xlu0 %2928
      %2930 = vrot.lane.b32.xlu0 %v2824, 88
      %v2931 = vpop.permute.xlu0 %2930
      %2932 = vrot.lane.b32.xlu0 %v2827, 88
      %v2933 = vpop.permute.xlu0 %2932
      %v2934 = vsel %vm986, %v2927, 0
      %v2936 = vsel %vm986, %v2929, 0
      %v2938 = vsel %vm986, %v2931, 0
      %v2940 = vsel %vm986, %v2933, 0
      %2942 = vmatpush.xpose.msra.mxu0 0.0
      %2943 = vmatpush.xpose.msra.mxu0 0.0
      %2944 = vmatpush.xpose.msra.mxu0 0.0
      %2945 = vmatpush.xpose.msra.mxu0 0.0
      %2946 = vmatpush.xpose.msra.mxu0 0.0
      %2947 = vmatpush.xpose.msra.mxu0 0.0
      %2948 = vmatpush.xpose.msra.mxu0 0.0
      %2949 = vmatpush.xpose.msra.mxu0 0.0
      %2950 = vmatpush.xpose.msra.mxu0 0.0
      %2951 = vmatpush.xpose.msra.mxu0 0.0
      %2952 = vmatpush.xpose.msra.mxu0 0.0
      %2953 = vmatpush.xpose.msra.mxu0 0.0
      %2954 = vmatpush.xpose.msra.mxu0 0.0
      %2955 = vmatpush.xpose.msra.mxu0 0.0
      %2956 = vmatpush.xpose.msra.mxu0 %v2940
      %2957 = vmatpush.xpose.msra.mxu0 %v2938
      %2958 = vmatmul.f32.gmra.mxu0 %v2934
      %v2959 = vpop.f32.mrf.mxu0
      %v2960 = vadd.f32 0.0, %v2959
      %2961 = vmatmul.f32.gmra.mxu0 %v2936
      %v2962 = vpop.f32.mrf.mxu0
      %v2963 = vadd.f32 0.0, %v2962
      %2964 = vdwg.mxu0
      %v2965 = vmul.f32 %v2960, 0.35355338
      %v2966 = vmul.f32 %v2963, 0.35355338
      %v2967 = vsel %vm807, %v2965, -inf
      %2968 = vmax.xlane.f32.xlu0 %v2967
      %v2969 = vpop.xlane.xlu0 %2968
      %v2970 = vsel %vm2183, %v2966, -inf
      %2971 = vmax.xlane.f32.xlu0 %v2970
      %v2972 = vpop.xlane.xlu0 %2971
      %v2973 = vsub.f32 %v2965, %v2969
      %v2974 = vsub.f32 %v2966, %v2972
      %v2975 = vmul.f32 %v2973, 1.442695
      %v2976 = vpow.pop %v2975
      %v2977 = vmul.f32 %v2974, 1.442695
      %v2978 = vpow.pop %v2977
      %v2979 = vsel %vm807, %v2976, 0.0
      %2980 = vadd.xlane.f32.xlu0 %v2979
      %v2981 = vpop.xlane.xlu0 %2980
      %v2982 = vsel %vm2183, %v2978, 0.0
      %2983 = vadd.xlane.f32.xlu0 %v2982
      %v2984 = vpop.xlane.xlu0 %2983
      %v2985 = vrcp.pop %v2981
      %v2986 = vrcp.pop %v2984
      %v2987 = vmul.f32 %v2976, %v2985
      %v2988 = vmul.f32 %v2978, %v2986
      %2989 = vrot.lane.b32.xlu0 %v2824, 56
      %v2990 = vpop.permute.xlu0 %2989
      %2991 = vrot.lane.b32.xlu0 %v2827, 56
      %v2992 = vpop.permute.xlu0 %2991
      %v2995 = vsel %vm807, %v2987, 0
      %v2998 = vsel %vm807, %v2988, 0
      %v3000 = vsel %vm520, %v2992, 0
      %3002 = vmatpush.msra.mxu0 0.0
      %3003 = vmatpush.msra.mxu0 0.0
      %3004 = vmatpush.msra.mxu0 0.0
      %3005 = vmatpush.msra.mxu0 0.0
      %3006 = vmatpush.msra.mxu0 0.0
      %3007 = vmatpush.msra.mxu0 0.0
      %3008 = vmatpush.msra.mxu0 0.0
      %3009 = vmatpush.msra.mxu0 0.0
      %3010 = vmatpush.msra.mxu0 0.0
      %3011 = vmatpush.msra.mxu0 0.0
      %3012 = vmatpush.msra.mxu0 0.0
      %3013 = vmatpush.msra.mxu0 0.0
      %3014 = vmatpush.msra.mxu0 0.0
      %3015 = vmatpush.msra.mxu0 0.0
      %3016 = vmatpush.msra.mxu0 %v3000
      %3017 = vmatpush.msra.mxu0 %v2990
      %3018 = vmatmul.f32.gmra.mxu0 %v2995
      %v3019 = vpop.f32.mrf.mxu0
      %v3020 = vadd.f32 0.0, %v3019
      %3021 = vmatmul.f32.gmra.mxu0 %v2998
      %v3022 = vpop.f32.mrf.mxu0
      %v3023 = vadd.f32 0.0, %v3022
      %3024 = vdwg.mxu0
      %3025 = vrot.lane.b32.xlu0 %v2824, 112
      %v3026 = vpop.permute.xlu0 %3025
      %3027 = vrot.lane.b32.xlu0 %v2827, 112
      %v3028 = vpop.permute.xlu0 %3027
      %3029 = vrot.lane.b32.xlu0 %v2824, 80
      %v3030 = vpop.permute.xlu0 %3029
      %3031 = vrot.lane.b32.xlu0 %v2827, 80
      %v3032 = vpop.permute.xlu0 %3031
      %v3033 = vsel %vm986, %v3026, 0
      %v3035 = vsel %vm986, %v3028, 0
      %v3037 = vsel %vm986, %v3030, 0
      %v3039 = vsel %vm986, %v3032, 0
      %3041 = vmatpush.xpose.msra.mxu0 0.0
      %3042 = vmatpush.xpose.msra.mxu0 0.0
      %3043 = vmatpush.xpose.msra.mxu0 0.0
      %3044 = vmatpush.xpose.msra.mxu0 0.0
      %3045 = vmatpush.xpose.msra.mxu0 0.0
      %3046 = vmatpush.xpose.msra.mxu0 0.0
      %3047 = vmatpush.xpose.msra.mxu0 0.0
      %3048 = vmatpush.xpose.msra.mxu0 0.0
      %3049 = vmatpush.xpose.msra.mxu0 0.0
      %3050 = vmatpush.xpose.msra.mxu0 0.0
      %3051 = vmatpush.xpose.msra.mxu0 0.0
      %3052 = vmatpush.xpose.msra.mxu0 0.0
      %3053 = vmatpush.xpose.msra.mxu0 0.0
      %3054 = vmatpush.xpose.msra.mxu0 0.0
      %3055 = vmatpush.xpose.msra.mxu0 %v3039
      %3056 = vmatpush.xpose.msra.mxu0 %v3037
      %3057 = vmatmul.f32.gmra.mxu0 %v3033
      %v3058 = vpop.f32.mrf.mxu0
      %v3059 = vadd.f32 0.0, %v3058
      %3060 = vmatmul.f32.gmra.mxu0 %v3035
      %v3061 = vpop.f32.mrf.mxu0
      %v3062 = vadd.f32 0.0, %v3061
      %3063 = vdwg.mxu0
      %v3064 = vmul.f32 %v3059, 0.35355338
      %v3065 = vmul.f32 %v3062, 0.35355338
      %v3066 = vsel %vm807, %v3064, -inf
      %3067 = vmax.xlane.f32.xlu0 %v3066
      %v3068 = vpop.xlane.xlu0 %3067
      %v3069 = vsel %vm2183, %v3065, -inf
      %3070 = vmax.xlane.f32.xlu0 %v3069
      %v3071 = vpop.xlane.xlu0 %3070
      %v3072 = vsub.f32 %v3064, %v3068
      %v3073 = vsub.f32 %v3065, %v3071
      %v3074 = vmul.f32 %v3072, 1.442695
      %v3075 = vpow.pop %v3074
      %v3076 = vmul.f32 %v3073, 1.442695
      %v3077 = vpow.pop %v3076
      %v3078 = vsel %vm807, %v3075, 0.0
      %3079 = vadd.xlane.f32.xlu0 %v3078
      %v3080 = vpop.xlane.xlu0 %3079
      %v3081 = vsel %vm2183, %v3077, 0.0
      %3082 = vadd.xlane.f32.xlu0 %v3081
      %v3083 = vpop.xlane.xlu0 %3082
      %v3084 = vrcp.pop %v3080
      %v3085 = vrcp.pop %v3083
      %v3086 = vmul.f32 %v3075, %v3084
      %v3087 = vmul.f32 %v3077, %v3085
      %3088 = vrot.lane.b32.xlu0 %v2824, 48
      %v3089 = vpop.permute.xlu0 %3088
      %3090 = vrot.lane.b32.xlu0 %v2827, 48
      %v3091 = vpop.permute.xlu0 %3090
      %v3094 = vsel %vm807, %v3086, 0
      %v3097 = vsel %vm807, %v3087, 0
      %v3099 = vsel %vm520, %v3091, 0
      %3101 = vmatpush.msra.mxu0 0.0
      %3102 = vmatpush.msra.mxu0 0.0
      %3103 = vmatpush.msra.mxu0 0.0
      %3104 = vmatpush.msra.mxu0 0.0
      %3105 = vmatpush.msra.mxu0 0.0
      %3106 = vmatpush.msra.mxu0 0.0
      %3107 = vmatpush.msra.mxu0 0.0
      %3108 = vmatpush.msra.mxu0 0.0
      %3109 = vmatpush.msra.mxu0 0.0
      %3110 = vmatpush.msra.mxu0 0.0
      %3111 = vmatpush.msra.mxu0 0.0
      %3112 = vmatpush.msra.mxu0 0.0
      %3113 = vmatpush.msra.mxu0 0.0
      %3114 = vmatpush.msra.mxu0 0.0
      %3115 = vmatpush.msra.mxu0 %v3099
      %3116 = vmatpush.msra.mxu0 %v3089
      %3117 = vmatmul.f32.gmra.mxu0 %v3094
      %v3118 = vpop.f32.mrf.mxu0
      %v3119 = vadd.f32 0.0, %v3118
      %3120 = vmatmul.f32.gmra.mxu0 %v3097
      %v3121 = vpop.f32.mrf.mxu0
      %v3122 = vadd.f32 0.0, %v3121
      %3123 = vdwg.mxu0
      %3124 = vrot.lane.b32.xlu0 %v2824, 104
      %v3125 = vpop.permute.xlu0 %3124
      %3126 = vrot.lane.b32.xlu0 %v2827, 104
      %v3127 = vpop.permute.xlu0 %3126
      %3128 = vrot.lane.b32.xlu0 %v2824, 72
      %v3129 = vpop.permute.xlu0 %3128
      %3130 = vrot.lane.b32.xlu0 %v2827, 72
      %v3131 = vpop.permute.xlu0 %3130
      %v3132 = vsel %vm986, %v3125, 0
      %v3134 = vsel %vm986, %v3127, 0
      %v3136 = vsel %vm986, %v3129, 0
      %v3138 = vsel %vm986, %v3131, 0
      %3140 = vmatpush.xpose.msra.mxu0 0.0
      %3141 = vmatpush.xpose.msra.mxu0 0.0
      %3142 = vmatpush.xpose.msra.mxu0 0.0
      %3143 = vmatpush.xpose.msra.mxu0 0.0
      %3144 = vmatpush.xpose.msra.mxu0 0.0
      %3145 = vmatpush.xpose.msra.mxu0 0.0
      %3146 = vmatpush.xpose.msra.mxu0 0.0
      %3147 = vmatpush.xpose.msra.mxu0 0.0
      %3148 = vmatpush.xpose.msra.mxu0 0.0
      %3149 = vmatpush.xpose.msra.mxu0 0.0
      %3150 = vmatpush.xpose.msra.mxu0 0.0
      %3151 = vmatpush.xpose.msra.mxu0 0.0
      %3152 = vmatpush.xpose.msra.mxu0 0.0
      %3153 = vmatpush.xpose.msra.mxu0 0.0
      %3154 = vmatpush.xpose.msra.mxu0 %v3138
      %3155 = vmatpush.xpose.msra.mxu0 %v3136
      %3156 = vmatmul.f32.gmra.mxu0 %v3132
      %v3157 = vpop.f32.mrf.mxu0
      %v3158 = vadd.f32 0.0, %v3157
      %3159 = vmatmul.f32.gmra.mxu0 %v3134
      %v3160 = vpop.f32.mrf.mxu0
      %v3161 = vadd.f32 0.0, %v3160
      %3162 = vdwg.mxu0
      %v3163 = vmul.f32 %v3158, 0.35355338
      %v3164 = vmul.f32 %v3161, 0.35355338
      %v3165 = vsel %vm807, %v3163, -inf
      %3166 = vmax.xlane.f32.xlu0 %v3165
      %v3167 = vpop.xlane.xlu0 %3166
      %v3168 = vsel %vm2183, %v3164, -inf
      %3169 = vmax.xlane.f32.xlu0 %v3168
      %v3170 = vpop.xlane.xlu0 %3169
      %v3171 = vsub.f32 %v3163, %v3167
      %v3172 = vsub.f32 %v3164, %v3170
      %v3173 = vmul.f32 %v3171, 1.442695
      %v3174 = vpow.pop %v3173
      %v3175 = vmul.f32 %v3172, 1.442695
      %v3176 = vpow.pop %v3175
      %v3177 = vsel %vm807, %v3174, 0.0
      %3178 = vadd.xlane.f32.xlu0 %v3177
      %v3179 = vpop.xlane.xlu0 %3178
      %v3180 = vsel %vm2183, %v3176, 0.0
      %3181 = vadd.xlane.f32.xlu0 %v3180
      %v3182 = vpop.xlane.xlu0 %3181
      %v3183 = vrcp.pop %v3179
      %v3184 = vrcp.pop %v3182
      %v3185 = vmul.f32 %v3174, %v3183
      %v3186 = vmul.f32 %v3176, %v3184
      %3187 = vrot.lane.b32.xlu0 %v2824, 40
      %v3188 = vpop.permute.xlu0 %3187
      %3189 = vrot.lane.b32.xlu0 %v2827, 40
      %v3190 = vpop.permute.xlu0 %3189
      %v3193 = vsel %vm807, %v3185, 0
      %v3196 = vsel %vm807, %v3186, 0
      %v3198 = vsel %vm520, %v3190, 0
      %3200 = vmatpush.msra.mxu0 0.0
      %3201 = vmatpush.msra.mxu0 0.0
      %3202 = vmatpush.msra.mxu0 0.0
      %3203 = vmatpush.msra.mxu0 0.0
      %3204 = vmatpush.msra.mxu0 0.0
      %3205 = vmatpush.msra.mxu0 0.0
      %3206 = vmatpush.msra.mxu0 0.0
      %3207 = vmatpush.msra.mxu0 0.0
      %3208 = vmatpush.msra.mxu0 0.0
      %3209 = vmatpush.msra.mxu0 0.0
      %3210 = vmatpush.msra.mxu0 0.0
      %3211 = vmatpush.msra.mxu0 0.0
      %3212 = vmatpush.msra.mxu0 0.0
      %3213 = vmatpush.msra.mxu0 0.0
      %3214 = vmatpush.msra.mxu0 %v3198
      %3215 = vmatpush.msra.mxu0 %v3188
      %3216 = vmatmul.f32.gmra.mxu0 %v3193
      %v3217 = vpop.f32.mrf.mxu0
      %v3218 = vadd.f32 0.0, %v3217
      %3219 = vmatmul.f32.gmra.mxu0 %v3196
      %v3220 = vpop.f32.mrf.mxu0
      %v3221 = vadd.f32 0.0, %v3220
      %3222 = vdwg.mxu0
      %3225 = vrot.lane.b32.xlu0 %v3020, 8
      %v3226 = vpop.permute.xlu0 %3225
      %3227 = vrot.lane.b32.xlu0 %v3023, 8
      %v3228 = vpop.permute.xlu0 %3227
      %3233 = vrot.lane.b32.xlu0 %v3119, 16
      %v3234 = vpop.permute.xlu0 %3233
      %3235 = vrot.lane.b32.xlu0 %v3122, 16
      %v3236 = vpop.permute.xlu0 %3235
      %3241 = vrot.lane.b32.xlu0 %v3218, 24
      %v3242 = vpop.permute.xlu0 %3241
      %3243 = vrot.lane.b32.xlu0 %v3221, 24
      %v3244 = vpop.permute.xlu0 %3243
      %v3247 = vsel %vm986, %v2921, %v3226
      %v3248 = vsel %vm986, %v2924, %v3228
      %v3249 = vsel %vm2562, %v3247, %v3234
      %v3250 = vsel %vm2562, %v3248, %v3236
      %v3251 = vsel %vm1093, %v3249, %v3242
      %v3252 = vsel %vm1093, %v3250, %v3244
      %v3253 = vperm.slane %v2730, 5
      %3258 = vrot.lane.b32.xlu0 %v2732, 32
      %v3259 = vpop.permute.xlu0 %3258
      %3260 = vrot.lane.b32.xlu0 %v2734, 32
      %v3261 = vpop.permute.xlu0 %3260
      %3262 = vrot.lane.b32.xlu0 %v2736, 32
      %v3263 = vpop.permute.xlu0 %3262
      %3264 = vrot.lane.b32.xlu0 %v2738, 32
      %v3265 = vpop.permute.xlu0 %3264
      %v3271 = vsel %vm546, %v3251, 0
      %v3274 = vsel %vm546, %v3252, 0
      %3276 = vmatpush.msra.mxu0 0.0
      %3277 = vmatpush.msra.mxu0 0.0
      %3278 = vmatpush.msra.mxu0 0.0
      %3279 = vmatpush.msra.mxu0 0.0
      %3280 = vmatpush.msra.mxu0 0.0
      %3281 = vmatpush.msra.mxu0 0.0
      %3282 = vmatpush.msra.mxu0 0.0
      %3283 = vmatpush.msra.mxu0 0.0
      %3284 = vmatpush.msra.mxu0 0.0
      %3285 = vmatpush.msra.mxu0 0.0
      %3286 = vmatpush.msra.mxu0 0.0
      %3287 = vmatpush.msra.mxu0 0.0
      %3288 = vmatpush.msra.mxu0 %v3265
      %3289 = vmatpush.msra.mxu0 %v3263
      %3290 = vmatpush.msra.mxu0 %v3261
      %3291 = vmatpush.msra.mxu0 %v3259
      %3292 = vmatmul.f32.gmra.mxu0 %v3271
      %v3293 = vpop.f32.mrf.mxu0
      %v3294 = vadd.f32 %v3253, %v3293
      %3295 = vmatmul.f32.gmra.mxu0 %v3274
      %v3296 = vpop.f32.mrf.mxu0
      %v3297 = vadd.f32 %v3253, %v3296
      %3298 = vdwg.mxu0
      %v3299 = vadd.f32 %v2727, %v3294
      %v3300 = vadd.f32 %v2728, %v3297
      %v3301 = vsel %vm546, %v3299, 0.0
      %3302 = vadd.xlane.f32.xlu0 %v3301
      %v3303 = vpop.xlane.xlu0 %3302
      %v3304 = vsel %vm2056, %v3300, 0.0
      %3305 = vadd.xlane.f32.xlu0 %v3304
      %v3306 = vpop.xlane.xlu0 %3305
      %v3307 = vmul.f32 %v3303, %v2066
      %v3308 = vmul.f32 %v3306, %v2066
      %v3309 = vsub.f32 %v3299, %v3307
      %v3310 = vsub.f32 %v3300, %v3308
      %v3311 = vmul.f32 %v3309, %v3309
      %v3312 = vmul.f32 %v3310, %v3310
      %v3313 = vsel %vm546, %v3311, 0.0
      %3314 = vadd.xlane.f32.xlu0 %v3313
      %v3315 = vpop.xlane.xlu0 %3314
      %v3316 = vsel %vm2056, %v3312, 0.0
      %3317 = vadd.xlane.f32.xlu0 %v3316
      %v3318 = vpop.xlane.xlu0 %3317
      %v3319 = vmul.f32 %v3315, %v2066
      %v3320 = vmul.f32 %v3318, %v2066
      %v3321 = vadd.f32 %v3319, 1e-05
      %v3322 = vadd.f32 %v3320, 1e-05
      %v3323 = vrsqrt.pop %v3321
      %v3324 = vmul.f32 %v3323, %v3321
      %v3325 = vmul.f32 %v3324, %v3323
      %v3326 = vmul.f32 0.5, %v3325
      %v3327 = vsub.f32 1.5, %v3326
      %v3328 = vmul.f32 %v3323, %v3327
      %vm3329 = vweird.f32 %v3321
      %vm3330 = vweird.f32 %v3323
      %vm3331 = vmor %vm3329, %vm3330
      %v3332 = vsel %vm3331, %v3323, %v3328
      %v3333 = vrsqrt.pop %v3322
      %v3334 = vmul.f32 %v3333, %v3322
      %v3335 = vmul.f32 %v3334, %v3333
      %v3336 = vmul.f32 0.5, %v3335
      %v3337 = vsub.f32 1.5, %v3336
      %v3338 = vmul.f32 %v3333, %v3337
      %vm3339 = vweird.f32 %v3322
      %vm3340 = vweird.f32 %v3333
      %vm3341 = vmor %vm3339, %vm3340
      %v3342 = vsel %vm3341, %v3333, %v3338
      %v3343 = vmul.f32 %v3309, %v3332
      %v3344 = vmul.f32 %v3310, %v3342
      %v3345 = vperm.slane %v2730, 2
      %v3346 = vmul.f32 %v3343, %v3345
      %v3347 = vmul.f32 %v3344, %v3345
      %v3348 = vperm.slane %v2730, 3
      %v3349 = vadd.f32 %v3346, %v3348
      %v3350 = vadd.f32 %v3347, %v3348
      %v3351 = vperm.slane %v2730, 6
      %v3353 = vsel %vm546, %v3349, 0
      %v3356 = vsel %vm546, %v3350, 0
      %3358 = vmatpush.msra.mxu0 0.0
      %3359 = vmatpush.msra.mxu0 0.0
      %3360 = vmatpush.msra.mxu0 0.0
      %3361 = vmatpush.msra.mxu0 0.0
      %3362 = vmatpush.msra.mxu0 0.0
      %3363 = vmatpush.msra.mxu0 0.0
      %3364 = vmatpush.msra.mxu0 0.0
      %3365 = vmatpush.msra.mxu0 0.0
      %3366 = vmatpush.msra.mxu0 0.0
      %3367 = vmatpush.msra.mxu0 0.0
      %3368 = vmatpush.msra.mxu0 0.0
      %3369 = vmatpush.msra.mxu0 0.0
      %3370 = vmatpush.msra.mxu0 %v2739
      %3371 = vmatpush.msra.mxu0 %v2737
      %3372 = vmatpush.msra.mxu0 %v2735
      %3373 = vmatpush.msra.mxu0 %v2733
      %3374 = vmatmul.f32.gmra.mxu0 %v3353
      %v3375 = vpop.f32.mrf.mxu0
      %v3376 = vadd.f32 %v3351, %v3375
      %3377 = vmatmul.f32.gmra.mxu0 %v3356
      %v3378 = vpop.f32.mrf.mxu0
      %v3379 = vadd.f32 %v3351, %v3378
      %3380 = vdwg.mxu0
      %v3381 = vmax.f32 %v3376, 0.0
      %v3382 = vmax.f32 %v3379, 0.0
      %v3383 = vperm.slane %v2730, 7
      %v3385 = vsel %vm606, %v3381, 0
      %v3388 = vsel %vm606, %v3382, 0
      %3390 = vmatpush.msra.mxu0 0.0
      %3391 = vmatpush.msra.mxu0 0.0
      %3392 = vmatpush.msra.mxu0 0.0
      %3393 = vmatpush.msra.mxu0 0.0
      %3394 = vmatpush.msra.mxu0 0.0
      %3395 = vmatpush.msra.mxu0 0.0
      %3396 = vmatpush.msra.mxu0 0.0
      %3397 = vmatpush.msra.mxu0 0.0
      %3398 = vmatpush.msra.mxu0 %v2748
      %3399 = vmatpush.msra.mxu0 %v2747
      %3400 = vmatpush.msra.mxu0 %v2746
      %3401 = vmatpush.msra.mxu0 %v2745
      %3402 = vmatpush.msra.mxu0 %v2744
      %3403 = vmatpush.msra.mxu0 %v2743
      %3404 = vmatpush.msra.mxu0 %v2742
      %3405 = vmatpush.msra.mxu0 %v2741
      %3406 = vmatmul.f32.gmra.mxu0 %v3385
      %v3407 = vpop.f32.mrf.mxu0
      %v3408 = vadd.f32 %v3383, %v3407
      %3409 = vmatmul.f32.gmra.mxu0 %v3388
      %v3410 = vpop.f32.mrf.mxu0
      %v3411 = vadd.f32 %v3383, %v3410
      %3412 = vdwg.mxu0
      %v3413 = vadd.f32 %v3299, %v3408
      %v3414 = vadd.f32 %v3300, %v3411
      %v3415 = vsel %vm546, %v3413, 0.0
      %3416 = vadd.xlane.f32.xlu0 %v3415
      %v3417 = vpop.xlane.xlu0 %3416
      %v3418 = vsel %vm2056, %v3414, 0.0
      %3419 = vadd.xlane.f32.xlu0 %v3418
      %v3420 = vpop.xlane.xlu0 %3419
      %v3421 = vmul.f32 %v3417, %v2066
      %v3422 = vmul.f32 %v3420, %v2066
      %v3423 = vsub.f32 %v3413, %v3421
      %v3424 = vsub.f32 %v3414, %v3422
      %v3425 = vmul.f32 %v3423, %v3423
      %v3426 = vmul.f32 %v3424, %v3424
      %v3427 = vsel %vm546, %v3425, 0.0
      %3428 = vadd.xlane.f32.xlu0 %v3427
      %v3429 = vpop.xlane.xlu0 %3428
      %v3430 = vsel %vm2056, %v3426, 0.0
      %3431 = vadd.xlane.f32.xlu0 %v3430
      %v3432 = vpop.xlane.xlu0 %3431
      %v3433 = vmul.f32 %v3429, %v2066
      %v3434 = vmul.f32 %v3432, %v2066
      %v3435 = vadd.f32 %v3433, 1e-05
      %v3436 = vadd.f32 %v3434, 1e-05
      %v3437 = vrsqrt.pop %v3435
      %v3438 = vmul.f32 %v3437, %v3435
      %v3439 = vmul.f32 %v3438, %v3437
      %v3440 = vmul.f32 0.5, %v3439
      %v3441 = vsub.f32 1.5, %v3440
      %v3442 = vmul.f32 %v3437, %v3441
      %vm3443 = vweird.f32 %v3435
      %vm3444 = vweird.f32 %v3437
      %vm3445 = vmor %vm3443, %vm3444
      %v3446 = vsel %vm3445, %v3437, %v3442
      %v3447 = vrsqrt.pop %v3436
      %v3448 = vmul.f32 %v3447, %v3436
      %v3449 = vmul.f32 %v3448, %v3447
      %v3450 = vmul.f32 0.5, %v3449
      %v3451 = vsub.f32 1.5, %v3450
      %v3452 = vmul.f32 %v3447, %v3451
      %vm3453 = vweird.f32 %v3436
      %vm3454 = vweird.f32 %v3447
      %vm3455 = vmor %vm3453, %vm3454
      %v3456 = vsel %vm3455, %v3447, %v3452
      %v3457 = vmul.f32 %v3423, %v3446
      %v3458 = vmul.f32 %v3424, %v3456
      %v3459 = vperm.slane %v501, 3
      %v3460 = vmul.f32 %v3457, %v3459
      %v3461 = vmul.f32 %v3458, %v3459
      %v3462 = vperm.slane %v501, 4
      %v3463 = vadd.f32 %v3460, %v3462
      %v3464 = vadd.f32 %v3461, %v3462
      %v3465 = vperm.slane %v501, 5
      %v3468 = vrot.slane %v3463, 4
      %v3469 = vrot.slane %v3464, 4
      %v3470 = vsel %vm520, %v3468, %v3469
      %v3471 = vsel %vm546, %v3470, 0
      %3473 = vmatpush.msra.mxu0 0.0
      %3474 = vmatpush.msra.mxu0 0.0
      %3475 = vmatpush.msra.mxu0 0.0
      %3476 = vmatpush.msra.mxu0 0.0
      %3477 = vmatpush.msra.mxu0 0.0
      %3478 = vmatpush.msra.mxu0 0.0
      %3479 = vmatpush.msra.mxu0 0.0
      %3480 = vmatpush.msra.mxu0 0.0
      %3481 = vmatpush.msra.mxu0 0.0
      %3482 = vmatpush.msra.mxu0 0.0
      %3483 = vmatpush.msra.mxu0 0.0
      %3484 = vmatpush.msra.mxu0 0.0
      %3485 = vmatpush.msra.mxu0 %v505
      %3486 = vmatpush.msra.mxu0 %v504
      %3487 = vmatpush.msra.mxu0 %v503
      %3488 = vmatpush.msra.mxu0 %v502
      %3489 = vmatmul.f32.gmra.mxu0 %v3471
      %v3490 = vpop.f32.mrf.mxu0
      %v3491 = vadd.f32 %v3465, %v3490
      %3492 = vdwg.mxu0
      %vm3493 = vcmask 89096
      %v3494 = vsel %vm3493, %v3491, -inf
      %3495 = vmax.xlane.f32.xlu0 %v3494
      %v3496 = vpop.xlane.xlu0 %3495
      %v3497 = vsub.f32 %v3491, %v3496
      %v3498 = vmul.f32 %v3497, 1.442695
      %v3499 = vpow.pop %v3498
      %3501 = vrot.lane.b32.xlu0 %v3499, 127
      %v3502 = vpop.permute.xlu0 %3501
      %vm3504 = vcmask 80896
      %v3505 = vsel %vm3504, %v3502, 0.0
      %3506 = vadd.xlane.f32.xlu0 %v3505
      %v3507 = vpop.xlane.xlu0 %3506
      %v3508 = vrcp.pop %v3507
      %v3509 = vmul.f32 %v3507, %v3508
      %v3510 = vsub.f32 1.0, %v3509
      %v3511 = vmul.f32 %v3508, %v3510
      %v3512 = vadd.f32 %v3508, %v3511
      %vm3513 = vweird.f32 %v3507
      %vm3514 = vweird.f32 %v3508
      %vm3515 = vmor %vm3513, %vm3514
      %v3516 = vsel %vm3515, %v3508, %v3512
      %v3517 = vand.u32 2147483647, %v3507
      %vm3518 = vcmp.eq.f32.partialorder %v3517, 8.507059e+37
      %v3519 = vand.u32 %v3507, 2147483648
      %v3520 = vor.u32 1.1754944e-38, %v3519
      %v3521 = vsel %vm3518, %v3520, %v3516
      %v3522 = vmul.f32 1.0, %v3521
      %v3523 = vlaneseq
      %v3524 = vand.u32 %v3523, 127
      %vm3525 = vcmp.ge.f32.partialorder %v3491, %v3496
      %3526 = vrot.lane.b32.xlu0 %v3524, 1
      %v3527 = vpop.permute.xlu0 %3526
      %v3528 = vsel %vm3525, %v3527, 10
      %v3529 = vsel %vm3493, %v3528, 2147483647
      %v3530 = vand.u32 %v3529, 65535
      %v3531 = vshra.s32 %v3529, 16
      %v3532 = vcvt.s32.f32 %v3530
      %v3533 = vcvt.s32.f32 %v3531
      %3534 = vmin.xlane.f32.xlu0 %v3533
      %v3535 = vpop.xlane.xlu0 %3534
      %vm3536 = vcmp.eq.f32.partialorder %v3533, %v3535
      %v3537 = vsel %vm3536, %v3532, inf
      %3538 = vmin.xlane.f32.xlu0 %v3537
      %v3539 = vpop.xlane.xlu0 %3538
      %v3540 = vcvt.f32.s32 %v3539
      %v3541 = vcvt.f32.s32 %v3535
      %v3542 = vshll.u32 %v3541, 16
      %v3543 = vadd.s32 %v3542, %v3540
      %v3544 = vperm.slane %v501, 6
      %3545 = vmatpush.msra.mxu0 0.0
      %3546 = vmatpush.msra.mxu0 0.0
      %3547 = vmatpush.msra.mxu0 0.0
      %3548 = vmatpush.msra.mxu0 0.0
      %3549 = vmatpush.msra.mxu0 0.0
      %3550 = vmatpush.msra.mxu0 0.0
      %3551 = vmatpush.msra.mxu0 0.0
      %3552 = vmatpush.msra.mxu0 0.0
      %3553 = vmatpush.msra.mxu0 0.0
      %3554 = vmatpush.msra.mxu0 0.0
      %3555 = vmatpush.msra.mxu0 0.0
      %3556 = vmatpush.msra.mxu0 0.0
      %3557 = vmatpush.msra.mxu0 %v509
      %3558 = vmatpush.msra.mxu0 %v508
      %3559 = vmatpush.msra.mxu0 %v507
      %3560 = vmatpush.msra.mxu0 %v506
      %3561 = vmatmul.f32.gmra.mxu0 %v3471
      %v3562 = vpop.f32.mrf.mxu0
      %v3563 = vadd.f32 %v3544, %v3562
      %3564 = vdwg.mxu0
      %v3565 = vmax.f32 %v3563, 0.0
      %v3566 = vperm.slane %v501, 7
      %v3568 = vsel %vm546, %v3565, 0
      %3570 = vmatpush.msra.mxu0 0.0
      %3571 = vmatpush.msra.mxu0 0.0
      %3572 = vmatpush.msra.mxu0 0.0
      %3573 = vmatpush.msra.mxu0 0.0
      %3574 = vmatpush.msra.mxu0 0.0
      %3575 = vmatpush.msra.mxu0 0.0
      %3576 = vmatpush.msra.mxu0 0.0
      %3577 = vmatpush.msra.mxu0 0.0
      %3578 = vmatpush.msra.mxu0 0.0
      %3579 = vmatpush.msra.mxu0 0.0
      %3580 = vmatpush.msra.mxu0 0.0
      %3581 = vmatpush.msra.mxu0 0.0
      %3582 = vmatpush.msra.mxu0 %v513
      %3583 = vmatpush.msra.mxu0 %v512
      %3584 = vmatpush.msra.mxu0 %v511
      %3585 = vmatpush.msra.mxu0 %v510
      %3586 = vmatmul.f32.gmra.mxu0 %v3568
      %v3587 = vpop.f32.mrf.mxu0
      %v3588 = vadd.f32 %v3566, %v3587
      %3589 = vdwg.mxu0
      %v3590 = vmax.f32 %v3588, 0.0
      %v3591 = vand.u32 2147483647, %v3588
      %v3592 = vsub.f32 0.0, %v3591
      %v3593 = vmul.f32 %v3592, 1.442695
      %v3594 = vpow.pop %v3593
      %v3595 = vadd.f32 %v3594, 1.0
      %v3596 = vlog2.pop %v3595
      %v3597 = vmul.f32 %v3596, 0.6931472
      %v3598 = vadd.f32 %v3590, %v3597
      %v3599 = vld [vmem:[%s485] sm:$0xff]
      %v3600 = vmul.f32 %v3522, %v3599
      %v3601 = vcvt.s32.f32 %v3543
      %3603 = vrot.lane.b32.xlu0 %v3598, 3
      %v3604 = vpop.permute.xlu0 %3603
      %3607 = vrot.lane.b32.xlu0 %v3600, 4
      %v3608 = vpop.permute.xlu0 %3607
      %vm3610 = vcmask 7168
      %v3611 = vsel %vm3610, %v3491, %v3522
      %vm3612 = vcmask 15360
      %v3613 = vsel %vm3612, %v3611, %v3601
      %vm3614 = vcmask 23552
      %v3615 = vsel %vm3614, %v3613, %v3604
      %v3616 = vsel %vm516, %v3615, %v3608
      %v3617 = vsel %vm847, %v3616, 0.0
      %3618 = vst.msk [vmem:[%s489] sm:$0xff] %vm986, %v3617
      %p3619 = scmp.lt.s32.totalorder %s24, 1
      %s3620 = scalar_select %p3619, %s24, 1
      %s3621 = smul.addr %s3620, 8
      %s3622 = scalar_lea.vmem %s13, %s3621
      // Predicated region
      $region73: #{soia_dod_forward.1} parent=71 // pred_check
        %p3623 = pneg %p335
      $region74: #{soia_dod_forward.1} parent=71 // pred_check_branch
        %3625 = sbr.rel (%p3623) target = $region76
      $region75: #{soia_dod_forward.1} parent=71 // pred_region
        _
      $region76: #{soia_dod_forward.1} parent=71 // pred_fallthru
        _
    $region72: #{soia_dod_forward.1} parent=5 // pred_fallthru
      _
    %p3626 = scmp.le.s32.totalorder 2, %s19
    // Predicated region
    $region77: #{soia_dod_forward.1} parent=5 // pred_check
      %p3627 = pneg %p3626
    $region78: #{soia_dod_forward.1} parent=5 // pred_check_branch
      %3629 = sbr.rel (%p3627) target = $region80
    $region79: #{soia_dod_forward.1} parent=5 // pred_region
      %s3630 = ssub.s32 %s19, 2
      // Predicated region
      $region81: #{soia_dod_forward.1} parent=79 // pred_check
        %p3631 = pneg %p341
      $region82: #{soia_dod_forward.1} parent=79 // pred_check_branch
        %3633 = sbr.rel (%p3631) target = $region84
      $region83: #{soia_dod_forward.1} parent=79 // pred_region
        %p3634 = scmp.lt.s32.totalorder %s25, 1
        %s3635 = scalar_select %p3634, %s25, 1
        %s3636 = smul.addr %s3635, 8
        %s3637 = scalar_lea.vmem %s13, %s3636
      $region84: #{soia_dod_forward.1} parent=79 // pred_fallthru
        _
    $region80: #{soia_dod_forward.1} parent=5 // pred_fallthru
      _
  $region6: #{soia_dod_forward.1} parent=0 // loop_footer
    %s23 = sadd.s32 1, %s19
  $region7: #{soia_dod_forward.1} parent=0 // loop_footer_branch
    %18 = sbr.rel target = $region3
  $region8: #{soia_dod_forward.1} parent=0 // loop_exit
    _

</llo_original>
